<compile_context>
chip_gen: v7x
topology: tpu7x:2x2x1
jax: 0.10.0
libtpu: 0.0.40
codegen_flags: <defaults>
</compile_context>

<pallas_src>
import functools

import jax
import jax.numpy as jnp
import numpy as np
from jax.experimental import pallas as pl
from jax.experimental.pallas import tpu as pltpu


# ----------------------------------------------------------------------------
# Pallas kernel
# ----------------------------------------------------------------------------
def _make_bottleneck_kernel(Bt, H, W, Cin, Cmid, Cout, compute_dtype):
    HW = H * W
    M = Bt * HW

    def frn(x2d, gamma, beta, tau, eps):
        # FilterResponseNorm: per-image, per-channel mean of x^2 over H*W (f32).
        C = x2d.shape[-1]
        x3 = x2d.reshape(Bt, HW, C)
        nu2 = jnp.mean(x3 * x3, axis=1, keepdims=True)                # (Bt, 1, C)
        xn = x3 * jax.lax.rsqrt(nu2 + jnp.abs(eps))
        y = jnp.maximum(gamma[None, :, :] * xn + beta[None, :, :], tau[None, :, :])
        return y.reshape(M, C)

    def kernel(eps_ref,                     # SMEM (3,) f32
               x_ref,                       # (Bt, H, W, Cin)      compute_dtype
               w1_ref,                      # (Cin, Cmid)          compute_dtype
               w2_ref,                      # (9, Cmid, Cmid)      compute_dtype (tap-major)
               w3_ref,                      # (Cmid, Cout)         compute_dtype
               fm_ref,                      # (6, Cmid) f32 = g1,b1,t1,g2,b2,t2
               fo_ref,                      # (3, Cout) f32 = g3,b3,t3
               o_ref,                       # (Bt, H, W, Cout)     compute_dtype
               apad_ref):                   # VMEM scratch (Bt, H+2, W+2, Cmid) compute_dtype
        fm = fm_ref[...]
        fo = fo_ref[...]
        g1, b1, t1 = fm[0:1, :], fm[1:2, :], fm[2:3, :]
        g2, b2, t2 = fm[3:4, :], fm[4:5, :], fm[5:6, :]
        g3, b3, t3 = fo[0:1, :], fo[1:2, :], fo[2:3, :]
        # Fold the ReLU into the FRN clamp: max(max(g*x+b, tau), 0) == max(g*x+b, max(tau,0))
        t1 = jnp.maximum(t1, 0.0)
        t2 = jnp.maximum(t2, 0.0)

        # ---- conv1: 1x1 conv == channel matmul (compute_dtype operands, f32 accumulate)
        xin = x_ref[...].reshape(M, Cin)
        h = jnp.dot(xin.astype(compute_dtype), w1_ref[...],
                    preferred_element_type=jnp.float32)
        h = frn(h, g1, b1, t1, eps_ref[0])                            # FRN (+ folded ReLU)

        # ---- conv2: 3x3, pad=1, stride=1.
        # Padded activation written ONCE into a VMEM scratch; nine accumulating
        # K=Cmid dots over statically shifted windows (no im2col slab, no
        # lane-masked sub-128 column stores).
        a = h.astype(compute_dtype).reshape(Bt, H, W, Cmid)
        apad_ref[...] = jnp.zeros_like(apad_ref)
        apad_ref[:, 1:H + 1, 1:W + 1, :] = a
        acc = jnp.zeros((M, Cmid), jnp.float32)
        for dy in range(3):
            for dx in range(3):
                k = dy * 3 + dx
                win = apad_ref[:, dy:dy + H, dx:dx + W, :].reshape(M, Cmid)
                acc = acc + jnp.dot(win, w2_ref[k],
                                    preferred_element_type=jnp.float32)
        h = frn(acc, g2, b2, t2, eps_ref[1])                          # FRN (+ folded ReLU)

        # ---- conv3: 1x1 conv to planes * expansion
        h = jnp.dot(h.astype(compute_dtype), w3_ref[...],
                    preferred_element_type=jnp.float32)
        h = frn(h, g3, b3, t3, eps_ref[2])

        # ---- identity residual: re-read x_ref (VMEM-resident) instead of
        # carrying an f32 copy live across all three matmuls.
        o_ref[...] = (h.reshape(Bt, H, W, Cout)
                      + x_ref[...].astype(jnp.float32)).astype(o_ref.dtype)

    return kernel


# ----------------------------------------------------------------------------
# Generation-aware tiling helpers
# ----------------------------------------------------------------------------
def _tpu_vmem_bytes():
    """Per-core VMEM capacity; conservative 64 MiB fallback if unknown."""
    try:
        info = pltpu.get_tpu_info()
        cap = getattr(info, "vmem_capacity_bytes", None)
        if cap:
            return int(cap)
    except Exception:
        pass
    return 64 * 1024 * 1024


def _estimate_step_vmem(Bt, H, W, Cin, Cmid, Cout, io_bytes, cw_bytes):
    """Rough per-grid-step VMEM footprint (double-buffered I/O blocks, scratch,
    resident weights, f32 body temps)."""
    M = Bt * H * W
    io_blk = 2 * 2 * M * max(Cin, Cout) * io_bytes               # x + y, double-buffered
    apad = Bt * (H + 2) * (W + 2) * Cmid * cw_bytes              # scratch
    weights = 2 * (Cin * Cmid + 9 * Cmid * Cmid + Cmid * Cout) * cw_bytes
    frn_p = 2 * (6 * Cmid + 3 * Cout) * 4
    temps = 5 * M * max(Cmid, Cout) * 4                          # f32 activations / acc / FRN temps
    return io_blk + apad + weights + frn_p + temps


def _pick_batch_tile(N, H, W, Cin, Cmid, Cout, io_bytes, cw_bytes, vmem_cap):
    """Largest divisor of N whose estimated footprint fits ~70% of VMEM.
    On ~64 MiB (v7x-like, 2 TensorCores) parts keep >= 4 grid steps so each
    core gets >= 2 steps and the pipeline can overlap DMA with compute;
    on 128 MiB single-TC parts (v5e/v6e) allow Bt up to N."""
    budget = int(0.70 * vmem_cap)
    min_steps = 4 if vmem_cap <= 80 * (1 << 20) else 1
    min_steps = min(min_steps, N)
    best = 1
    for bt in range(1, N + 1):
        if N % bt != 0:
            continue
        if (N // bt) < min_steps:
            continue
        if _estimate_step_vmem(bt, H, W, Cin, Cmid, Cout, io_bytes, cw_bytes) <= budget:
            best = bt
    return best


# ----------------------------------------------------------------------------
# Wrappers
# ----------------------------------------------------------------------------
@functools.partial(jax.jit, static_argnames=("compute_dtype", "batch_tile"))
def bottleneck_pallas_nhwc(x_nhwc, params, *, compute_dtype=jnp.bfloat16,
                           batch_tile=None):
    """Fused Bottleneck forward, NHWC in / NHWC out, activations in
    `compute_dtype` at the HBM boundary (hot path for chained blocks)."""
    (w1, w2, w3, frn_mid, frn_out, eps3) = params

    N, H, W, Cin = x_nhwc.shape
    Cmid = w1.shape[1]
    Cout = w3.shape[1]
    assert Cin == Cout, "identity residual requires in_planes == planes * expansion"

    cw_bytes = jnp.dtype(compute_dtype).itemsize
    io_bytes = cw_bytes
    vmem_cap = _tpu_vmem_bytes()

    Bt = (batch_tile if batch_tile is not None else
          _pick_batch_tile(N, H, W, Cin, Cmid, Cout, io_bytes, cw_bytes, vmem_cap))
    assert N % Bt == 0

    # bf16 (or f32) at the HBM boundary; f32 only inside the kernel.
    x_io = x_nhwc.astype(compute_dtype)
    w1c = w1.astype(compute_dtype)
    w2c = w2.reshape(9, Cmid, Cmid).astype(compute_dtype)   # tap-major (ky*3+kx, Cin, Cout)
    w3c = w3.astype(compute_dtype)

    kernel = _make_bottleneck_kernel(Bt, H, W, Cin, Cmid, Cout, compute_dtype)

    full = lambda shape: pl.BlockSpec(shape, lambda n: (0,) * len(shape))
    in_specs = [
        pl.BlockSpec(memory_space=pltpu.MemorySpace.SMEM),          # eps3 (3,)
        pl.BlockSpec((Bt, H, W, Cin), lambda n: (n, 0, 0, 0)),      # x
        full((Cin, Cmid)),                                          # w1
        full((9, Cmid, Cmid)),                                      # w2 (tap-major)
        full((Cmid, Cout)),                                         # w3
        full((6, Cmid)),                                            # gamma/beta/tau layers 1&2
        full((3, Cout)),                                            # gamma/beta/tau layer 3
    ]
    out_specs = pl.BlockSpec((Bt, H, W, Cout), lambda n: (n, 0, 0, 0))

    flops = 2 * N * H * W * (Cin * Cmid + 9 * Cmid * Cmid + Cmid * Cout)
    transcendentals = N * (2 * Cmid + Cout)                          # rsqrt per image/channel
    bytes_accessed = (N * H * W * (Cin + Cout) * io_bytes
                      + (Cin * Cmid + 9 * Cmid * Cmid + Cmid * Cout) * cw_bytes
                      + (6 * Cmid + 3 * Cout) * 4 + 3 * 4)
    cost = pl.CostEstimate(flops=int(flops),
                           transcendentals=int(transcendentals),
                           bytes_accessed=int(bytes_accessed))

    vmem_limit = int(max(32 * (1 << 20), min(0.85 * vmem_cap, 112 * (1 << 20))))

    y_nhwc = pl.pallas_call(
        kernel,
        grid=(N // Bt,),
        in_specs=in_specs,
        out_specs=out_specs,
        out_shape=jax.ShapeDtypeStruct((N, H, W, Cout), compute_dtype),
        scratch_shapes=[pltpu.VMEM((Bt, H + 2, W + 2, Cmid), compute_dtype)],
        compiler_params=pltpu.CompilerParams(
            dimension_semantics=("parallel",),
            vmem_limit_bytes=vmem_limit),
        cost_estimate=cost,
    )(eps3, x_io, w1c, w2c, w3c, frn_mid, frn_out)
    return y_nhwc


def bottleneck_pallas(x_nchw, params, **kw):
    """PyTorch-layout (NCHW) convenience wrapper. For stacks of bottleneck
    blocks call bottleneck_pallas_nhwc directly so the layout conversion
    happens once at network entry/exit, not per block."""
    x_nhwc = jnp.transpose(x_nchw, (0, 2, 3, 1))
    y_nhwc = bottleneck_pallas_nhwc(x_nhwc, params, **kw)
    return jnp.transpose(y_nhwc, (0, 3, 1, 2))


# ----------------------------------------------------------------------------
# Pure-JAX reference (mirrors the PyTorch forward, NCHW) for correctness check
# ----------------------------------------------------------------------------
def _frn_ref(x, gamma, beta, tau, eps):
    nu2 = jnp.mean(x * x, axis=(2, 3), keepdims=True)
    x = x * jax.lax.rsqrt(nu2 + jnp.abs(eps))
    return jnp.maximum(gamma * x + beta, tau)


def _conv_nchw(x, w_oihw, stride=1, padding=0):
    return jax.lax.conv_general_dilated(
        x, w_oihw, window_strides=(stride, stride),
        padding=[(padding, padding), (padding, padding)],
        dimension_numbers=("NCHW", "OIHW", "NCHW"))


def bottleneck_ref(x, torch_params):
    (w1_oihw, w2_oihw, w3_oihw,
     g1, b1, t1, g2, b2, t2, g3, b3, t3, eps3) = torch_params
    identity = x
    out = _conv_nchw(x, w1_oihw)
    out = _frn_ref(out, g1, b1, t1, eps3[0])
    out = jnp.maximum(out, 0.0)
    out = _conv_nchw(out, w2_oihw, stride=1, padding=1)
    out = _frn_ref(out, g2, b2, t2, eps3[1])
    out = jnp.maximum(out, 0.0)
    out = _conv_nchw(out, w3_oihw)
    out = _frn_ref(out, g3, b3, t3, eps3[2])
    return out + identity


# ----------------------------------------------------------------------------
if __name__ == "__main__":
    # planes=4, expansion=4 => in_planes = out_planes = 16; stride=1, downsample=None.
    N, H, W = 4, 16, 16
    planes = 4
    in_planes = planes * 4
    Cmid, Cout = planes, planes * 4

    key = jax.random.PRNGKey(0)
    k = jax.random.split(key, 8)

    x = jax.random.normal(k[0], (N, in_planes, H, W), jnp.float32)

    # Conv weights in PyTorch OIHW layout (bias=False), deterministic.
    w1_oihw = 0.1 * jax.random.normal(k[1], (Cmid, in_planes, 1, 1), jnp.float32)
    w2_oihw = 0.1 * jax.random.normal(k[2], (Cmid, Cmid, 3, 3), jnp.float32)
    w3_oihw = 0.1 * jax.random.normal(k[3], (Cout, Cmid, 1, 1), jnp.float32)

    # FRN params (reset_parameters -> gamma=1, beta=0, tau=0, eps=1e-6; perturbed
    # slightly so the test is non-trivial).
    def frn_params(kk, C):
        g = 1.0 + 0.05 * jax.random.normal(kk, (1, C, 1, 1), jnp.float32)
        b = 0.02 * jax.random.normal(jax.random.fold_in(kk, 1), (1, C, 1, 1), jnp.float32)
        t = 0.01 * jax.random.normal(jax.random.fold_in(kk, 2), (1, C, 1, 1), jnp.float32)
        return g, b, t

    g1, b1, t1 = frn_params(k[4], Cmid)
    g2, b2, t2 = frn_params(k[5], Cmid)
    g3, b3, t3 = frn_params(k[6], Cout)
    eps3 = jnp.full((3,), 1e-6, jnp.float32)

    torch_params = (w1_oihw, w2_oihw, w3_oihw,
                    g1, b1, t1, g2, b2, t2, g3, b3, t3, eps3)

    # Repack weights/params for the NHWC Pallas kernel.
    w1_k = jnp.transpose(w1_oihw[:, :, 0, 0], (1, 0))                       # (Cin, Cmid)
    w2_k = jnp.transpose(w2_oihw, (2, 3, 1, 0)).reshape(9, Cmid, Cmid)      # (ky*3+kx, Cin, Cout)
    w3_k = jnp.transpose(w3_oihw[:, :, 0, 0], (1, 0))                       # (Cmid, Cout)
    flat = lambda p: p.reshape(1, p.shape[1])                               # (1,C,1,1) -> (1,C)
    frn_mid = jnp.concatenate([flat(g1), flat(b1), flat(t1),
                               flat(g2), flat(b2), flat(t2)], axis=0)       # (6, Cmid)
    frn_out = jnp.concatenate([flat(g3), flat(b3), flat(t3)], axis=0)       # (3, Cout)
    kernel_params = (w1_k, w2_k, w3_k, frn_mid, frn_out, eps3)

    y_ref = jax.block_until_ready(bottleneck_ref(x, torch_params))

    # 1) exact-semantics check with f32 operands and f32 HBM I/O (tight tolerance)
    y_f32 = jax.block_until_ready(
        bottleneck_pallas(x, kernel_params, compute_dtype=jnp.float32))
    np.testing.assert_allclose(np.asarray(y_f32), np.asarray(y_ref),
                               rtol=1e-4, atol=1e-4)

    # 2) fast path: bf16 HBM I/O + bf16 MXU operands, f32 accumulation / FRN / residual
    y_bf16 = jax.block_until_ready(bottleneck_pallas(x, kernel_params))
    np.testing.assert_allclose(np.asarray(y_bf16.astype(jnp.float32)),
                               np.asarray(y_ref), rtol=3e-2, atol=1e-1)

    print("KERNEL_OK")
</pallas_src>

<mosaic_0001>
module attributes {stable_mosaic.version = 11 : i64} {
  func.func @kernel(%arg0: i32, %arg1: memref<3xf32, #tpu.memory_space<smem>>, %arg2: memref<1x16x16x16xf32, #tpu.memory_space<vmem>>, %arg3: memref<16x4xf32, #tpu.memory_space<vmem>>, %arg4: memref<9x4x4xf32, #tpu.memory_space<vmem>>, %arg5: memref<4x16xf32, #tpu.memory_space<vmem>>, %arg6: memref<6x4xf32, #tpu.memory_space<vmem>>, %arg7: memref<3x16xf32, #tpu.memory_space<vmem>>, %arg8: memref<1x16x16x16xf32, #tpu.memory_space<vmem>>, %arg9: memref<1x18x18x4xf32, #tpu.memory_space<vmem>>) attributes {dimension_semantics = [#tpu.dimension_semantics<parallel>], iteration_bounds = array<i64: 4>, scalar_prefetch = 0 : i64, scratch_operands = 1 : i64, tpu.core_type = #tpu.core_type<tc>, window_params = [{transform_indices = @transform_0, window_bounds = array<i64: 3>}, {transform_indices = @transform_1, window_bounds = array<i64: 1, 16, 16, 16>}, {pipeline_mode = #tpu.pipeline_mode<synchronous>, transform_indices = @transform_2, window_bounds = array<i64: 16, 4>}, {pipeline_mode = #tpu.pipeline_mode<synchronous>, transform_indices = @transform_3, window_bounds = array<i64: 9, 4, 4>}, {pipeline_mode = #tpu.pipeline_mode<synchronous>, transform_indices = @transform_4, window_bounds = array<i64: 4, 16>}, {pipeline_mode = #tpu.pipeline_mode<synchronous>, transform_indices = @transform_5, window_bounds = array<i64: 6, 4>}, {pipeline_mode = #tpu.pipeline_mode<synchronous>, transform_indices = @transform_6, window_bounds = array<i64: 3, 16>}, {transform_indices = @transform_7, window_bounds = array<i64: 1, 16, 16, 16>}]} {
    %c0 = arith.constant 0 : index
    %c0_0 = arith.constant 0 : index
    %0 = vector.load %arg6[%c0, %c0_0] : memref<6x4xf32, #tpu.memory_space<vmem>>, vector<6x4xf32>
    %c0_1 = arith.constant 0 : index
    %c0_2 = arith.constant 0 : index
    %1 = vector.load %arg7[%c0_1, %c0_2] : memref<3x16xf32, #tpu.memory_space<vmem>>, vector<3x16xf32>
    %2 = vector.extract_strided_slice %0 {offsets = [0, 0], sizes = [1, 4], strides = [1, 1]} : vector<6x4xf32> to vector<1x4xf32>
    %3 = vector.extract_strided_slice %0 {offsets = [1, 0], sizes = [1, 4], strides = [1, 1]} : vector<6x4xf32> to vector<1x4xf32>
    %4 = vector.extract_strided_slice %0 {offsets = [2, 0], sizes = [1, 4], strides = [1, 1]} : vector<6x4xf32> to vector<1x4xf32>
    %5 = vector.extract_strided_slice %0 {offsets = [3, 0], sizes = [1, 4], strides = [1, 1]} : vector<6x4xf32> to vector<1x4xf32>
    %6 = vector.extract_strided_slice %0 {offsets = [4, 0], sizes = [1, 4], strides = [1, 1]} : vector<6x4xf32> to vector<1x4xf32>
    %7 = vector.extract_strided_slice %0 {offsets = [5, 0], sizes = [1, 4], strides = [1, 1]} : vector<6x4xf32> to vector<1x4xf32>
    %8 = vector.extract_strided_slice %1 {offsets = [0, 0], sizes = [1, 16], strides = [1, 1]} : vector<3x16xf32> to vector<1x16xf32>
    %9 = vector.extract_strided_slice %1 {offsets = [1, 0], sizes = [1, 16], strides = [1, 1]} : vector<3x16xf32> to vector<1x16xf32>
    %10 = vector.extract_strided_slice %1 {offsets = [2, 0], sizes = [1, 16], strides = [1, 1]} : vector<3x16xf32> to vector<1x16xf32>
    %cst = arith.constant 0.000000e+00 : f32
    %11 = vector.broadcast %cst : f32 to vector<1x4xf32>
    %12 = arith.maximumf %4, %11 : vector<1x4xf32>
    %cst_3 = arith.constant 0.000000e+00 : f32
    %13 = vector.broadcast %cst_3 : f32 to vector<1x4xf32>
    %14 = arith.maximumf %7, %13 : vector<1x4xf32>
    %c0_4 = arith.constant 0 : index
    %c0_5 = arith.constant 0 : index
    %c0_6 = arith.constant 0 : index
    %c0_7 = arith.constant 0 : index
    %15 = vector.load %arg2[%c0_4, %c0_5, %c0_6, %c0_7] : memref<1x16x16x16xf32, #tpu.memory_space<vmem>>, vector<1x16x16x16xf32>
    %16 = vector.shape_cast %15 : vector<1x16x16x16xf32> to vector<256x16xf32>
    %c0_8 = arith.constant 0 : index
    %c0_9 = arith.constant 0 : index
    %17 = vector.load %arg3[%c0_8, %c0_9] : memref<16x4xf32, #tpu.memory_space<vmem>>, vector<16x4xf32>
    %cst_10 = arith.constant dense<0.000000e+00> : vector<256x4xf32>
    %18 = tpu.matmul %16, %17, %cst_10 {dimension_numbers = #tpu.dot_dimension_numbers<[1], [0], [0], [1], [0, 0, 1, 1], [], []>} : vector<256x16xf32>, vector<16x4xf32>, vector<256x4xf32> -> vector<256x4xf32>
    %c0_11 = arith.constant 0 : index
    %19 = memref.load %arg1[%c0_11] : memref<3xf32, #tpu.memory_space<smem>>
    %20 = vector.shape_cast %18 : vector<256x4xf32> to vector<1x256x4xf32>
    %21 = arith.mulf %20, %20 : vector<1x256x4xf32>
    %cst_12 = arith.constant dense<0.000000e+00> : vector<1x4xf32>
    %22 = vector.multi_reduction <add>, %21, %cst_12 [1] : vector<1x256x4xf32> to vector<1x4xf32>
    %23 = vector.shape_cast %22 : vector<1x4xf32> to vector<1x1x4xf32>
    %cst_13 = arith.constant 2.560000e+02 : f32
    %24 = vector.broadcast %cst_13 : f32 to vector<1x1x4xf32>
    %25 = arith.divf %23, %24 : vector<1x1x4xf32>
    %26 = math.absf %19 : f32
    %27 = vector.broadcast %26 : f32 to vector<1x1x4xf32>
    %28 = arith.addf %25, %27 : vector<1x1x4xf32>
    %29 = math.rsqrt %28 : vector<1x1x4xf32>
    %30 = vector.broadcast %29 : vector<1x1x4xf32> to vector<1x256x4xf32>
    %31 = arith.mulf %20, %30 : vector<1x256x4xf32>
    %32 = vector.shape_cast %2 : vector<1x4xf32> to vector<1x1x4xf32>
    %33 = vector.broadcast %32 : vector<1x1x4xf32> to vector<1x256x4xf32>
    %34 = arith.mulf %33, %31 : vector<1x256x4xf32>
    %35 = vector.shape_cast %3 : vector<1x4xf32> to vector<1x1x4xf32>
    %36 = vector.broadcast %35 : vector<1x1x4xf32> to vector<1x256x4xf32>
    %37 = arith.addf %34, %36 : vector<1x256x4xf32>
    %38 = vector.shape_cast %12 : vector<1x4xf32> to vector<1x1x4xf32>
    %39 = vector.broadcast %38 : vector<1x1x4xf32> to vector<1x256x4xf32>
    %40 = arith.maximumf %37, %39 : vector<1x256x4xf32>
    %41 = vector.shape_cast %40 : vector<1x256x4xf32> to vector<256x4xf32>
    %42 = vector.shape_cast %41 : vector<256x4xf32> to vector<1x16x16x4xf32>
    %cst_14 = arith.constant 0.000000e+00 : f32
    %43 = vector.broadcast %cst_14 : f32 to vector<1x18x18x4xf32>
    %c0_15 = arith.constant 0 : index
    %c0_16 = arith.constant 0 : index
    %c0_17 = arith.constant 0 : index
    %c0_18 = arith.constant 0 : index
    %44 = vector.load %arg9[%c0_15, %c0_16, %c0_17, %c0_18] : memref<1x18x18x4xf32, #tpu.memory_space<vmem>>, vector<1x18x18x4xf32>
    tpu.vector_store %arg9[%c0_15, %c0_16, %c0_17, %c0_18], %43 {strides = array<i32>} : memref<1x18x18x4xf32, #tpu.memory_space<vmem>>, vector<1x18x18x4xf32>,
    %c0_19 = arith.constant 0 : index
    %c1 = arith.constant 1 : index
    %c1_20 = arith.constant 1 : index
    %c0_21 = arith.constant 0 : index
    %45 = vector.load %arg9[%c0_19, %c1, %c1_20, %c0_21] : memref<1x18x18x4xf32, #tpu.memory_space<vmem>>, vector<1x16x16x4xf32>
    tpu.vector_store %arg9[%c0_19, %c1, %c1_20, %c0_21], %42 {strides = array<i32>} : memref<1x18x18x4xf32, #tpu.memory_space<vmem>>, vector<1x16x16x4xf32>,
    %cst_22 = arith.constant 0.000000e+00 : f32
    %46 = vector.broadcast %cst_22 : f32 to vector<256x4xf32>
    %c0_23 = arith.constant 0 : index
    %c0_24 = arith.constant 0 : index
    %c0_25 = arith.constant 0 : index
    %c0_26 = arith.constant 0 : index
    %47 = vector.load %arg9[%c0_23, %c0_24, %c0_25, %c0_26] : memref<1x18x18x4xf32, #tpu.memory_space<vmem>>, vector<1x16x16x4xf32>
    %48 = vector.shape_cast %47 : vector<1x16x16x4xf32> to vector<256x4xf32>
    %c0_27 = arith.constant 0 : index
    %c0_28 = arith.constant 0 : index
    %c0_29 = arith.constant 0 : index
    %49 = vector.load %arg4[%c0_27, %c0_28, %c0_29] : memref<9x4x4xf32, #tpu.memory_space<vmem>>, vector<1x4x4xf32>
    %50 = vector.shape_cast %49 : vector<1x4x4xf32> to vector<4x4xf32>
    %cst_30 = arith.constant dense<0.000000e+00> : vector<256x4xf32>
    %51 = tpu.matmul %48, %50, %cst_30 {dimension_numbers = #tpu.dot_dimension_numbers<[1], [0], [0], [1], [0, 0, 1, 1], [], []>} : vector<256x4xf32>, vector<4x4xf32>, vector<256x4xf32> -> vector<256x4xf32>
    %52 = arith.addf %46, %51 : vector<256x4xf32>
    %c0_31 = arith.constant 0 : index
    %c0_32 = arith.constant 0 : index
    %c1_33 = arith.constant 1 : index
    %c0_34 = arith.constant 0 : index
    %53 = vector.load %arg9[%c0_31, %c0_32, %c1_33, %c0_34] : memref<1x18x18x4xf32, #tpu.memory_space<vmem>>, vector<1x16x16x4xf32>
    %54 = vector.shape_cast %53 : vector<1x16x16x4xf32> to vector<256x4xf32>
    %c1_35 = arith.constant 1 : index
    %c0_36 = arith.constant 0 : index
    %c0_37 = arith.constant 0 : index
    %55 = vector.load %arg4[%c1_35, %c0_36, %c0_37] : memref<9x4x4xf32, #tpu.memory_space<vmem>>, vector<1x4x4xf32>
    %56 = vector.shape_cast %55 : vector<1x4x4xf32> to vector<4x4xf32>
    %cst_38 = arith.constant dense<0.000000e+00> : vector<256x4xf32>
    %57 = tpu.matmul %54, %56, %cst_38 {dimension_numbers = #tpu.dot_dimension_numbers<[1], [0], [0], [1], [0, 0, 1, 1], [], []>} : vector<256x4xf32>, vector<4x4xf32>, vector<256x4xf32> -> vector<256x4xf32>
    %58 = arith.addf %52, %57 : vector<256x4xf32>
    %c0_39 = arith.constant 0 : index
    %c0_40 = arith.constant 0 : index
    %c2 = arith.constant 2 : index
    %c0_41 = arith.constant 0 : index
    %59 = vector.load %arg9[%c0_39, %c0_40, %c2, %c0_41] : memref<1x18x18x4xf32, #tpu.memory_space<vmem>>, vector<1x16x16x4xf32>
    %60 = vector.shape_cast %59 : vector<1x16x16x4xf32> to vector<256x4xf32>
    %c2_42 = arith.constant 2 : index
    %c0_43 = arith.constant 0 : index
    %c0_44 = arith.constant 0 : index
    %61 = vector.load %arg4[%c2_42, %c0_43, %c0_44] : memref<9x4x4xf32, #tpu.memory_space<vmem>>, vector<1x4x4xf32>
    %62 = vector.shape_cast %61 : vector<1x4x4xf32> to vector<4x4xf32>
    %cst_45 = arith.constant dense<0.000000e+00> : vector<256x4xf32>
    %63 = tpu.matmul %60, %62, %cst_45 {dimension_numbers = #tpu.dot_dimension_numbers<[1], [0], [0], [1], [0, 0, 1, 1], [], []>} : vector<256x4xf32>, vector<4x4xf32>, vector<256x4xf32> -> vector<256x4xf32>
    %64 = arith.addf %58, %63 : vector<256x4xf32>
    %c0_46 = arith.constant 0 : index
    %c1_47 = arith.constant 1 : index
    %c0_48 = arith.constant 0 : index
    %c0_49 = arith.constant 0 : index
    %65 = vector.load %arg9[%c0_46, %c1_47, %c0_48, %c0_49] : memref<1x18x18x4xf32, #tpu.memory_space<vmem>>, vector<1x16x16x4xf32>
    %66 = vector.shape_cast %65 : vector<1x16x16x4xf32> to vector<256x4xf32>
    %c3 = arith.constant 3 : index
    %c0_50 = arith.constant 0 : index
    %c0_51 = arith.constant 0 : index
    %67 = vector.load %arg4[%c3, %c0_50, %c0_51] : memref<9x4x4xf32, #tpu.memory_space<vmem>>, vector<1x4x4xf32>
    %68 = vector.shape_cast %67 : vector<1x4x4xf32> to vector<4x4xf32>
    %cst_52 = arith.constant dense<0.000000e+00> : vector<256x4xf32>
    %69 = tpu.matmul %66, %68, %cst_52 {dimension_numbers = #tpu.dot_dimension_numbers<[1], [0], [0], [1], [0, 0, 1, 1], [], []>} : vector<256x4xf32>, vector<4x4xf32>, vector<256x4xf32> -> vector<256x4xf32>
    %70 = arith.addf %64, %69 : vector<256x4xf32>
    %c0_53 = arith.constant 0 : index
    %c1_54 = arith.constant 1 : index
    %c1_55 = arith.constant 1 : index
    %c0_56 = arith.constant 0 : index
    %71 = vector.load %arg9[%c0_53, %c1_54, %c1_55, %c0_56] : memref<1x18x18x4xf32, #tpu.memory_space<vmem>>, vector<1x16x16x4xf32>
    %72 = vector.shape_cast %71 : vector<1x16x16x4xf32> to vector<256x4xf32>
    %c4 = arith.constant 4 : index
    %c0_57 = arith.constant 0 : index
    %c0_58 = arith.constant 0 : index
    %73 = vector.load %arg4[%c4, %c0_57, %c0_58] : memref<9x4x4xf32, #tpu.memory_space<vmem>>, vector<1x4x4xf32>
    %74 = vector.shape_cast %73 : vector<1x4x4xf32> to vector<4x4xf32>
    %cst_59 = arith.constant dense<0.000000e+00> : vector<256x4xf32>
    %75 = tpu.matmul %72, %74, %cst_59 {dimension_numbers = #tpu.dot_dimension_numbers<[1], [0], [0], [1], [0, 0, 1, 1], [], []>} : vector<256x4xf32>, vector<4x4xf32>, vector<256x4xf32> -> vector<256x4xf32>
    %76 = arith.addf %70, %75 : vector<256x4xf32>
    %c0_60 = arith.constant 0 : index
    %c1_61 = arith.constant 1 : index
    %c2_62 = arith.constant 2 : index
    %c0_63 = arith.constant 0 : index
    %77 = vector.load %arg9[%c0_60, %c1_61, %c2_62, %c0_63] : memref<1x18x18x4xf32, #tpu.memory_space<vmem>>, vector<1x16x16x4xf32>
    %78 = vector.shape_cast %77 : vector<1x16x16x4xf32> to vector<256x4xf32>
    %c5 = arith.constant 5 : index
    %c0_64 = arith.constant 0 : index
    %c0_65 = arith.constant 0 : index
    %79 = vector.load %arg4[%c5, %c0_64, %c0_65] : memref<9x4x4xf32, #tpu.memory_space<vmem>>, vector<1x4x4xf32>
    %80 = vector.shape_cast %79 : vector<1x4x4xf32> to vector<4x4xf32>
    %cst_66 = arith.constant dense<0.000000e+00> : vector<256x4xf32>
    %81 = tpu.matmul %78, %80, %cst_66 {dimension_numbers = #tpu.dot_dimension_numbers<[1], [0], [0], [1], [0, 0, 1, 1], [], []>} : vector<256x4xf32>, vector<4x4xf32>, vector<256x4xf32> -> vector<256x4xf32>
    %82 = arith.addf %76, %81 : vector<256x4xf32>
    %c0_67 = arith.constant 0 : index
    %c2_68 = arith.constant 2 : index
    %c0_69 = arith.constant 0 : index
    %c0_70 = arith.constant 0 : index
    %83 = vector.load %arg9[%c0_67, %c2_68, %c0_69, %c0_70] : memref<1x18x18x4xf32, #tpu.memory_space<vmem>>, vector<1x16x16x4xf32>
    %84 = vector.shape_cast %83 : vector<1x16x16x4xf32> to vector<256x4xf32>
    %c6 = arith.constant 6 : index
    %c0_71 = arith.constant 0 : index
    %c0_72 = arith.constant 0 : index
    %85 = vector.load %arg4[%c6, %c0_71, %c0_72] : memref<9x4x4xf32, #tpu.memory_space<vmem>>, vector<1x4x4xf32>
    %86 = vector.shape_cast %85 : vector<1x4x4xf32> to vector<4x4xf32>
    %cst_73 = arith.constant dense<0.000000e+00> : vector<256x4xf32>
    %87 = tpu.matmul %84, %86, %cst_73 {dimension_numbers = #tpu.dot_dimension_numbers<[1], [0], [0], [1], [0, 0, 1, 1], [], []>} : vector<256x4xf32>, vector<4x4xf32>, vector<256x4xf32> -> vector<256x4xf32>
    %88 = arith.addf %82, %87 : vector<256x4xf32>
    %c0_74 = arith.constant 0 : index
    %c2_75 = arith.constant 2 : index
    %c1_76 = arith.constant 1 : index
    %c0_77 = arith.constant 0 : index
    %89 = vector.load %arg9[%c0_74, %c2_75, %c1_76, %c0_77] : memref<1x18x18x4xf32, #tpu.memory_space<vmem>>, vector<1x16x16x4xf32>
    %90 = vector.shape_cast %89 : vector<1x16x16x4xf32> to vector<256x4xf32>
    %c7 = arith.constant 7 : index
    %c0_78 = arith.constant 0 : index
    %c0_79 = arith.constant 0 : index
    %91 = vector.load %arg4[%c7, %c0_78, %c0_79] : memref<9x4x4xf32, #tpu.memory_space<vmem>>, vector<1x4x4xf32>
    %92 = vector.shape_cast %91 : vector<1x4x4xf32> to vector<4x4xf32>
    %cst_80 = arith.constant dense<0.000000e+00> : vector<256x4xf32>
    %93 = tpu.matmul %90, %92, %cst_80 {dimension_numbers = #tpu.dot_dimension_numbers<[1], [0], [0], [1], [0, 0, 1, 1], [], []>} : vector<256x4xf32>, vector<4x4xf32>, vector<256x4xf32> -> vector<256x4xf32>
    %94 = arith.addf %88, %93 : vector<256x4xf32>
    %c0_81 = arith.constant 0 : index
    %c2_82 = arith.constant 2 : index
    %c2_83 = arith.constant 2 : index
    %c0_84 = arith.constant 0 : index
    %95 = vector.load %arg9[%c0_81, %c2_82, %c2_83, %c0_84] : memref<1x18x18x4xf32, #tpu.memory_space<vmem>>, vector<1x16x16x4xf32>
    %96 = vector.shape_cast %95 : vector<1x16x16x4xf32> to vector<256x4xf32>
    %c8 = arith.constant 8 : index
    %c0_85 = arith.constant 0 : index
    %c0_86 = arith.constant 0 : index
    %97 = vector.load %arg4[%c8, %c0_85, %c0_86] : memref<9x4x4xf32, #tpu.memory_space<vmem>>, vector<1x4x4xf32>
    %98 = vector.shape_cast %97 : vector<1x4x4xf32> to vector<4x4xf32>
    %cst_87 = arith.constant dense<0.000000e+00> : vector<256x4xf32>
    %99 = tpu.matmul %96, %98, %cst_87 {dimension_numbers = #tpu.dot_dimension_numbers<[1], [0], [0], [1], [0, 0, 1, 1], [], []>} : vector<256x4xf32>, vector<4x4xf32>, vector<256x4xf32> -> vector<256x4xf32>
    %100 = arith.addf %94, %99 : vector<256x4xf32>
    %c1_88 = arith.constant 1 : index
    %101 = memref.load %arg1[%c1_88] : memref<3xf32, #tpu.memory_space<smem>>
    %102 = vector.shape_cast %100 : vector<256x4xf32> to vector<1x256x4xf32>
    %103 = arith.mulf %102, %102 : vector<1x256x4xf32>
    %cst_89 = arith.constant dense<0.000000e+00> : vector<1x4xf32>
    %104 = vector.multi_reduction <add>, %103, %cst_89 [1] : vector<1x256x4xf32> to vector<1x4xf32>
    %105 = vector.shape_cast %104 : vector<1x4xf32> to vector<1x1x4xf32>
    %cst_90 = arith.constant 2.560000e+02 : f32
    %106 = vector.broadcast %cst_90 : f32 to vector<1x1x4xf32>
    %107 = arith.divf %105, %106 : vector<1x1x4xf32>
    %108 = math.absf %101 : f32
    %109 = vector.broadcast %108 : f32 to vector<1x1x4xf32>
    %110 = arith.addf %107, %109 : vector<1x1x4xf32>
    %111 = math.rsqrt %110 : vector<1x1x4xf32>
    %112 = vector.broadcast %111 : vector<1x1x4xf32> to vector<1x256x4xf32>
    %113 = arith.mulf %102, %112 : vector<1x256x4xf32>
    %114 = vector.shape_cast %5 : vector<1x4xf32> to vector<1x1x4xf32>
    %115 = vector.broadcast %114 : vector<1x1x4xf32> to vector<1x256x4xf32>
    %116 = arith.mulf %115, %113 : vector<1x256x4xf32>
    %117 = vector.shape_cast %6 : vector<1x4xf32> to vector<1x1x4xf32>
    %118 = vector.broadcast %117 : vector<1x1x4xf32> to vector<1x256x4xf32>
    %119 = arith.addf %116, %118 : vector<1x256x4xf32>
    %120 = vector.shape_cast %14 : vector<1x4xf32> to vector<1x1x4xf32>
    %121 = vector.broadcast %120 : vector<1x1x4xf32> to vector<1x256x4xf32>
    %122 = arith.maximumf %119, %121 : vector<1x256x4xf32>
    %123 = vector.shape_cast %122 : vector<1x256x4xf32> to vector<256x4xf32>
    %c0_91 = arith.constant 0 : index
    %c0_92 = arith.constant 0 : index
    %124 = vector.load %arg5[%c0_91, %c0_92] : memref<4x16xf32, #tpu.memory_space<vmem>>, vector<4x16xf32>
    %cst_93 = arith.constant dense<0.000000e+00> : vector<256x16xf32>
    %125 = tpu.matmul %123, %124, %cst_93 {dimension_numbers = #tpu.dot_dimension_numbers<[1], [0], [0], [1], [0, 0, 1, 1], [], []>} : vector<256x4xf32>, vector<4x16xf32>, vector<256x16xf32> -> vector<256x16xf32>
    %c2_94 = arith.constant 2 : index
    %126 = memref.load %arg1[%c2_94] : memref<3xf32, #tpu.memory_space<smem>>
    %127 = vector.shape_cast %125 : vector<256x16xf32> to vector<1x256x16xf32>
    %128 = arith.mulf %127, %127 : vector<1x256x16xf32>
    %cst_95 = arith.constant dense<0.000000e+00> : vector<1x16xf32>
    %129 = vector.multi_reduction <add>, %128, %cst_95 [1] : vector<1x256x16xf32> to vector<1x16xf32>
    %130 = vector.shape_cast %129 : vector<1x16xf32> to vector<1x1x16xf32>
    %cst_96 = arith.constant 2.560000e+02 : f32
    %131 = vector.broadcast %cst_96 : f32 to vector<1x1x16xf32>
    %132 = arith.divf %130, %131 : vector<1x1x16xf32>
    %133 = math.absf %126 : f32
    %134 = vector.broadcast %133 : f32 to vector<1x1x16xf32>
    %135 = arith.addf %132, %134 : vector<1x1x16xf32>
    %136 = math.rsqrt %135 : vector<1x1x16xf32>
    %137 = vector.broadcast %136 : vector<1x1x16xf32> to vector<1x256x16xf32>
    %138 = arith.mulf %127, %137 : vector<1x256x16xf32>
    %139 = vector.shape_cast %8 : vector<1x16xf32> to vector<1x1x16xf32>
    %140 = vector.broadcast %139 : vector<1x1x16xf32> to vector<1x256x16xf32>
    %141 = arith.mulf %140, %138 : vector<1x256x16xf32>
    %142 = vector.shape_cast %9 : vector<1x16xf32> to vector<1x1x16xf32>
    %143 = vector.broadcast %142 : vector<1x1x16xf32> to vector<1x256x16xf32>
    %144 = arith.addf %141, %143 : vector<1x256x16xf32>
    %145 = vector.shape_cast %10 : vector<1x16xf32> to vector<1x1x16xf32>
    %146 = vector.broadcast %145 : vector<1x1x16xf32> to vector<1x256x16xf32>
    %147 = arith.maximumf %144, %146 : vector<1x256x16xf32>
    %148 = vector.shape_cast %147 : vector<1x256x16xf32> to vector<256x16xf32>
    %149 = vector.shape_cast %148 : vector<256x16xf32> to vector<1x16x16x16xf32>
    %c0_97 = arith.constant 0 : index
    %c0_98 = arith.constant 0 : index
    %c0_99 = arith.constant 0 : index
    %c0_100 = arith.constant 0 : index
    %150 = vector.load %arg2[%c0_97, %c0_98, %c0_99, %c0_100] : memref<1x16x16x16xf32, #tpu.memory_space<vmem>>, vector<1x16x16x16xf32>
    %151 = arith.addf %149, %150 : vector<1x16x16x16xf32>
    %c0_101 = arith.constant 0 : index
    %c0_102 = arith.constant 0 : index
    %c0_103 = arith.constant 0 : index
    %c0_104 = arith.constant 0 : index
    %152 = vector.load %arg8[%c0_101, %c0_102, %c0_103, %c0_104] : memref<1x16x16x16xf32, #tpu.memory_space<vmem>>, vector<1x16x16x16xf32>
    tpu.vector_store %arg8[%c0_101, %c0_102, %c0_103, %c0_104], %151 {strides = array<i32>} : memref<1x16x16x16xf32, #tpu.memory_space<vmem>>, vector<1x16x16x16xf32>,
    return
  }
  func.func @transform_0(%arg0: i32) -> i32 {
    %c0_i32 = arith.constant 0 : i32
    %c0_i32_0 = arith.constant 0 : i32
    return %c0_i32 : i32
  }
  func.func @transform_1(%arg0: i32) -> (i32, i32, i32, i32) {
    %c0_i32 = arith.constant 0 : i32
    %c0_i32_0 = arith.constant 0 : i32
    %c0_i32_1 = arith.constant 0 : i32
    %c0_i32_2 = arith.constant 0 : i32
    return %arg0, %c0_i32, %c0_i32_0, %c0_i32_1 : i32, i32, i32, i32
  }
  func.func @transform_2(%arg0: i32) -> (i32, i32) {
    %c0_i32 = arith.constant 0 : i32
    %c0_i32_0 = arith.constant 0 : i32
    %c0_i32_1 = arith.constant 0 : i32
    return %c0_i32, %c0_i32_0 : i32, i32
  }
  func.func @transform_3(%arg0: i32) -> (i32, i32, i32) {
    %c0_i32 = arith.constant 0 : i32
    %c0_i32_0 = arith.constant 0 : i32
    %c0_i32_1 = arith.constant 0 : i32
    %c0_i32_2 = arith.constant 0 : i32
    return %c0_i32, %c0_i32_0, %c0_i32_1 : i32, i32, i32
  }
  func.func @transform_4(%arg0: i32) -> (i32, i32) {
    %c0_i32 = arith.constant 0 : i32
    %c0_i32_0 = arith.constant 0 : i32
    %c0_i32_1 = arith.constant 0 : i32
    return %c0_i32, %c0_i32_0 : i32, i32
  }
  func.func @transform_5(%arg0: i32) -> (i32, i32) {
    %c0_i32 = arith.constant 0 : i32
    %c0_i32_0 = arith.constant 0 : i32
    %c0_i32_1 = arith.constant 0 : i32
    return %c0_i32, %c0_i32_0 : i32, i32
  }
  func.func @transform_6(%arg0: i32) -> (i32, i32) {
    %c0_i32 = arith.constant 0 : i32
    %c0_i32_0 = arith.constant 0 : i32
    %c0_i32_1 = arith.constant 0 : i32
    return %c0_i32, %c0_i32_0 : i32, i32
  }
  func.func @transform_7(%arg0: i32) -> (i32, i32, i32, i32) {
    %c0_i32 = arith.constant 0 : i32
    %c0_i32_0 = arith.constant 0 : i32
    %c0_i32_1 = arith.constant 0 : i32
    %c0_i32_2 = arith.constant 0 : i32
    return %arg0, %c0_i32, %c0_i32_0, %c0_i32_1 : i32, i32, i32, i32
  }
}

</mosaic_0001>

<llo_original>
// kernel: bottleneck_pallas_nhwc.1
$region0: #{bottleneck_pallas_nhwc.1}
  #allocation0 [shape = 'u32[]', space=smem, size = 0x4, offset = 0x4, fixed_abs, tag = 'smem constant byte address 0x4 - core index']
  #allocation1 [shape = 'u32[144,128]{1,0:T(1,128)}', space=vmem, size = 0x12000, scoped, tag = 'internal scratch']
  #allocation2 [shape = 'f32[1,18,18,4]{3,2,1,0:T(8,128)}', space=vmem, size = 0x36000, scoped, tag = 'scratch operand']
  %s0 = inlined_call_operand.vmem [shape: f32[3], index: 0, kind: input, shape index: {}]
  %s1 = inlined_call_operand.hbm [shape: f32[4,16,16,16], index: 1, kind: input, shape index: {}]
  %s2 = inlined_call_operand.vmem [shape: f32[16,4], index: 2, kind: input, shape index: {}]
  %s3 = inlined_call_operand.vmem [shape: f32[9,4,4], index: 3, kind: input, shape index: {}]
  %s4 = inlined_call_operand.vmem [shape: f32[4,16], index: 4, kind: input, shape index: {}]
  %s5 = inlined_call_operand.vmem [shape: f32[6,4], index: 5, kind: input, shape index: {}]
  %s6 = inlined_call_operand.vmem [shape: f32[3,16], index: 6, kind: input, shape index: {}]
  %s7 = inlined_call_operand.hbm [shape: f32[4,16,16,16], index: 7, kind: output, shape index: {}]
  %s8 = sld [smem:[#allocation0]]
  $region69: #{bottleneck_pallas_nhwc.1} parent=0
    _
  %s10 = ssub.s32 1, %s8
  %s11 = scalar_select 0, %s10, %s8
  $region1: #{bottleneck_pallas_nhwc.1} parent=0
    #allocation3 [shape = 'u8[512]{0}', space=smem, size = 0x200, scoped, tag = 'input window, operand 0, single buffered']
    #allocation4 [shape = 's32[2]{0}', space=sflag, size = 0x8, scoped, tag = 'scoped memory for bottleneck_pallas_nhwc.1']
    #allocation5 [shape = 's32[2]{0}', space=sflag, size = 0x8, scoped, tag = 'scoped memory for bottleneck_pallas_nhwc.1']
    #allocation6 [shape = 's32[2]{0}', space=sflag, size = 0x8, scoped, tag = 'scoped memory for bottleneck_pallas_nhwc.1']
    #allocation7 [shape = 'u8[262144]{0}', space=vmem, size = 0x40000, scoped, tag = 'input window, operand 1']
    #allocation8 [shape = 'u8[262144]{0}', space=vmem, size = 0x40000, scoped, tag = 'output window, operand 0']
    %12 = vsyncpa [#allocation6], 0
    %13 = vsyncpa [#allocation4], 0
    %s14 = scalar_lea.sflag [#allocation4], 1
    %15 = vsyncpa %s14, 0
    %16 = vsyncpa [#allocation5], 0
    %s17 = scalar_lea.sflag [#allocation5], 1
    %18 = vsyncpa %s17, 0
    loop: start=0, step=1, limit=6
    $region2: #{bottleneck_pallas_nhwc.1} parent=1 // loop_pre_header
      _
    $region3: #{bottleneck_pallas_nhwc.1} parent=1 // loop_header
      %s20 = sphi 0, %s24
      %p21 = scmp.ge.s32.totalorder %s20, 6
      %s28 = sphi 0, %s28
      %s30 = sphi 0, %s28
      %s31 = sphi 0, %s30
      %s45 = sphi 0, %s31
      %s51 = sphi 0, %s53
      %s54 = sphi 0, %s51
      %s55 = sphi 0, %s54
      %s71 = sphi 0, %s55
      %s75 = sphi 0, %s75
      %s77 = sphi 0, %s75
      %s78 = sphi 0, %s77
      %s92 = sphi 0, %s78
      %s96 = sphi 0, %s96
      %s98 = sphi 0, %s96
      %s99 = sphi 0, %s98
      %s113 = sphi 0, %s99
      %s117 = sphi 0, %s117
      %s119 = sphi 0, %s117
      %s120 = sphi 0, %s119
      %s134 = sphi 0, %s120
      %s138 = sphi 0, %s138
      %s140 = sphi 0, %s138
      %s141 = sphi 0, %s140
      %s155 = sphi 0, %s141
      %s159 = sphi 0, %s159
      %s161 = sphi 0, %s159
      %s162 = sphi 0, %s161
      %s176 = sphi 0, %s162
      %s182 = sphi 0, %s184
      %s185 = sphi 0, %s182
      %s186 = sphi 0, %s185
      %s202 = sphi 0, %s186
    $region4: #{bottleneck_pallas_nhwc.1} parent=1 // loop_header_branch
      %23 = sbr.rel (%p21) target = $region8
    $region5: #{bottleneck_pallas_nhwc.1} parent=1 // loop_body
      %s25 = ssub.s32 %s20, 1
      %s26 = ssub.s32 %s20, 2
      %s27 = sadd.s32 %s20, 1
      %s29 = sadd.s32 %s28, 1
      %p32 = scmp.eq.s32.totalorder %s20, 3
      %p33 = scmp.ne.s32.totalorder %s28, %s30
      %p34 = scmp.eq.s32.totalorder %s20, 0
      %p35 = por %p33, %p34
      %p36 = scmp.ne.s32.totalorder %s28, %s30
      %p37 = scmp.eq.s32.totalorder %s25, 3
      %p38 = por %p36, %p37
      %p39 = scmp.ne.s32.totalorder %s30, %s31
      %p40 = scmp.eq.s32.totalorder %s25, 0
      %p41 = por %p39, %p40
      %p42 = scmp.ne.s32.totalorder %s30, %s31
      %p43 = scmp.eq.s32.totalorder %s26, 3
      %p44 = por %p42, %p43
      %p46 = scmp.ne.s32.totalorder %s31, %s45
      %p47 = scmp.eq.s32.totalorder %s26, 0
      %p48 = por %p46, %p47
      %s49 = ssub.s32 %s20, %s27
      %p50 = scmp.eq.s32.totalorder %s49, 0
      %s52 = sadd.s32 %s51, 1
      %s53 = scalar_select %p50, %s51, %s52
      %p56 = pneg %p50
      %p57 = scmp.eq.s32.totalorder %s20, 3
      %p58 = por %p56, %p57
      %p59 = scmp.ne.s32.totalorder %s51, %s54
      %p60 = scmp.eq.s32.totalorder %s20, 0
      %p61 = por %p59, %p60
      %p62 = scmp.ne.s32.totalorder %s51, %s54
      %p63 = scmp.eq.s32.totalorder %s25, 3
      %p64 = por %p62, %p63
      %p65 = scmp.ne.s32.totalorder %s54, %s55
      %p66 = scmp.eq.s32.totalorder %s25, 0
      %p67 = por %p65, %p66
      %p68 = scmp.ne.s32.totalorder %s54, %s55
      %p69 = scmp.eq.s32.totalorder %s26, 3
      %p70 = por %p68, %p69
      %p72 = scmp.ne.s32.totalorder %s55, %s71
      %p73 = scmp.eq.s32.totalorder %s26, 0
      %p74 = por %p72, %p73
      %s76 = sadd.s32 %s75, 1
      %p79 = scmp.eq.s32.totalorder %s20, 3
      %p80 = scmp.ne.s32.totalorder %s75, %s77
      %p81 = scmp.eq.s32.totalorder %s20, 0
      %p82 = por %p80, %p81
      %p83 = scmp.ne.s32.totalorder %s75, %s77
      %p84 = scmp.eq.s32.totalorder %s25, 3
      %p85 = por %p83, %p84
      %p86 = scmp.ne.s32.totalorder %s77, %s78
      %p87 = scmp.eq.s32.totalorder %s25, 0
      %p88 = por %p86, %p87
      %p89 = scmp.ne.s32.totalorder %s77, %s78
      %p90 = scmp.eq.s32.totalorder %s26, 3
      %p91 = por %p89, %p90
      %p93 = scmp.ne.s32.totalorder %s78, %s92
      %p94 = scmp.eq.s32.totalorder %s26, 0
      %p95 = por %p93, %p94
      %s97 = sadd.s32 %s96, 1
      %p100 = scmp.eq.s32.totalorder %s20, 3
      %p101 = scmp.ne.s32.totalorder %s96, %s98
      %p102 = scmp.eq.s32.totalorder %s20, 0
      %p103 = por %p101, %p102
      %p104 = scmp.ne.s32.totalorder %s96, %s98
      %p105 = scmp.eq.s32.totalorder %s25, 3
      %p106 = por %p104, %p105
      %p107 = scmp.ne.s32.totalorder %s98, %s99
      %p108 = scmp.eq.s32.totalorder %s25, 0
      %p109 = por %p107, %p108
      %p110 = scmp.ne.s32.totalorder %s98, %s99
      %p111 = scmp.eq.s32.totalorder %s26, 3
      %p112 = por %p110, %p111
      %p114 = scmp.ne.s32.totalorder %s99, %s113
      %p115 = scmp.eq.s32.totalorder %s26, 0
      %p116 = por %p114, %p115
      %s118 = sadd.s32 %s117, 1
      %p121 = scmp.eq.s32.totalorder %s20, 3
      %p122 = scmp.ne.s32.totalorder %s117, %s119
      %p123 = scmp.eq.s32.totalorder %s20, 0
      %p124 = por %p122, %p123
      %p125 = scmp.ne.s32.totalorder %s117, %s119
      %p126 = scmp.eq.s32.totalorder %s25, 3
      %p127 = por %p125, %p126
      %p128 = scmp.ne.s32.totalorder %s119, %s120
      %p129 = scmp.eq.s32.totalorder %s25, 0
      %p130 = por %p128, %p129
      %p131 = scmp.ne.s32.totalorder %s119, %s120
      %p132 = scmp.eq.s32.totalorder %s26, 3
      %p133 = por %p131, %p132
      %p135 = scmp.ne.s32.totalorder %s120, %s134
      %p136 = scmp.eq.s32.totalorder %s26, 0
      %p137 = por %p135, %p136
      %s139 = sadd.s32 %s138, 1
      %p142 = scmp.eq.s32.totalorder %s20, 3
      %p143 = scmp.ne.s32.totalorder %s138, %s140
      %p144 = scmp.eq.s32.totalorder %s20, 0
      %p145 = por %p143, %p144
      %p146 = scmp.ne.s32.totalorder %s138, %s140
      %p147 = scmp.eq.s32.totalorder %s25, 3
      %p148 = por %p146, %p147
      %p149 = scmp.ne.s32.totalorder %s140, %s141
      %p150 = scmp.eq.s32.totalorder %s25, 0
      %p151 = por %p149, %p150
      %p152 = scmp.ne.s32.totalorder %s140, %s141
      %p153 = scmp.eq.s32.totalorder %s26, 3
      %p154 = por %p152, %p153
      %p156 = scmp.ne.s32.totalorder %s141, %s155
      %p157 = scmp.eq.s32.totalorder %s26, 0
      %p158 = por %p156, %p157
      %s160 = sadd.s32 %s159, 1
      %p163 = scmp.eq.s32.totalorder %s20, 3
      %p164 = scmp.ne.s32.totalorder %s159, %s161
      %p165 = scmp.eq.s32.totalorder %s20, 0
      %p166 = por %p164, %p165
      %p167 = scmp.ne.s32.totalorder %s159, %s161
      %p168 = scmp.eq.s32.totalorder %s25, 3
      %p169 = por %p167, %p168
      %p170 = scmp.ne.s32.totalorder %s161, %s162
      %p171 = scmp.eq.s32.totalorder %s25, 0
      %p172 = por %p170, %p171
      %p173 = scmp.ne.s32.totalorder %s161, %s162
      %p174 = scmp.eq.s32.totalorder %s26, 3
      %p175 = por %p173, %p174
      %p177 = scmp.ne.s32.totalorder %s162, %s176
      %p178 = scmp.eq.s32.totalorder %s26, 0
      %p179 = por %p177, %p178
      %s180 = ssub.s32 %s20, %s27
      %p181 = scmp.eq.s32.totalorder %s180, 0
      %s183 = sadd.s32 %s182, 1
      %s184 = scalar_select %p181, %s182, %s183
      %p187 = pneg %p181
      %p188 = scmp.eq.s32.totalorder %s20, 3
      %p189 = por %p187, %p188
      %p190 = scmp.ne.s32.totalorder %s182, %s185
      %p191 = scmp.eq.s32.totalorder %s20, 0
      %p192 = por %p190, %p191
      %p193 = scmp.ne.s32.totalorder %s182, %s185
      %p194 = scmp.eq.s32.totalorder %s25, 3
      %p195 = por %p193, %p194
      %p196 = scmp.ne.s32.totalorder %s185, %s186
      %p197 = scmp.eq.s32.totalorder %s25, 0
      %p198 = por %p196, %p197
      %p199 = scmp.ne.s32.totalorder %s185, %s186
      %p200 = scmp.eq.s32.totalorder %s26, 3
      %p201 = por %p199, %p200
      %p203 = scmp.ne.s32.totalorder %s186, %s202
      %p204 = scmp.eq.s32.totalorder %s26, 0
      %p205 = por %p203, %p204
      %p206 = scmp.le.s32.totalorder 1, %s20
      %p207 = scmp.lt.s32.totalorder %s20, 5
      %p208 = pnand %p206, %p207
      %p209 = pneg %p208
      // Predicated region
      $region9: #{bottleneck_pallas_nhwc.1} parent=5 // pred_check
        _
      $region10: #{bottleneck_pallas_nhwc.1} parent=5 // pred_check_branch
        %211 = sbr.rel (%p208) target = $region12
      $region11: #{bottleneck_pallas_nhwc.1} parent=5 // pred_region
        %s212 = ssub.s32 %s20, 1
        // Predicated region
        $region13: #{bottleneck_pallas_nhwc.1} parent=11 // pred_check
          %p213 = pneg %p41
        $region14: #{bottleneck_pallas_nhwc.1} parent=11 // pred_check_branch
          %215 = sbr.rel (%p213) target = $region16
        $region15: #{bottleneck_pallas_nhwc.1} parent=11 // pred_region
          %s217 = ssub.s32 16, 16
          %218 = vsyncadd [#allocation6], %s217
          %s220 = sshll.u32 %s0, 4
          %s221 = int_to_ptr.vmem [resolvable:$true] %s220
          %223 = dma.vmem_to_smem %s221, 16, [#allocation3], [#allocation6]
        $region16: #{bottleneck_pallas_nhwc.1} parent=11 // pred_fallthru
          _
        // Predicated region
        $region17: #{bottleneck_pallas_nhwc.1} parent=11 // pred_check
          %p224 = pneg %p88
        $region18: #{bottleneck_pallas_nhwc.1} parent=11 // pred_check_branch
          %226 = sbr.rel (%p224) target = $region20
        $region19: #{bottleneck_pallas_nhwc.1} parent=11 // pred_region
          _
        $region20: #{bottleneck_pallas_nhwc.1} parent=11 // pred_fallthru
          _
        // Predicated region
        $region21: #{bottleneck_pallas_nhwc.1} parent=11 // pred_check
          %p227 = pneg %p109
        $region22: #{bottleneck_pallas_nhwc.1} parent=11 // pred_check_branch
          %229 = sbr.rel (%p227) target = $region24
        $region23: #{bottleneck_pallas_nhwc.1} parent=11 // pred_region
          _
        $region24: #{bottleneck_pallas_nhwc.1} parent=11 // pred_fallthru
          _
        // Predicated region
        $region25: #{bottleneck_pallas_nhwc.1} parent=11 // pred_check
          %p230 = pneg %p130
        $region26: #{bottleneck_pallas_nhwc.1} parent=11 // pred_check_branch
          %232 = sbr.rel (%p230) target = $region28
        $region27: #{bottleneck_pallas_nhwc.1} parent=11 // pred_region
          _
        $region28: #{bottleneck_pallas_nhwc.1} parent=11 // pred_fallthru
          _
        // Predicated region
        $region29: #{bottleneck_pallas_nhwc.1} parent=11 // pred_check
          %p233 = pneg %p151
        $region30: #{bottleneck_pallas_nhwc.1} parent=11 // pred_check_branch
          %235 = sbr.rel (%p233) target = $region32
        $region31: #{bottleneck_pallas_nhwc.1} parent=11 // pred_region
          _
        $region32: #{bottleneck_pallas_nhwc.1} parent=11 // pred_fallthru
          _
        // Predicated region
        $region33: #{bottleneck_pallas_nhwc.1} parent=11 // pred_check
          %p236 = pneg %p172
        $region34: #{bottleneck_pallas_nhwc.1} parent=11 // pred_check_branch
          %238 = sbr.rel (%p236) target = $region36
        $region35: #{bottleneck_pallas_nhwc.1} parent=11 // pred_region
          _
        $region36: #{bottleneck_pallas_nhwc.1} parent=11 // pred_fallthru
          _
      $region12: #{bottleneck_pallas_nhwc.1} parent=5 // pred_fallthru
        _
      %p239 = scmp.lt.s32.totalorder %s20, 4
      // Predicated region
      $region37: #{bottleneck_pallas_nhwc.1} parent=5 // pred_check
        %p240 = pneg %p239
      $region38: #{bottleneck_pallas_nhwc.1} parent=5 // pred_check_branch
        %242 = sbr.rel (%p240) target = $region40
      $region39: #{bottleneck_pallas_nhwc.1} parent=5 // pred_region
        // Predicated region
        $region41: #{bottleneck_pallas_nhwc.1} parent=39 // pred_check
          %p243 = pneg %p61
        $region42: #{bottleneck_pallas_nhwc.1} parent=39 // pred_check_branch
          %245 = sbr.rel (%p243) target = $region44
        $region43: #{bottleneck_pallas_nhwc.1} parent=39 // pred_region
          %s246 = sand.u32 %s51, 1
          %s247 = scalar_lea.sflag [#allocation4], %s246
          %s248 = sand.u32 %s51, 1
          %s249 = smul.addr %s248, 256
          %s250 = scalar_lea.vmem [#allocation7], %s249
          %s252 = ssub.s32 4096, 4096
          %253 = vsyncadd %s247, %s252
          %s254 = smul.addr %s20, 32
          %s255 = smul.addr %s254, 128
          %s256 = scalar_lea.hbm %s1, %s255
          %s257 = sshll.u32 %s250, 4
          %s258 = int_to_ptr.vmem [resolvable:$true] %s257
          %263 = dma.hbm_to_vmem [thread:$0]  %s256, 4096, %s258, %s247, 128, 128, 8
        $region44: #{bottleneck_pallas_nhwc.1} parent=39 // pred_fallthru
          _
      $region40: #{bottleneck_pallas_nhwc.1} parent=5 // pred_fallthru
        _
      %p264 = scmp.le.s32.totalorder 1, %s20
      %p265 = scmp.lt.s32.totalorder %s20, 5
      %p266 = pnand %p264, %p265
      %p267 = pneg %p266
      // Predicated region
      $region45: #{bottleneck_pallas_nhwc.1} parent=5 // pred_check
        _
      $region46: #{bottleneck_pallas_nhwc.1} parent=5 // pred_check_branch
        %269 = sbr.rel (%p266) target = $region48
      $region47: #{bottleneck_pallas_nhwc.1} parent=5 // pred_region
        %s270 = ssub.s32 %s20, 1
        // Predicated region
        $region49: #{bottleneck_pallas_nhwc.1} parent=47 // pred_check
          %p271 = pneg %p41
        $region50: #{bottleneck_pallas_nhwc.1} parent=47 // pred_check_branch
          %273 = sbr.rel (%p271) target = $region52
        $region51: #{bottleneck_pallas_nhwc.1} parent=47 // pred_region
          %274 = dma.done [#allocation6], 16
        $region52: #{bottleneck_pallas_nhwc.1} parent=47 // pred_fallthru
          _
        %s275 = sand.u32 %s54, 1
        %s276 = scalar_lea.sflag [#allocation4], %s275
        %s277 = sand.u32 %s54, 1
        %s278 = smul.addr %s277, 256
        %s279 = scalar_lea.vmem [#allocation7], %s278
        // Predicated region
        $region53: #{bottleneck_pallas_nhwc.1} parent=47 // pred_check
          %p280 = pneg %p67
        $region54: #{bottleneck_pallas_nhwc.1} parent=47 // pred_check_branch
          %282 = sbr.rel (%p280) target = $region56
        $region55: #{bottleneck_pallas_nhwc.1} parent=47 // pred_region
          %283 = dma.done %s276, 4096
        $region56: #{bottleneck_pallas_nhwc.1} parent=47 // pred_fallthru
          _
        %284 = sfence
        %p285 = pneg %p41
        %p286 = pneg %p38
        %s287 = sand.u32 %s54, 1
        %s288 = scalar_lea.sflag [#allocation4], %s287
        %s289 = sand.u32 %s54, 1
        %s290 = smul.addr %s289, 256
        %s291 = scalar_lea.vmem [#allocation7], %s290
        %p292 = pneg %p67
        %p293 = pneg %p64
        %p294 = pneg %p88
        %p295 = pneg %p85
        %p296 = pneg %p109
        %p297 = pneg %p106
        %p298 = pneg %p130
        %p299 = pneg %p127
        %p300 = pneg %p151
        %p301 = pneg %p148
        %p302 = pneg %p172
        %p303 = pneg %p169
        %p304 = pneg %p198
        %p305 = pneg %p195
        %s306 = sand.u32 %s185, 1
        %s307 = scalar_lea.sflag [#allocation5], %s306
        %s308 = sand.u32 %s185, 1
        %s309 = smul.addr %s308, 256
        %s310 = scalar_lea.vmem [#allocation8], %s309
        %v311 = vld [vmem:[%s5] sm:$0x3f]
        %v312 = vld [vmem:[%s6] sm:$0x7]
        %v313 = vmax.f32 %v311, 0.0
        %v314 = vld [vmem:[%s279] sm:$0xff]
        %v315 = vld [vmem:[%s279 + $0x8] sm:$0xff]
        %v316 = vld [vmem:[%s279 + $0x10] sm:$0xff]
        %v317 = vld [vmem:[%s279 + $0x18] sm:$0xff]
        %v318 = vld [vmem:[%s279 + $0x20] sm:$0xff]
        %v319 = vld [vmem:[%s279 + $0x28] sm:$0xff]
        %v320 = vld [vmem:[%s279 + $0x30] sm:$0xff]
        %v321 = vld [vmem:[%s279 + $0x38] sm:$0xff]
        %v322 = vld [vmem:[%s279 + $0x40] sm:$0xff]
        %v323 = vld [vmem:[%s279 + $0x48] sm:$0xff]
        %v324 = vld [vmem:[%s279 + $0x50] sm:$0xff]
        %v325 = vld [vmem:[%s279 + $0x58] sm:$0xff]
        %v326 = vld [vmem:[%s279 + $0x60] sm:$0xff]
        %v327 = vld [vmem:[%s279 + $0x68] sm:$0xff]
        %v328 = vld [vmem:[%s279 + $0x70] sm:$0xff]
        %v329 = vld [vmem:[%s279 + $0x78] sm:$0xff]
        %v330 = vld [vmem:[%s279 + $0x80] sm:$0xff]
        %v331 = vld [vmem:[%s279 + $0x88] sm:$0xff]
        %v332 = vld [vmem:[%s279 + $0x90] sm:$0xff]
        %v333 = vld [vmem:[%s279 + $0x98] sm:$0xff]
        %v334 = vld [vmem:[%s279 + $0xa0] sm:$0xff]
        %v335 = vld [vmem:[%s279 + $0xa8] sm:$0xff]
        %v336 = vld [vmem:[%s279 + $0xb0] sm:$0xff]
        %v337 = vld [vmem:[%s279 + $0xb8] sm:$0xff]
        %v338 = vld [vmem:[%s279 + $0xc0] sm:$0xff]
        %v339 = vld [vmem:[%s279 + $0xc8] sm:$0xff]
        %v340 = vld [vmem:[%s279 + $0xd0] sm:$0xff]
        %v341 = vld [vmem:[%s279 + $0xd8] sm:$0xff]
        %v342 = vld [vmem:[%s279 + $0xe0] sm:$0xff]
        %v343 = vld [vmem:[%s279 + $0xe8] sm:$0xff]
        %v344 = vld [vmem:[%s279 + $0xf0] sm:$0xff]
        %v345 = vld [vmem:[%s279 + $0xf8] sm:$0xff]
        %v346 = vld [vmem:[%s2] sm:$0xff]
        %v347 = vld [vmem:[%s2 + $0x8] sm:$0xff]
        %vm348 = vcmask 130048
        %v350 = vsel %vm348, %v314, 0
        %v353 = vsel %vm348, %v315, 0
        %v356 = vsel %vm348, %v316, 0
        %v359 = vsel %vm348, %v317, 0
        %v362 = vsel %vm348, %v318, 0
        %v365 = vsel %vm348, %v319, 0
        %v368 = vsel %vm348, %v320, 0
        %v371 = vsel %vm348, %v321, 0
        %v374 = vsel %vm348, %v322, 0
        %v377 = vsel %vm348, %v323, 0
        %v380 = vsel %vm348, %v324, 0
        %v383 = vsel %vm348, %v325, 0
        %v386 = vsel %vm348, %v326, 0
        %v389 = vsel %vm348, %v327, 0
        %v392 = vsel %vm348, %v328, 0
        %v395 = vsel %vm348, %v329, 0
        %v398 = vsel %vm348, %v330, 0
        %v401 = vsel %vm348, %v331, 0
        %v404 = vsel %vm348, %v332, 0
        %v407 = vsel %vm348, %v333, 0
        %v410 = vsel %vm348, %v334, 0
        %v413 = vsel %vm348, %v335, 0
        %v416 = vsel %vm348, %v336, 0
        %v419 = vsel %vm348, %v337, 0
        %v422 = vsel %vm348, %v338, 0
        %v425 = vsel %vm348, %v339, 0
        %v428 = vsel %vm348, %v340, 0
        %v431 = vsel %vm348, %v341, 0
        %v434 = vsel %vm348, %v342, 0
        %v437 = vsel %vm348, %v343, 0
        %v440 = vsel %vm348, %v344, 0
        %v443 = vsel %vm348, %v345, 0
        %445 = vmatprep.subr.mxu0 0.0
        %446 = vmatpush1.msra.mxu0 %v346
        %447 = vmatprep.subr.mxu0 0.0
        %448 = vmatpush1.msra.mxu0 %v347
        %449 = vmatprep.subr.mxu0 0.0
        %450 = vmatpush1.msra.mxu0 0.0
        %451 = vmatprep.subr.mxu0 0.0
        %452 = vmatpush1.msra.mxu0 0.0
        %453 = vmatprep.subr.mxu0 0.0
        %454 = vmatpush1.msra.mxu0 0.0
        %455 = vmatprep.subr.mxu0 0.0
        %456 = vmatpush1.msra.mxu0 0.0
        %457 = vmatprep.subr.mxu0 0.0
        %458 = vmatpush1.msra.mxu0 0.0
        %459 = vmatprep.subr.mxu0 0.0
        %460 = vmatpush1.msra.mxu0 0.0
        %461 = vmatprep.subr.mxu0 0.0
        %462 = vmatpush1.msra.mxu0 0.0
        %463 = vmatprep.subr.mxu0 0.0
        %464 = vmatpush1.msra.mxu0 0.0
        %465 = vmatprep.subr.mxu0 0.0
        %466 = vmatpush1.msra.mxu0 0.0
        %467 = vmatprep.subr.mxu0 0.0
        %468 = vmatpush1.msra.mxu0 0.0
        %469 = vmatprep.subr.mxu0 0.0
        %470 = vmatpush1.msra.mxu0 0.0
        %471 = vmatprep.subr.mxu0 0.0
        %472 = vmatpush1.msra.mxu0 0.0
        %473 = vmatprep.subr.mxu0 0.0
        %474 = vmatpush1.msra.mxu0 0.0
        %475 = vmatprep.subr.mxu0 0.0
        %476 = vmatpush1.msra.mxu0 0.0
        %477 = vmatprep.subr.mxu0 0.0
        %478 = vmatpush1.msra.mxu0 0.0
        %479 = vmatprep.subr.mxu0 0.0
        %480 = vmatpush1.msra.mxu0 0.0
        %481 = vmatprep.subr.mxu0 0.0
        %482 = vmatpush1.msra.mxu0 0.0
        %483 = vmatprep.subr.mxu0 0.0
        %484 = vmatpush1.msra.mxu0 0.0
        %485 = vmatprep.subr.mxu0 0.0
        %486 = vmatpush1.msra.mxu0 0.0
        %487 = vmatprep.subr.mxu0 0.0
        %488 = vmatpush1.msra.mxu0 0.0
        %489 = vmatprep.subr.mxu0 0.0
        %490 = vmatpush1.msra.mxu0 0.0
        %491 = vmatprep.subr.mxu0 0.0
        %492 = vmatpush1.msra.mxu0 0.0
        %493 = vmatprep.subr.mxu0 0.0
        %494 = vmatpush1.msra.mxu0 0.0
        %495 = vmatprep.subr.mxu0 0.0
        %496 = vmatpush1.msra.mxu0 0.0
        %497 = vmatprep.subr.mxu0 0.0
        %498 = vmatpush1.msra.mxu0 0.0
        %499 = vmatprep.subr.mxu0 0.0
        %500 = vmatpush1.msra.mxu0 0.0
        %501 = vmatprep.subr.mxu0 0.0
        %502 = vmatpush1.msra.mxu0 0.0
        %503 = vmatprep.subr.mxu0 0.0
        %504 = vmatpush1.msra.mxu0 0.0
        %505 = vmatprep.subr.mxu0 0.0
        %506 = vmatpush1.msra.mxu0 0.0
        %507 = vmatprep.subr.mxu0 0.0
        %508 = vmatpush1.msra.mxu0 0.0
        %509 = vmatprep.mubr.f32.mxu0 0.0
        %510 = vmatmul.mubr.f32.gmra.mrb[0].mxu0 %v350
        %v511 = vpop.f32.mrb[0].mxu0
        %v512 = vadd.f32 0.0, %v511
        %v513 = vpop.f32.mrb[0].mxu0
        %514 = vmatprep.mubr.f32.mxu0 0.0
        %515 = vmatmul.mubr.f32.gmra.mrb[0].mxu0 %v353
        %v516 = vpop.f32.mrb[0].mxu0
        %v517 = vadd.f32 0.0, %v516
        %v518 = vpop.f32.mrb[0].mxu0
        %519 = vmatprep.mubr.f32.mxu0 0.0
        %520 = vmatmul.mubr.f32.gmra.mrb[0].mxu0 %v356
        %v521 = vpop.f32.mrb[0].mxu0
        %v522 = vadd.f32 0.0, %v521
        %v523 = vpop.f32.mrb[0].mxu0
        %524 = vmatprep.mubr.f32.mxu0 0.0
        %525 = vmatmul.mubr.f32.gmra.mrb[0].mxu0 %v359
        %v526 = vpop.f32.mrb[0].mxu0
        %v527 = vadd.f32 0.0, %v526
        %v528 = vpop.f32.mrb[0].mxu0
        %529 = vmatprep.mubr.f32.mxu0 0.0
        %530 = vmatmul.mubr.f32.gmra.mrb[0].mxu0 %v362
        %v531 = vpop.f32.mrb[0].mxu0
        %v532 = vadd.f32 0.0, %v531
        %v533 = vpop.f32.mrb[0].mxu0
        %534 = vmatprep.mubr.f32.mxu0 0.0
        %535 = vmatmul.mubr.f32.gmra.mrb[0].mxu0 %v365
        %v536 = vpop.f32.mrb[0].mxu0
        %v537 = vadd.f32 0.0, %v536
        %v538 = vpop.f32.mrb[0].mxu0
        %539 = vmatprep.mubr.f32.mxu0 0.0
        %540 = vmatmul.mubr.f32.gmra.mrb[0].mxu0 %v368
        %v541 = vpop.f32.mrb[0].mxu0
        %v542 = vadd.f32 0.0, %v541
        %v543 = vpop.f32.mrb[0].mxu0
        %544 = vmatprep.mubr.f32.mxu0 0.0
        %545 = vmatmul.mubr.f32.gmra.mrb[0].mxu0 %v371
        %v546 = vpop.f32.mrb[0].mxu0
        %v547 = vadd.f32 0.0, %v546
        %v548 = vpop.f32.mrb[0].mxu0
        %549 = vmatprep.mubr.f32.mxu0 0.0
        %550 = vmatmul.mubr.f32.gmra.mrb[0].mxu0 %v374
        %v551 = vpop.f32.mrb[0].mxu0
        %v552 = vadd.f32 0.0, %v551
        %v553 = vpop.f32.mrb[0].mxu0
        %554 = vmatprep.mubr.f32.mxu0 0.0
        %555 = vmatmul.mubr.f32.gmra.mrb[0].mxu0 %v377
        %v556 = vpop.f32.mrb[0].mxu0
        %v557 = vadd.f32 0.0, %v556
        %v558 = vpop.f32.mrb[0].mxu0
        %559 = vmatprep.mubr.f32.mxu0 0.0
        %560 = vmatmul.mubr.f32.gmra.mrb[0].mxu0 %v380
        %v561 = vpop.f32.mrb[0].mxu0
        %v562 = vadd.f32 0.0, %v561
        %v563 = vpop.f32.mrb[0].mxu0
        %564 = vmatprep.mubr.f32.mxu0 0.0
        %565 = vmatmul.mubr.f32.gmra.mrb[0].mxu0 %v383
        %v566 = vpop.f32.mrb[0].mxu0
        %v567 = vadd.f32 0.0, %v566
        %v568 = vpop.f32.mrb[0].mxu0
        %569 = vmatprep.mubr.f32.mxu0 0.0
        %570 = vmatmul.mubr.f32.gmra.mrb[0].mxu0 %v386
        %v571 = vpop.f32.mrb[0].mxu0
        %v572 = vadd.f32 0.0, %v571
        %v573 = vpop.f32.mrb[0].mxu0
        %574 = vmatprep.mubr.f32.mxu0 0.0
        %575 = vmatmul.mubr.f32.gmra.mrb[0].mxu0 %v389
        %v576 = vpop.f32.mrb[0].mxu0
        %v577 = vadd.f32 0.0, %v576
        %v578 = vpop.f32.mrb[0].mxu0
        %579 = vmatprep.mubr.f32.mxu0 0.0
        %580 = vmatmul.mubr.f32.gmra.mrb[0].mxu0 %v392
        %v581 = vpop.f32.mrb[0].mxu0
        %v582 = vadd.f32 0.0, %v581
        %v583 = vpop.f32.mrb[0].mxu0
        %584 = vmatprep.mubr.f32.mxu0 0.0
        %585 = vmatmul.mubr.f32.gmra.mrb[0].mxu0 %v395
        %v586 = vpop.f32.mrb[0].mxu0
        %v587 = vadd.f32 0.0, %v586
        %v588 = vpop.f32.mrb[0].mxu0
        %589 = vmatprep.mubr.f32.mxu0 0.0
        %590 = vmatmul.mubr.f32.gmra.mrb[0].mxu0 %v398
        %v591 = vpop.f32.mrb[0].mxu0
        %v592 = vadd.f32 0.0, %v591
        %v593 = vpop.f32.mrb[0].mxu0
        %594 = vmatprep.mubr.f32.mxu0 0.0
        %595 = vmatmul.mubr.f32.gmra.mrb[0].mxu0 %v401
        %v596 = vpop.f32.mrb[0].mxu0
        %v597 = vadd.f32 0.0, %v596
        %v598 = vpop.f32.mrb[0].mxu0
        %599 = vmatprep.mubr.f32.mxu0 0.0
        %600 = vmatmul.mubr.f32.gmra.mrb[0].mxu0 %v404
        %v601 = vpop.f32.mrb[0].mxu0
        %v602 = vadd.f32 0.0, %v601
        %v603 = vpop.f32.mrb[0].mxu0
        %604 = vmatprep.mubr.f32.mxu0 0.0
        %605 = vmatmul.mubr.f32.gmra.mrb[0].mxu0 %v407
        %v606 = vpop.f32.mrb[0].mxu0
        %v607 = vadd.f32 0.0, %v606
        %v608 = vpop.f32.mrb[0].mxu0
        %609 = vmatprep.mubr.f32.mxu0 0.0
        %610 = vmatmul.mubr.f32.gmra.mrb[0].mxu0 %v410
        %v611 = vpop.f32.mrb[0].mxu0
        %v612 = vadd.f32 0.0, %v611
        %v613 = vpop.f32.mrb[0].mxu0
        %614 = vmatprep.mubr.f32.mxu0 0.0
        %615 = vmatmul.mubr.f32.gmra.mrb[0].mxu0 %v413
        %v616 = vpop.f32.mrb[0].mxu0
        %v617 = vadd.f32 0.0, %v616
        %v618 = vpop.f32.mrb[0].mxu0
        %619 = vmatprep.mubr.f32.mxu0 0.0
        %620 = vmatmul.mubr.f32.gmra.mrb[0].mxu0 %v416
        %v621 = vpop.f32.mrb[0].mxu0
        %v622 = vadd.f32 0.0, %v621
        %v623 = vpop.f32.mrb[0].mxu0
        %624 = vmatprep.mubr.f32.mxu0 0.0
        %625 = vmatmul.mubr.f32.gmra.mrb[0].mxu0 %v419
        %v626 = vpop.f32.mrb[0].mxu0
        %v627 = vadd.f32 0.0, %v626
        %v628 = vpop.f32.mrb[0].mxu0
        %629 = vmatprep.mubr.f32.mxu0 0.0
        %630 = vmatmul.mubr.f32.gmra.mrb[0].mxu0 %v422
        %v631 = vpop.f32.mrb[0].mxu0
        %v632 = vadd.f32 0.0, %v631
        %v633 = vpop.f32.mrb[0].mxu0
        %634 = vmatprep.mubr.f32.mxu0 0.0
        %635 = vmatmul.mubr.f32.gmra.mrb[0].mxu0 %v425
        %v636 = vpop.f32.mrb[0].mxu0
        %v637 = vadd.f32 0.0, %v636
        %v638 = vpop.f32.mrb[0].mxu0
        %639 = vmatprep.mubr.f32.mxu0 0.0
        %640 = vmatmul.mubr.f32.gmra.mrb[0].mxu0 %v428
        %v641 = vpop.f32.mrb[0].mxu0
        %v642 = vadd.f32 0.0, %v641
        %v643 = vpop.f32.mrb[0].mxu0
        %644 = vmatprep.mubr.f32.mxu0 0.0
        %645 = vmatmul.mubr.f32.gmra.mrb[0].mxu0 %v431
        %v646 = vpop.f32.mrb[0].mxu0
        %v647 = vadd.f32 0.0, %v646
        %v648 = vpop.f32.mrb[0].mxu0
        %649 = vmatprep.mubr.f32.mxu0 0.0
        %650 = vmatmul.mubr.f32.gmra.mrb[0].mxu0 %v434
        %v651 = vpop.f32.mrb[0].mxu0
        %v652 = vadd.f32 0.0, %v651
        %v653 = vpop.f32.mrb[0].mxu0
        %654 = vmatprep.mubr.f32.mxu0 0.0
        %655 = vmatmul.mubr.f32.gmra.mrb[0].mxu0 %v437
        %v656 = vpop.f32.mrb[0].mxu0
        %v657 = vadd.f32 0.0, %v656
        %v658 = vpop.f32.mrb[0].mxu0
        %659 = vmatprep.mubr.f32.mxu0 0.0
        %660 = vmatmul.mubr.f32.gmra.mrb[0].mxu0 %v440
        %v661 = vpop.f32.mrb[0].mxu0
        %v662 = vadd.f32 0.0, %v661
        %v663 = vpop.f32.mrb[0].mxu0
        %664 = vmatprep.mubr.f32.mxu0 0.0
        %665 = vmatmul.mubr.f32.gmra.mrb[0].mxu0 %v443
        %v666 = vpop.f32.mrb[0].mxu0
        %v667 = vadd.f32 0.0, %v666
        %v668 = vpop.f32.mrb[0].mxu0
        %669 = vdwg.mxu0
        %s670 = sld [smem:[#allocation3]]
        %v671 = vmul.f32 %v512, %v512
        %v672 = vmul.f32 %v517, %v517
        %v673 = vmul.f32 %v522, %v522
        %v674 = vmul.f32 %v527, %v527
        %v675 = vmul.f32 %v532, %v532
        %v676 = vmul.f32 %v537, %v537
        %v677 = vmul.f32 %v542, %v542
        %v678 = vmul.f32 %v547, %v547
        %v679 = vmul.f32 %v552, %v552
        %v680 = vmul.f32 %v557, %v557
        %v681 = vmul.f32 %v562, %v562
        %v682 = vmul.f32 %v567, %v567
        %v683 = vmul.f32 %v572, %v572
        %v684 = vmul.f32 %v577, %v577
        %v685 = vmul.f32 %v582, %v582
        %v686 = vmul.f32 %v587, %v587
        %v687 = vmul.f32 %v592, %v592
        %v688 = vmul.f32 %v597, %v597
        %v689 = vmul.f32 %v602, %v602
        %v690 = vmul.f32 %v607, %v607
        %v691 = vmul.f32 %v612, %v612
        %v692 = vmul.f32 %v617, %v617
        %v693 = vmul.f32 %v622, %v622
        %v694 = vmul.f32 %v627, %v627
        %v695 = vmul.f32 %v632, %v632
        %v696 = vmul.f32 %v637, %v637
        %v697 = vmul.f32 %v642, %v642
        %v698 = vmul.f32 %v647, %v647
        %v699 = vmul.f32 %v652, %v652
        %v700 = vmul.f32 %v657, %v657
        %v701 = vmul.f32 %v662, %v662
        %v702 = vmul.f32 %v667, %v667
        %vm703 = vcmask 31744
        %v704 = vsel %vm703, %v671, 0.0
        %v705 = vsel %vm703, %v672, 0.0
        %v706 = vadd.f32 %v704, %v705
        %v707 = vsel %vm703, %v673, 0.0
        %v708 = vadd.f32 %v706, %v707
        %v709 = vsel %vm703, %v674, 0.0
        %v710 = vadd.f32 %v708, %v709
        %v711 = vsel %vm703, %v675, 0.0
        %v712 = vadd.f32 %v710, %v711
        %v713 = vsel %vm703, %v676, 0.0
        %v714 = vadd.f32 %v712, %v713
        %v715 = vsel %vm703, %v677, 0.0
        %v716 = vadd.f32 %v714, %v715
        %v717 = vsel %vm703, %v678, 0.0
        %v718 = vadd.f32 %v716, %v717
        %v719 = vsel %vm703, %v679, 0.0
        %v720 = vadd.f32 %v718, %v719
        %v721 = vsel %vm703, %v680, 0.0
        %v722 = vadd.f32 %v720, %v721
        %v723 = vsel %vm703, %v681, 0.0
        %v724 = vadd.f32 %v722, %v723
        %v725 = vsel %vm703, %v682, 0.0
        %v726 = vadd.f32 %v724, %v725
        %v727 = vsel %vm703, %v683, 0.0
        %v728 = vadd.f32 %v726, %v727
        %v729 = vsel %vm703, %v684, 0.0
        %v730 = vadd.f32 %v728, %v729
        %v731 = vsel %vm703, %v685, 0.0
        %v732 = vadd.f32 %v730, %v731
        %v733 = vsel %vm703, %v686, 0.0
        %v734 = vadd.f32 %v732, %v733
        %v735 = vsel %vm703, %v687, 0.0
        %v736 = vadd.f32 %v734, %v735
        %v737 = vsel %vm703, %v688, 0.0
        %v738 = vadd.f32 %v736, %v737
        %v739 = vsel %vm703, %v689, 0.0
        %v740 = vadd.f32 %v738, %v739
        %v741 = vsel %vm703, %v690, 0.0
        %v742 = vadd.f32 %v740, %v741
        %v743 = vsel %vm703, %v691, 0.0
        %v744 = vadd.f32 %v742, %v743
        %v745 = vsel %vm703, %v692, 0.0
        %v746 = vadd.f32 %v744, %v745
        %v747 = vsel %vm703, %v693, 0.0
        %v748 = vadd.f32 %v746, %v747
        %v749 = vsel %vm703, %v694, 0.0
        %v750 = vadd.f32 %v748, %v749
        %v751 = vsel %vm703, %v695, 0.0
        %v752 = vadd.f32 %v750, %v751
        %v753 = vsel %vm703, %v696, 0.0
        %v754 = vadd.f32 %v752, %v753
        %v755 = vsel %vm703, %v697, 0.0
        %v756 = vadd.f32 %v754, %v755
        %v757 = vsel %vm703, %v698, 0.0
        %v758 = vadd.f32 %v756, %v757
        %v759 = vsel %vm703, %v699, 0.0
        %v760 = vadd.f32 %v758, %v759
        %v761 = vsel %vm703, %v700, 0.0
        %v762 = vadd.f32 %v760, %v761
        %v763 = vsel %vm703, %v701, 0.0
        %v764 = vadd.f32 %v762, %v763
        %v765 = vsel %vm703, %v702, 0.0
        %v766 = vadd.f32 %v764, %v765
        %v767 = vrot.slane %v766, 4
        %v768 = vadd.f32 %v766, %v767
        %v769 = vrot.slane %v768, 2
        %v770 = vadd.f32 %v768, %v769
        %v771 = vrot.slane %v770, 1
        %v772 = vadd.f32 %v770, %v771
        %v773 = vrcp.pop 256.0
        %v774 = vmul.f32 %v772, %v773
        %s775 = sand.u32 2147483647, %s670
        %v776 = vstv %s775
        %v777 = vadd.f32 %v774, %v776
        %v778 = vrsqrt.pop %v777
        %v779 = vmul.f32 %v512, %v778
        %v780 = vmul.f32 %v517, %v778
        %v781 = vmul.f32 %v522, %v778
        %v782 = vmul.f32 %v527, %v778
        %v783 = vmul.f32 %v532, %v778
        %v784 = vmul.f32 %v537, %v778
        %v785 = vmul.f32 %v542, %v778
        %v786 = vmul.f32 %v547, %v778
        %v787 = vmul.f32 %v552, %v778
        %v788 = vmul.f32 %v557, %v778
        %v789 = vmul.f32 %v562, %v778
        %v790 = vmul.f32 %v567, %v778
        %v791 = vmul.f32 %v572, %v778
        %v792 = vmul.f32 %v577, %v778
        %v793 = vmul.f32 %v582, %v778
        %v794 = vmul.f32 %v587, %v778
        %v795 = vmul.f32 %v592, %v778
        %v796 = vmul.f32 %v597, %v778
        %v797 = vmul.f32 %v602, %v778
        %v798 = vmul.f32 %v607, %v778
        %v799 = vmul.f32 %v612, %v778
        %v800 = vmul.f32 %v617, %v778
        %v801 = vmul.f32 %v622, %v778
        %v802 = vmul.f32 %v627, %v778
        %v803 = vmul.f32 %v632, %v778
        %v804 = vmul.f32 %v637, %v778
        %v805 = vmul.f32 %v642, %v778
        %v806 = vmul.f32 %v647, %v778
        %v807 = vmul.f32 %v652, %v778
        %v808 = vmul.f32 %v657, %v778
        %v809 = vmul.f32 %v662, %v778
        %v810 = vmul.f32 %v667, %v778
        %v811 = vlaneseq
        %v812 = vshrl.u32 %v811, 7
        %v813 = vsub.s32 0, %v812
        %v814 = vrot.slane %v311, %v813
        %v815 = vmul.f32 %v814, %v779
        %v816 = vmul.f32 %v814, %v780
        %v817 = vmul.f32 %v814, %v781
        %v818 = vmul.f32 %v814, %v782
        %v819 = vmul.f32 %v814, %v783
        %v820 = vmul.f32 %v814, %v784
        %v821 = vmul.f32 %v814, %v785
        %v822 = vmul.f32 %v814, %v786
        %v823 = vmul.f32 %v814, %v787
        %v824 = vmul.f32 %v814, %v788
        %v825 = vmul.f32 %v814, %v789
        %v826 = vmul.f32 %v814, %v790
        %v827 = vmul.f32 %v814, %v791
        %v828 = vmul.f32 %v814, %v792
        %v829 = vmul.f32 %v814, %v793
        %v830 = vmul.f32 %v814, %v794
        %v831 = vmul.f32 %v814, %v795
        %v832 = vmul.f32 %v814, %v796
        %v833 = vmul.f32 %v814, %v797
        %v834 = vmul.f32 %v814, %v798
        %v835 = vmul.f32 %v814, %v799
        %v836 = vmul.f32 %v814, %v800
        %v837 = vmul.f32 %v814, %v801
        %v838 = vmul.f32 %v814, %v802
        %v839 = vmul.f32 %v814, %v803
        %v840 = vmul.f32 %v814, %v804
        %v841 = vmul.f32 %v814, %v805
        %v842 = vmul.f32 %v814, %v806
        %v843 = vmul.f32 %v814, %v807
        %v844 = vmul.f32 %v814, %v808
        %v845 = vmul.f32 %v814, %v809
        %v846 = vmul.f32 %v814, %v810
        %v847 = vlaneseq
        %v848 = vshrl.u32 %v847, 7
        %v849 = vsub.s32 1, %v848
        %v850 = vrot.slane %v311, %v849
        %v851 = vadd.f32 %v815, %v850
        %v852 = vadd.f32 %v816, %v850
        %v853 = vadd.f32 %v817, %v850
        %v854 = vadd.f32 %v818, %v850
        %v855 = vadd.f32 %v819, %v850
        %v856 = vadd.f32 %v820, %v850
        %v857 = vadd.f32 %v821, %v850
        %v858 = vadd.f32 %v822, %v850
        %v859 = vadd.f32 %v823, %v850
        %v860 = vadd.f32 %v824, %v850
        %v861 = vadd.f32 %v825, %v850
        %v862 = vadd.f32 %v826, %v850
        %v863 = vadd.f32 %v827, %v850
        %v864 = vadd.f32 %v828, %v850
        %v865 = vadd.f32 %v829, %v850
        %v866 = vadd.f32 %v830, %v850
        %v867 = vadd.f32 %v831, %v850
        %v868 = vadd.f32 %v832, %v850
        %v869 = vadd.f32 %v833, %v850
        %v870 = vadd.f32 %v834, %v850
        %v871 = vadd.f32 %v835, %v850
        %v872 = vadd.f32 %v836, %v850
        %v873 = vadd.f32 %v837, %v850
        %v874 = vadd.f32 %v838, %v850
        %v875 = vadd.f32 %v839, %v850
        %v876 = vadd.f32 %v840, %v850
        %v877 = vadd.f32 %v841, %v850
        %v878 = vadd.f32 %v842, %v850
        %v879 = vadd.f32 %v843, %v850
        %v880 = vadd.f32 %v844, %v850
        %v881 = vadd.f32 %v845, %v850
        %v882 = vadd.f32 %v846, %v850
        %v883 = vlaneseq
        %v884 = vshrl.u32 %v883, 7
        %v885 = vsub.s32 2, %v884
        %v886 = vrot.slane %v313, %v885
        %v887 = vmax.f32 %v851, %v886
        %v888 = vmax.f32 %v852, %v886
        %v889 = vmax.f32 %v853, %v886
        %v890 = vmax.f32 %v854, %v886
        %v891 = vmax.f32 %v855, %v886
        %v892 = vmax.f32 %v856, %v886
        %v893 = vmax.f32 %v857, %v886
        %v894 = vmax.f32 %v858, %v886
        %v895 = vmax.f32 %v859, %v886
        %v896 = vmax.f32 %v860, %v886
        %v897 = vmax.f32 %v861, %v886
        %v898 = vmax.f32 %v862, %v886
        %v899 = vmax.f32 %v863, %v886
        %v900 = vmax.f32 %v864, %v886
        %v901 = vmax.f32 %v865, %v886
        %v902 = vmax.f32 %v866, %v886
        %v903 = vmax.f32 %v867, %v886
        %v904 = vmax.f32 %v868, %v886
        %v905 = vmax.f32 %v869, %v886
        %v906 = vmax.f32 %v870, %v886
        %v907 = vmax.f32 %v871, %v886
        %v908 = vmax.f32 %v872, %v886
        %v909 = vmax.f32 %v873, %v886
        %v910 = vmax.f32 %v874, %v886
        %v911 = vmax.f32 %v875, %v886
        %v912 = vmax.f32 %v876, %v886
        %v913 = vmax.f32 %v877, %v886
        %v914 = vmax.f32 %v878, %v886
        %v915 = vmax.f32 %v879, %v886
        %v916 = vmax.f32 %v880, %v886
        %v917 = vmax.f32 %v881, %v886
        %v918 = vmax.f32 %v882, %v886
        %919 = vst.msk [vmem:[#allocation2] sm:$0xff] %vm703, 0.0
        %920 = vst.msk [vmem:[#allocation2 + $0x8] sm:$0xff] %vm703, 0.0
        %vm921 = vcmask 25600
        %922 = vst.msk [vmem:[#allocation2 + $0x10] sm:$0x3] %vm921, 0.0
        %923 = vst.msk [vmem:[#allocation2 + $0x18] sm:$0xff] %vm703, 0.0
        %924 = vst.msk [vmem:[#allocation2 + $0x20] sm:$0xff] %vm703, 0.0
        %925 = vst.msk [vmem:[#allocation2 + $0x28] sm:$0x3] %vm921, 0.0
        %926 = vst.msk [vmem:[#allocation2 + $0x30] sm:$0xff] %vm703, 0.0
        %927 = vst.msk [vmem:[#allocation2 + $0x38] sm:$0xff] %vm703, 0.0
        %928 = vst.msk [vmem:[#allocation2 + $0x40] sm:$0x3] %vm921, 0.0
        %929 = vst.msk [vmem:[#allocation2 + $0x48] sm:$0xff] %vm703, 0.0
        %930 = vst.msk [vmem:[#allocation2 + $0x50] sm:$0xff] %vm703, 0.0
        %931 = vst.msk [vmem:[#allocation2 + $0x58] sm:$0x3] %vm921, 0.0
        %932 = vst.msk [vmem:[#allocation2 + $0x60] sm:$0xff] %vm703, 0.0
        %933 = vst.msk [vmem:[#allocation2 + $0x68] sm:$0xff] %vm703, 0.0
        %934 = vst.msk [vmem:[#allocation2 + $0x70] sm:$0x3] %vm921, 0.0
        %935 = vst.msk [vmem:[#allocation2 + $0x78] sm:$0xff] %vm703, 0.0
        %936 = vst.msk [vmem:[#allocation2 + $0x80] sm:$0xff] %vm703, 0.0
        %937 = vst.msk [vmem:[#allocation2 + $0x88] sm:$0x3] %vm921, 0.0
        %938 = vst.msk [vmem:[#allocation2 + $0x90] sm:$0xff] %vm703, 0.0
        %939 = vst.msk [vmem:[#allocation2 + $0x98] sm:$0xff] %vm703, 0.0
        %940 = vst.msk [vmem:[#allocation2 + $0xa0] sm:$0x3] %vm921, 0.0
        %941 = vst.msk [vmem:[#allocation2 + $0xa8] sm:$0xff] %vm703, 0.0
        %942 = vst.msk [vmem:[#allocation2 + $0xb0] sm:$0xff] %vm703, 0.0
        %943 = vst.msk [vmem:[#allocation2 + $0xb8] sm:$0x3] %vm921, 0.0
        %944 = vst.msk [vmem:[#allocation2 + $0xc0] sm:$0xff] %vm703, 0.0
        %945 = vst.msk [vmem:[#allocation2 + $0xc8] sm:$0xff] %vm703, 0.0
        %946 = vst.msk [vmem:[#allocation2 + $0xd0] sm:$0x3] %vm921, 0.0
        %947 = vst.msk [vmem:[#allocation2 + $0xd8] sm:$0xff] %vm703, 0.0
        %948 = vst.msk [vmem:[#allocation2 + $0xe0] sm:$0xff] %vm703, 0.0
        %949 = vst.msk [vmem:[#allocation2 + $0xe8] sm:$0x3] %vm921, 0.0
        %950 = vst.msk [vmem:[#allocation2 + $0xf0] sm:$0xff] %vm703, 0.0
        %951 = vst.msk [vmem:[#allocation2 + $0xf8] sm:$0xff] %vm703, 0.0
        %952 = vst.msk [vmem:[#allocation2 + $0x100] sm:$0x3] %vm921, 0.0
        %953 = vst.msk [vmem:[#allocation2 + $0x108] sm:$0xff] %vm703, 0.0
        %954 = vst.msk [vmem:[#allocation2 + $0x110] sm:$0xff] %vm703, 0.0
        %955 = vst.msk [vmem:[#allocation2 + $0x118] sm:$0x3] %vm921, 0.0
        %956 = vst.msk [vmem:[#allocation2 + $0x120] sm:$0xff] %vm703, 0.0
        %957 = vst.msk [vmem:[#allocation2 + $0x128] sm:$0xff] %vm703, 0.0
        %958 = vst.msk [vmem:[#allocation2 + $0x130] sm:$0x3] %vm921, 0.0
        %959 = vst.msk [vmem:[#allocation2 + $0x138] sm:$0xff] %vm703, 0.0
        %960 = vst.msk [vmem:[#allocation2 + $0x140] sm:$0xff] %vm703, 0.0
        %961 = vst.msk [vmem:[#allocation2 + $0x148] sm:$0x3] %vm921, 0.0
        %962 = vst.msk [vmem:[#allocation2 + $0x150] sm:$0xff] %vm703, 0.0
        %963 = vst.msk [vmem:[#allocation2 + $0x158] sm:$0xff] %vm703, 0.0
        %964 = vst.msk [vmem:[#allocation2 + $0x160] sm:$0x3] %vm921, 0.0
        %965 = vst.msk [vmem:[#allocation2 + $0x168] sm:$0xff] %vm703, 0.0
        %966 = vst.msk [vmem:[#allocation2 + $0x170] sm:$0xff] %vm703, 0.0
        %967 = vst.msk [vmem:[#allocation2 + $0x178] sm:$0x3] %vm921, 0.0
        %968 = vst.msk [vmem:[#allocation2 + $0x180] sm:$0xff] %vm703, 0.0
        %969 = vst.msk [vmem:[#allocation2 + $0x188] sm:$0xff] %vm703, 0.0
        %970 = vst.msk [vmem:[#allocation2 + $0x190] sm:$0x3] %vm921, 0.0
        %971 = vst.msk [vmem:[#allocation2 + $0x198] sm:$0xff] %vm703, 0.0
        %972 = vst.msk [vmem:[#allocation2 + $0x1a0] sm:$0xff] %vm703, 0.0
        %973 = vst.msk [vmem:[#allocation2 + $0x1a8] sm:$0x3] %vm921, 0.0
        %s974 = scalar_lea.vmem [#allocation2], 24
        %975 = vst.msk [vmem:[%s974 + $0x1] sm:$0xff] %vm703, %v887
        %976 = vst.msk [vmem:[%s974 + $0x9] sm:$0xff] %vm703, %v888
        %977 = vst.msk [vmem:[%s974 + $0x19] sm:$0xff] %vm703, %v889
        %978 = vst.msk [vmem:[%s974 + $0x21] sm:$0xff] %vm703, %v890
        %979 = vst.msk [vmem:[%s974 + $0x31] sm:$0xff] %vm703, %v891
        %980 = vst.msk [vmem:[%s974 + $0x39] sm:$0xff] %vm703, %v892
        %981 = vst.msk [vmem:[%s974 + $0x49] sm:$0xff] %vm703, %v893
        %982 = vst.msk [vmem:[%s974 + $0x51] sm:$0xff] %vm703, %v894
        %983 = vst.msk [vmem:[%s974 + $0x61] sm:$0xff] %vm703, %v895
        %984 = vst.msk [vmem:[%s974 + $0x69] sm:$0xff] %vm703, %v896
        %985 = vst.msk [vmem:[%s974 + $0x79] sm:$0xff] %vm703, %v897
        %986 = vst.msk [vmem:[%s974 + $0x81] sm:$0xff] %vm703, %v898
        %987 = vst.msk [vmem:[%s974 + $0x91] sm:$0xff] %vm703, %v899
        %988 = vst.msk [vmem:[%s974 + $0x99] sm:$0xff] %vm703, %v900
        %989 = vst.msk [vmem:[%s974 + $0xa9] sm:$0xff] %vm703, %v901
        %990 = vst.msk [vmem:[%s974 + $0xb1] sm:$0xff] %vm703, %v902
        %991 = vst.msk [vmem:[%s974 + $0xc1] sm:$0xff] %vm703, %v903
        %992 = vst.msk [vmem:[%s974 + $0xc9] sm:$0xff] %vm703, %v904
        %993 = vst.msk [vmem:[%s974 + $0xd9] sm:$0xff] %vm703, %v905
        %994 = vst.msk [vmem:[%s974 + $0xe1] sm:$0xff] %vm703, %v906
        %995 = vst.msk [vmem:[%s974 + $0xf1] sm:$0xff] %vm703, %v907
        %996 = vst.msk [vmem:[%s974 + $0xf9] sm:$0xff] %vm703, %v908
        %997 = vst.msk [vmem:[%s974 + $0x109] sm:$0xff] %vm703, %v909
        %998 = vst.msk [vmem:[%s974 + $0x111] sm:$0xff] %vm703, %v910
        %999 = vst.msk [vmem:[%s974 + $0x121] sm:$0xff] %vm703, %v911
        %1000 = vst.msk [vmem:[%s974 + $0x129] sm:$0xff] %vm703, %v912
        %1001 = vst.msk [vmem:[%s974 + $0x139] sm:$0xff] %vm703, %v913
        %1002 = vst.msk [vmem:[%s974 + $0x141] sm:$0xff] %vm703, %v914
        %1003 = vst.msk [vmem:[%s974 + $0x151] sm:$0xff] %vm703, %v915
        %1004 = vst.msk [vmem:[%s974 + $0x159] sm:$0xff] %vm703, %v916
        %1005 = vst.msk [vmem:[%s974 + $0x169] sm:$0xff] %vm703, %v917
        %1006 = vst.msk [vmem:[%s974 + $0x171] sm:$0xff] %vm703, %v918
        %v1007 = vld [vmem:[#allocation2] sm:$0xff]
        %v1008 = vld [vmem:[#allocation2 + $0x8] sm:$0xff]
        %v1009 = vld [vmem:[#allocation2 + $0x18] sm:$0xff]
        %v1010 = vld [vmem:[#allocation2 + $0x20] sm:$0xff]
        %v1011 = vld [vmem:[#allocation2 + $0x30] sm:$0xff]
        %v1012 = vld [vmem:[#allocation2 + $0x38] sm:$0xff]
        %v1013 = vld [vmem:[#allocation2 + $0x48] sm:$0xff]
        %v1014 = vld [vmem:[#allocation2 + $0x50] sm:$0xff]
        %v1015 = vld [vmem:[#allocation2 + $0x60] sm:$0xff]
        %v1016 = vld [vmem:[#allocation2 + $0x68] sm:$0xff]
        %v1017 = vld [vmem:[#allocation2 + $0x78] sm:$0xff]
        %v1018 = vld [vmem:[#allocation2 + $0x80] sm:$0xff]
        %v1019 = vld [vmem:[#allocation2 + $0x90] sm:$0xff]
        %v1020 = vld [vmem:[#allocation2 + $0x98] sm:$0xff]
        %v1021 = vld [vmem:[#allocation2 + $0xa8] sm:$0xff]
        %v1022 = vld [vmem:[#allocation2 + $0xb0] sm:$0xff]
        %v1023 = vld [vmem:[#allocation2 + $0xc0] sm:$0xff]
        %v1024 = vld [vmem:[#allocation2 + $0xc8] sm:$0xff]
        %v1025 = vld [vmem:[#allocation2 + $0xd8] sm:$0xff]
        %v1026 = vld [vmem:[#allocation2 + $0xe0] sm:$0xff]
        %v1027 = vld [vmem:[#allocation2 + $0xf0] sm:$0xff]
        %v1028 = vld [vmem:[#allocation2 + $0xf8] sm:$0xff]
        %v1029 = vld [vmem:[#allocation2 + $0x108] sm:$0xff]
        %v1030 = vld [vmem:[#allocation2 + $0x110] sm:$0xff]
        %v1031 = vld [vmem:[#allocation2 + $0x120] sm:$0xff]
        %v1032 = vld [vmem:[#allocation2 + $0x128] sm:$0xff]
        %v1033 = vld [vmem:[#allocation2 + $0x138] sm:$0xff]
        %v1034 = vld [vmem:[#allocation2 + $0x140] sm:$0xff]
        %v1035 = vld [vmem:[#allocation2 + $0x150] sm:$0xff]
        %v1036 = vld [vmem:[#allocation2 + $0x158] sm:$0xff]
        %v1037 = vld [vmem:[#allocation2 + $0x168] sm:$0xff]
        %v1038 = vld [vmem:[#allocation2 + $0x170] sm:$0xff]
        %v1039 = vld [vmem:[%s3] sm:$0xf]
        %v1040 = vld [vmem:[#allocation2 + $0x1] sm:$0xff]
        %v1041 = vld [vmem:[#allocation2 + $0x9] sm:$0xff]
        %v1042 = vld [vmem:[#allocation2 + $0x19] sm:$0xff]
        %v1043 = vld [vmem:[#allocation2 + $0x21] sm:$0xff]
        %v1044 = vld [vmem:[#allocation2 + $0x31] sm:$0xff]
        %v1045 = vld [vmem:[#allocation2 + $0x39] sm:$0xff]
        %v1046 = vld [vmem:[#allocation2 + $0x49] sm:$0xff]
        %v1047 = vld [vmem:[#allocation2 + $0x51] sm:$0xff]
        %v1048 = vld [vmem:[#allocation2 + $0x61] sm:$0xff]
        %v1049 = vld [vmem:[#allocation2 + $0x69] sm:$0xff]
        %v1050 = vld [vmem:[#allocation2 + $0x79] sm:$0xff]
        %v1051 = vld [vmem:[#allocation2 + $0x81] sm:$0xff]
        %v1052 = vld [vmem:[#allocation2 + $0x91] sm:$0xff]
        %v1053 = vld [vmem:[#allocation2 + $0x99] sm:$0xff]
        %v1054 = vld [vmem:[#allocation2 + $0xa9] sm:$0xff]
        %v1055 = vld [vmem:[#allocation2 + $0xb1] sm:$0xff]
        %v1056 = vld [vmem:[#allocation2 + $0xc1] sm:$0xff]
        %v1057 = vld [vmem:[#allocation2 + $0xc9] sm:$0xff]
        %v1058 = vld [vmem:[#allocation2 + $0xd9] sm:$0xff]
        %v1059 = vld [vmem:[#allocation2 + $0xe1] sm:$0xff]
        %v1060 = vld [vmem:[#allocation2 + $0xf1] sm:$0xff]
        %v1061 = vld [vmem:[#allocation2 + $0xf9] sm:$0xff]
        %v1062 = vld [vmem:[#allocation2 + $0x109] sm:$0xff]
        %v1063 = vld [vmem:[#allocation2 + $0x111] sm:$0xff]
        %v1064 = vld [vmem:[#allocation2 + $0x121] sm:$0xff]
        %v1065 = vld [vmem:[#allocation2 + $0x129] sm:$0xff]
        %v1066 = vld [vmem:[#allocation2 + $0x139] sm:$0xff]
        %v1067 = vld [vmem:[#allocation2 + $0x141] sm:$0xff]
        %v1068 = vld [vmem:[#allocation2 + $0x151] sm:$0xff]
        %v1069 = vld [vmem:[#allocation2 + $0x159] sm:$0xff]
        %v1070 = vld [vmem:[#allocation2 + $0x169] sm:$0xff]
        %v1071 = vld [vmem:[#allocation2 + $0x171] sm:$0xff]
        %s1072 = scalar_lea.vmem %s3, 4
        %v1073 = vld [vmem:[%s1072] sm:$0xf]
        %v1075 = vsel %vm703, %v1040, 0
        %v1078 = vsel %vm703, %v1041, 0
        %v1081 = vsel %vm703, %v1042, 0
        %v1084 = vsel %vm703, %v1043, 0
        %v1087 = vsel %vm703, %v1044, 0
        %v1090 = vsel %vm703, %v1045, 0
        %v1093 = vsel %vm703, %v1046, 0
        %v1096 = vsel %vm703, %v1047, 0
        %v1099 = vsel %vm703, %v1048, 0
        %v1102 = vsel %vm703, %v1049, 0
        %v1105 = vsel %vm703, %v1050, 0
        %v1108 = vsel %vm703, %v1051, 0
        %v1111 = vsel %vm703, %v1052, 0
        %v1114 = vsel %vm703, %v1053, 0
        %v1117 = vsel %vm703, %v1054, 0
        %v1120 = vsel %vm703, %v1055, 0
        %v1123 = vsel %vm703, %v1056, 0
        %v1126 = vsel %vm703, %v1057, 0
        %v1129 = vsel %vm703, %v1058, 0
        %v1132 = vsel %vm703, %v1059, 0
        %v1135 = vsel %vm703, %v1060, 0
        %v1138 = vsel %vm703, %v1061, 0
        %v1141 = vsel %vm703, %v1062, 0
        %v1144 = vsel %vm703, %v1063, 0
        %v1147 = vsel %vm703, %v1064, 0
        %v1150 = vsel %vm703, %v1065, 0
        %v1153 = vsel %vm703, %v1066, 0
        %v1156 = vsel %vm703, %v1067, 0
        %v1159 = vsel %vm703, %v1068, 0
        %v1162 = vsel %vm703, %v1069, 0
        %v1165 = vsel %vm703, %v1070, 0
        %v1168 = vsel %vm703, %v1071, 0
        %vm1170 = vcmask 1043456
        %v1172 = vsel %vm1170, %v1073, 0
        %1174 = vmatprep.subr.mxu0 0.0
        %1175 = vmatpush1.msra.mxu0 %v1172
        %1176 = vmatprep.subr.mxu0 0.0
        %1177 = vmatpush1.msra.mxu0 0.0
        %1178 = vmatprep.subr.mxu0 0.0
        %1179 = vmatpush1.msra.mxu0 0.0
        %1180 = vmatprep.subr.mxu0 0.0
        %1181 = vmatpush1.msra.mxu0 0.0
        %1182 = vmatprep.subr.mxu0 0.0
        %1183 = vmatpush1.msra.mxu0 0.0
        %1184 = vmatprep.subr.mxu0 0.0
        %1185 = vmatpush1.msra.mxu0 0.0
        %1186 = vmatprep.subr.mxu0 0.0
        %1187 = vmatpush1.msra.mxu0 0.0
        %1188 = vmatprep.subr.mxu0 0.0
        %1189 = vmatpush1.msra.mxu0 0.0
        %1190 = vmatprep.subr.mxu0 0.0
        %1191 = vmatpush1.msra.mxu0 0.0
        %1192 = vmatprep.subr.mxu0 0.0
        %1193 = vmatpush1.msra.mxu0 0.0
        %1194 = vmatprep.subr.mxu0 0.0
        %1195 = vmatpush1.msra.mxu0 0.0
        %1196 = vmatprep.subr.mxu0 0.0
        %1197 = vmatpush1.msra.mxu0 0.0
        %1198 = vmatprep.subr.mxu0 0.0
        %1199 = vmatpush1.msra.mxu0 0.0
        %1200 = vmatprep.subr.mxu0 0.0
        %1201 = vmatpush1.msra.mxu0 0.0
        %1202 = vmatprep.subr.mxu0 0.0
        %1203 = vmatpush1.msra.mxu0 0.0
        %1204 = vmatprep.subr.mxu0 0.0
        %1205 = vmatpush1.msra.mxu0 0.0
        %1206 = vmatprep.subr.mxu0 0.0
        %1207 = vmatpush1.msra.mxu0 0.0
        %1208 = vmatprep.subr.mxu0 0.0
        %1209 = vmatpush1.msra.mxu0 0.0
        %1210 = vmatprep.subr.mxu0 0.0
        %1211 = vmatpush1.msra.mxu0 0.0
        %1212 = vmatprep.subr.mxu0 0.0
        %1213 = vmatpush1.msra.mxu0 0.0
        %1214 = vmatprep.subr.mxu0 0.0
        %1215 = vmatpush1.msra.mxu0 0.0
        %1216 = vmatprep.subr.mxu0 0.0
        %1217 = vmatpush1.msra.mxu0 0.0
        %1218 = vmatprep.subr.mxu0 0.0
        %1219 = vmatpush1.msra.mxu0 0.0
        %1220 = vmatprep.subr.mxu0 0.0
        %1221 = vmatpush1.msra.mxu0 0.0
        %1222 = vmatprep.subr.mxu0 0.0
        %1223 = vmatpush1.msra.mxu0 0.0
        %1224 = vmatprep.subr.mxu0 0.0
        %1225 = vmatpush1.msra.mxu0 0.0
        %1226 = vmatprep.subr.mxu0 0.0
        %1227 = vmatpush1.msra.mxu0 0.0
        %1228 = vmatprep.subr.mxu0 0.0
        %1229 = vmatpush1.msra.mxu0 0.0
        %1230 = vmatprep.subr.mxu0 0.0
        %1231 = vmatpush1.msra.mxu0 0.0
        %1232 = vmatprep.subr.mxu0 0.0
        %1233 = vmatpush1.msra.mxu0 0.0
        %1234 = vmatprep.subr.mxu0 0.0
        %1235 = vmatpush1.msra.mxu0 0.0
        %1236 = vmatprep.subr.mxu0 0.0
        %1237 = vmatpush1.msra.mxu0 0.0
        %1238 = vmatprep.mubr.f32.mxu0 0.0
        %1239 = vmatmul.mubr.f32.gmra.mrb[0].mxu0 %v1075
        %v1240 = vpop.f32.mrb[0].mxu0
        %v1241 = vadd.f32 0.0, %v1240
        %v1242 = vpop.f32.mrb[0].mxu0
        %1243 = vmatprep.mubr.f32.mxu0 0.0
        %1244 = vmatmul.mubr.f32.gmra.mrb[0].mxu0 %v1078
        %v1245 = vpop.f32.mrb[0].mxu0
        %v1246 = vadd.f32 0.0, %v1245
        %v1247 = vpop.f32.mrb[0].mxu0
        %1248 = vmatprep.mubr.f32.mxu0 0.0
        %1249 = vmatmul.mubr.f32.gmra.mrb[0].mxu0 %v1081
        %v1250 = vpop.f32.mrb[0].mxu0
        %v1251 = vadd.f32 0.0, %v1250
        %v1252 = vpop.f32.mrb[0].mxu0
        %1253 = vmatprep.mubr.f32.mxu0 0.0
        %1254 = vmatmul.mubr.f32.gmra.mrb[0].mxu0 %v1084
        %v1255 = vpop.f32.mrb[0].mxu0
        %v1256 = vadd.f32 0.0, %v1255
        %v1257 = vpop.f32.mrb[0].mxu0
        %1258 = vmatprep.mubr.f32.mxu0 0.0
        %1259 = vmatmul.mubr.f32.gmra.mrb[0].mxu0 %v1087
        %v1260 = vpop.f32.mrb[0].mxu0
        %v1261 = vadd.f32 0.0, %v1260
        %v1262 = vpop.f32.mrb[0].mxu0
        %1263 = vmatprep.mubr.f32.mxu0 0.0
        %1264 = vmatmul.mubr.f32.gmra.mrb[0].mxu0 %v1090
        %v1265 = vpop.f32.mrb[0].mxu0
        %v1266 = vadd.f32 0.0, %v1265
        %v1267 = vpop.f32.mrb[0].mxu0
        %1268 = vmatprep.mubr.f32.mxu0 0.0
        %1269 = vmatmul.mubr.f32.gmra.mrb[0].mxu0 %v1093
        %v1270 = vpop.f32.mrb[0].mxu0
        %v1271 = vadd.f32 0.0, %v1270
        %v1272 = vpop.f32.mrb[0].mxu0
        %1273 = vmatprep.mubr.f32.mxu0 0.0
        %1274 = vmatmul.mubr.f32.gmra.mrb[0].mxu0 %v1096
        %v1275 = vpop.f32.mrb[0].mxu0
        %v1276 = vadd.f32 0.0, %v1275
        %v1277 = vpop.f32.mrb[0].mxu0
        %1278 = vmatprep.mubr.f32.mxu0 0.0
        %1279 = vmatmul.mubr.f32.gmra.mrb[0].mxu0 %v1099
        %v1280 = vpop.f32.mrb[0].mxu0
        %v1281 = vadd.f32 0.0, %v1280
        %v1282 = vpop.f32.mrb[0].mxu0
        %1283 = vmatprep.mubr.f32.mxu0 0.0
        %1284 = vmatmul.mubr.f32.gmra.mrb[0].mxu0 %v1102
        %v1285 = vpop.f32.mrb[0].mxu0
        %v1286 = vadd.f32 0.0, %v1285
        %v1287 = vpop.f32.mrb[0].mxu0
        %1288 = vmatprep.mubr.f32.mxu0 0.0
        %1289 = vmatmul.mubr.f32.gmra.mrb[0].mxu0 %v1105
        %v1290 = vpop.f32.mrb[0].mxu0
        %v1291 = vadd.f32 0.0, %v1290
        %v1292 = vpop.f32.mrb[0].mxu0
        %1293 = vmatprep.mubr.f32.mxu0 0.0
        %1294 = vmatmul.mubr.f32.gmra.mrb[0].mxu0 %v1108
        %v1295 = vpop.f32.mrb[0].mxu0
        %v1296 = vadd.f32 0.0, %v1295
        %v1297 = vpop.f32.mrb[0].mxu0
        %1298 = vmatprep.mubr.f32.mxu0 0.0
        %1299 = vmatmul.mubr.f32.gmra.mrb[0].mxu0 %v1111
        %v1300 = vpop.f32.mrb[0].mxu0
        %v1301 = vadd.f32 0.0, %v1300
        %v1302 = vpop.f32.mrb[0].mxu0
        %1303 = vmatprep.mubr.f32.mxu0 0.0
        %1304 = vmatmul.mubr.f32.gmra.mrb[0].mxu0 %v1114
        %v1305 = vpop.f32.mrb[0].mxu0
        %v1306 = vadd.f32 0.0, %v1305
        %v1307 = vpop.f32.mrb[0].mxu0
        %1308 = vmatprep.mubr.f32.mxu0 0.0
        %1309 = vmatmul.mubr.f32.gmra.mrb[0].mxu0 %v1117
        %v1310 = vpop.f32.mrb[0].mxu0
        %v1311 = vadd.f32 0.0, %v1310
        %v1312 = vpop.f32.mrb[0].mxu0
        %1313 = vmatprep.mubr.f32.mxu0 0.0
        %1314 = vmatmul.mubr.f32.gmra.mrb[0].mxu0 %v1120
        %v1315 = vpop.f32.mrb[0].mxu0
        %v1316 = vadd.f32 0.0, %v1315
        %v1317 = vpop.f32.mrb[0].mxu0
        %1318 = vmatprep.mubr.f32.mxu0 0.0
        %1319 = vmatmul.mubr.f32.gmra.mrb[0].mxu0 %v1123
        %v1320 = vpop.f32.mrb[0].mxu0
        %v1321 = vadd.f32 0.0, %v1320
        %v1322 = vpop.f32.mrb[0].mxu0
        %1323 = vmatprep.mubr.f32.mxu0 0.0
        %1324 = vmatmul.mubr.f32.gmra.mrb[0].mxu0 %v1126
        %v1325 = vpop.f32.mrb[0].mxu0
        %v1326 = vadd.f32 0.0, %v1325
        %v1327 = vpop.f32.mrb[0].mxu0
        %1328 = vmatprep.mubr.f32.mxu0 0.0
        %1329 = vmatmul.mubr.f32.gmra.mrb[0].mxu0 %v1129
        %v1330 = vpop.f32.mrb[0].mxu0
        %v1331 = vadd.f32 0.0, %v1330
        %v1332 = vpop.f32.mrb[0].mxu0
        %1333 = vmatprep.mubr.f32.mxu0 0.0
        %1334 = vmatmul.mubr.f32.gmra.mrb[0].mxu0 %v1132
        %v1335 = vpop.f32.mrb[0].mxu0
        %v1336 = vadd.f32 0.0, %v1335
        %v1337 = vpop.f32.mrb[0].mxu0
        %1338 = vmatprep.mubr.f32.mxu0 0.0
        %1339 = vmatmul.mubr.f32.gmra.mrb[0].mxu0 %v1135
        %v1340 = vpop.f32.mrb[0].mxu0
        %v1341 = vadd.f32 0.0, %v1340
        %v1342 = vpop.f32.mrb[0].mxu0
        %1343 = vmatprep.mubr.f32.mxu0 0.0
        %1344 = vmatmul.mubr.f32.gmra.mrb[0].mxu0 %v1138
        %v1345 = vpop.f32.mrb[0].mxu0
        %v1346 = vadd.f32 0.0, %v1345
        %v1347 = vpop.f32.mrb[0].mxu0
        %1348 = vmatprep.mubr.f32.mxu0 0.0
        %1349 = vmatmul.mubr.f32.gmra.mrb[0].mxu0 %v1141
        %v1350 = vpop.f32.mrb[0].mxu0
        %v1351 = vadd.f32 0.0, %v1350
        %v1352 = vpop.f32.mrb[0].mxu0
        %1353 = vmatprep.mubr.f32.mxu0 0.0
        %1354 = vmatmul.mubr.f32.gmra.mrb[0].mxu0 %v1144
        %v1355 = vpop.f32.mrb[0].mxu0
        %v1356 = vadd.f32 0.0, %v1355
        %v1357 = vpop.f32.mrb[0].mxu0
        %1358 = vmatprep.mubr.f32.mxu0 0.0
        %1359 = vmatmul.mubr.f32.gmra.mrb[0].mxu0 %v1147
        %v1360 = vpop.f32.mrb[0].mxu0
        %v1361 = vadd.f32 0.0, %v1360
        %v1362 = vpop.f32.mrb[0].mxu0
        %1363 = vmatprep.mubr.f32.mxu0 0.0
        %1364 = vmatmul.mubr.f32.gmra.mrb[0].mxu0 %v1150
        %v1365 = vpop.f32.mrb[0].mxu0
        %v1366 = vadd.f32 0.0, %v1365
        %v1367 = vpop.f32.mrb[0].mxu0
        %1368 = vmatprep.mubr.f32.mxu0 0.0
        %1369 = vmatmul.mubr.f32.gmra.mrb[0].mxu0 %v1153
        %v1370 = vpop.f32.mrb[0].mxu0
        %v1371 = vadd.f32 0.0, %v1370
        %v1372 = vpop.f32.mrb[0].mxu0
        %1373 = vmatprep.mubr.f32.mxu0 0.0
        %1374 = vmatmul.mubr.f32.gmra.mrb[0].mxu0 %v1156
        %v1375 = vpop.f32.mrb[0].mxu0
        %v1376 = vadd.f32 0.0, %v1375
        %v1377 = vpop.f32.mrb[0].mxu0
        %1378 = vmatprep.mubr.f32.mxu0 0.0
        %1379 = vmatmul.mubr.f32.gmra.mrb[0].mxu0 %v1159
        %v1380 = vpop.f32.mrb[0].mxu0
        %v1381 = vadd.f32 0.0, %v1380
        %v1382 = vpop.f32.mrb[0].mxu0
        %1383 = vmatprep.mubr.f32.mxu0 0.0
        %1384 = vmatmul.mubr.f32.gmra.mrb[0].mxu0 %v1162
        %v1385 = vpop.f32.mrb[0].mxu0
        %v1386 = vadd.f32 0.0, %v1385
        %v1387 = vpop.f32.mrb[0].mxu0
        %1388 = vmatprep.mubr.f32.mxu0 0.0
        %1389 = vmatmul.mubr.f32.gmra.mrb[0].mxu0 %v1165
        %v1390 = vpop.f32.mrb[0].mxu0
        %v1391 = vadd.f32 0.0, %v1390
        %v1392 = vpop.f32.mrb[0].mxu0
        %1393 = vmatprep.mubr.f32.mxu0 0.0
        %1394 = vmatmul.mubr.f32.gmra.mrb[0].mxu0 %v1168
        %v1395 = vpop.f32.mrb[0].mxu0
        %v1396 = vadd.f32 0.0, %v1395
        %v1397 = vpop.f32.mrb[0].mxu0
        %1398 = vdwg.mxu0
        %v1400 = vsel %vm703, %v1007, 0
        %v1403 = vsel %vm703, %v1008, 0
        %v1406 = vsel %vm703, %v1009, 0
        %v1409 = vsel %vm703, %v1010, 0
        %v1412 = vsel %vm703, %v1011, 0
        %v1415 = vsel %vm703, %v1012, 0
        %v1418 = vsel %vm703, %v1013, 0
        %v1421 = vsel %vm703, %v1014, 0
        %v1424 = vsel %vm703, %v1015, 0
        %v1427 = vsel %vm703, %v1016, 0
        %v1430 = vsel %vm703, %v1017, 0
        %v1433 = vsel %vm703, %v1018, 0
        %v1436 = vsel %vm703, %v1019, 0
        %v1439 = vsel %vm703, %v1020, 0
        %v1442 = vsel %vm703, %v1021, 0
        %v1445 = vsel %vm703, %v1022, 0
        %v1448 = vsel %vm703, %v1023, 0
        %v1451 = vsel %vm703, %v1024, 0
        %v1454 = vsel %vm703, %v1025, 0
        %v1457 = vsel %vm703, %v1026, 0
        %v1460 = vsel %vm703, %v1027, 0
        %v1463 = vsel %vm703, %v1028, 0
        %v1466 = vsel %vm703, %v1029, 0
        %v1469 = vsel %vm703, %v1030, 0
        %v1472 = vsel %vm703, %v1031, 0
        %v1475 = vsel %vm703, %v1032, 0
        %v1478 = vsel %vm703, %v1033, 0
        %v1481 = vsel %vm703, %v1034, 0
        %v1484 = vsel %vm703, %v1035, 0
        %v1487 = vsel %vm703, %v1036, 0
        %v1490 = vsel %vm703, %v1037, 0
        %v1493 = vsel %vm703, %v1038, 0
        %v1496 = vsel %vm1170, %v1039, 0
        %1498 = vmatprep.subr.mxu0 0.0
        %1499 = vmatpush1.msra.mxu0 %v1496
        %1500 = vmatprep.subr.mxu0 0.0
        %1501 = vmatpush1.msra.mxu0 0.0
        %1502 = vmatprep.subr.mxu0 0.0
        %1503 = vmatpush1.msra.mxu0 0.0
        %1504 = vmatprep.subr.mxu0 0.0
        %1505 = vmatpush1.msra.mxu0 0.0
        %1506 = vmatprep.subr.mxu0 0.0
        %1507 = vmatpush1.msra.mxu0 0.0
        %1508 = vmatprep.subr.mxu0 0.0
        %1509 = vmatpush1.msra.mxu0 0.0
        %1510 = vmatprep.subr.mxu0 0.0
        %1511 = vmatpush1.msra.mxu0 0.0
        %1512 = vmatprep.subr.mxu0 0.0
        %1513 = vmatpush1.msra.mxu0 0.0
        %1514 = vmatprep.subr.mxu0 0.0
        %1515 = vmatpush1.msra.mxu0 0.0
        %1516 = vmatprep.subr.mxu0 0.0
        %1517 = vmatpush1.msra.mxu0 0.0
        %1518 = vmatprep.subr.mxu0 0.0
        %1519 = vmatpush1.msra.mxu0 0.0
        %1520 = vmatprep.subr.mxu0 0.0
        %1521 = vmatpush1.msra.mxu0 0.0
        %1522 = vmatprep.subr.mxu0 0.0
        %1523 = vmatpush1.msra.mxu0 0.0
        %1524 = vmatprep.subr.mxu0 0.0
        %1525 = vmatpush1.msra.mxu0 0.0
        %1526 = vmatprep.subr.mxu0 0.0
        %1527 = vmatpush1.msra.mxu0 0.0
        %1528 = vmatprep.subr.mxu0 0.0
        %1529 = vmatpush1.msra.mxu0 0.0
        %1530 = vmatprep.subr.mxu0 0.0
        %1531 = vmatpush1.msra.mxu0 0.0
        %1532 = vmatprep.subr.mxu0 0.0
        %1533 = vmatpush1.msra.mxu0 0.0
        %1534 = vmatprep.subr.mxu0 0.0
        %1535 = vmatpush1.msra.mxu0 0.0
        %1536 = vmatprep.subr.mxu0 0.0
        %1537 = vmatpush1.msra.mxu0 0.0
        %1538 = vmatprep.subr.mxu0 0.0
        %1539 = vmatpush1.msra.mxu0 0.0
        %1540 = vmatprep.subr.mxu0 0.0
        %1541 = vmatpush1.msra.mxu0 0.0
        %1542 = vmatprep.subr.mxu0 0.0
        %1543 = vmatpush1.msra.mxu0 0.0
        %1544 = vmatprep.subr.mxu0 0.0
        %1545 = vmatpush1.msra.mxu0 0.0
        %1546 = vmatprep.subr.mxu0 0.0
        %1547 = vmatpush1.msra.mxu0 0.0
        %1548 = vmatprep.subr.mxu0 0.0
        %1549 = vmatpush1.msra.mxu0 0.0
        %1550 = vmatprep.subr.mxu0 0.0
        %1551 = vmatpush1.msra.mxu0 0.0
        %1552 = vmatprep.subr.mxu0 0.0
        %1553 = vmatpush1.msra.mxu0 0.0
        %1554 = vmatprep.subr.mxu0 0.0
        %1555 = vmatpush1.msra.mxu0 0.0
        %1556 = vmatprep.subr.mxu0 0.0
        %1557 = vmatpush1.msra.mxu0 0.0
        %1558 = vmatprep.subr.mxu0 0.0
        %1559 = vmatpush1.msra.mxu0 0.0
        %1560 = vmatprep.subr.mxu0 0.0
        %1561 = vmatpush1.msra.mxu0 0.0
        %1562 = vmatprep.mubr.f32.mxu0 0.0
        %1563 = vmatmul.mubr.f32.gmra.mrb[0].mxu0 %v1400
        %v1564 = vpop.f32.mrb[0].mxu0
        %v1565 = vadd.f32 %v1241, %v1564
        %v1566 = vpop.f32.mrb[0].mxu0
        %1567 = vmatprep.mubr.f32.mxu0 0.0
        %1568 = vmatmul.mubr.f32.gmra.mrb[0].mxu0 %v1403
        %v1569 = vpop.f32.mrb[0].mxu0
        %v1570 = vadd.f32 %v1246, %v1569
        %v1571 = vpop.f32.mrb[0].mxu0
        %1572 = vmatprep.mubr.f32.mxu0 0.0
        %1573 = vmatmul.mubr.f32.gmra.mrb[0].mxu0 %v1406
        %v1574 = vpop.f32.mrb[0].mxu0
        %v1575 = vadd.f32 %v1251, %v1574
        %v1576 = vpop.f32.mrb[0].mxu0
        %1577 = vmatprep.mubr.f32.mxu0 0.0
        %1578 = vmatmul.mubr.f32.gmra.mrb[0].mxu0 %v1409
        %v1579 = vpop.f32.mrb[0].mxu0
        %v1580 = vadd.f32 %v1256, %v1579
        %v1581 = vpop.f32.mrb[0].mxu0
        %1582 = vmatprep.mubr.f32.mxu0 0.0
        %1583 = vmatmul.mubr.f32.gmra.mrb[0].mxu0 %v1412
        %v1584 = vpop.f32.mrb[0].mxu0
        %v1585 = vadd.f32 %v1261, %v1584
        %v1586 = vpop.f32.mrb[0].mxu0
        %1587 = vmatprep.mubr.f32.mxu0 0.0
        %1588 = vmatmul.mubr.f32.gmra.mrb[0].mxu0 %v1415
        %v1589 = vpop.f32.mrb[0].mxu0
        %v1590 = vadd.f32 %v1266, %v1589
        %v1591 = vpop.f32.mrb[0].mxu0
        %1592 = vmatprep.mubr.f32.mxu0 0.0
        %1593 = vmatmul.mubr.f32.gmra.mrb[0].mxu0 %v1418
        %v1594 = vpop.f32.mrb[0].mxu0
        %v1595 = vadd.f32 %v1271, %v1594
        %v1596 = vpop.f32.mrb[0].mxu0
        %1597 = vmatprep.mubr.f32.mxu0 0.0
        %1598 = vmatmul.mubr.f32.gmra.mrb[0].mxu0 %v1421
        %v1599 = vpop.f32.mrb[0].mxu0
        %v1600 = vadd.f32 %v1276, %v1599
        %v1601 = vpop.f32.mrb[0].mxu0
        %1602 = vmatprep.mubr.f32.mxu0 0.0
        %1603 = vmatmul.mubr.f32.gmra.mrb[0].mxu0 %v1424
        %v1604 = vpop.f32.mrb[0].mxu0
        %v1605 = vadd.f32 %v1281, %v1604
        %v1606 = vpop.f32.mrb[0].mxu0
        %1607 = vmatprep.mubr.f32.mxu0 0.0
        %1608 = vmatmul.mubr.f32.gmra.mrb[0].mxu0 %v1427
        %v1609 = vpop.f32.mrb[0].mxu0
        %v1610 = vadd.f32 %v1286, %v1609
        %v1611 = vpop.f32.mrb[0].mxu0
        %1612 = vmatprep.mubr.f32.mxu0 0.0
        %1613 = vmatmul.mubr.f32.gmra.mrb[0].mxu0 %v1430
        %v1614 = vpop.f32.mrb[0].mxu0
        %v1615 = vadd.f32 %v1291, %v1614
        %v1616 = vpop.f32.mrb[0].mxu0
        %1617 = vmatprep.mubr.f32.mxu0 0.0
        %1618 = vmatmul.mubr.f32.gmra.mrb[0].mxu0 %v1433
        %v1619 = vpop.f32.mrb[0].mxu0
        %v1620 = vadd.f32 %v1296, %v1619
        %v1621 = vpop.f32.mrb[0].mxu0
        %1622 = vmatprep.mubr.f32.mxu0 0.0
        %1623 = vmatmul.mubr.f32.gmra.mrb[0].mxu0 %v1436
        %v1624 = vpop.f32.mrb[0].mxu0
        %v1625 = vadd.f32 %v1301, %v1624
        %v1626 = vpop.f32.mrb[0].mxu0
        %1627 = vmatprep.mubr.f32.mxu0 0.0
        %1628 = vmatmul.mubr.f32.gmra.mrb[0].mxu0 %v1439
        %v1629 = vpop.f32.mrb[0].mxu0
        %v1630 = vadd.f32 %v1306, %v1629
        %v1631 = vpop.f32.mrb[0].mxu0
        %1632 = vmatprep.mubr.f32.mxu0 0.0
        %1633 = vmatmul.mubr.f32.gmra.mrb[0].mxu0 %v1442
        %v1634 = vpop.f32.mrb[0].mxu0
        %v1635 = vadd.f32 %v1311, %v1634
        %v1636 = vpop.f32.mrb[0].mxu0
        %1637 = vmatprep.mubr.f32.mxu0 0.0
        %1638 = vmatmul.mubr.f32.gmra.mrb[0].mxu0 %v1445
        %v1639 = vpop.f32.mrb[0].mxu0
        %v1640 = vadd.f32 %v1316, %v1639
        %v1641 = vpop.f32.mrb[0].mxu0
        %1642 = vmatprep.mubr.f32.mxu0 0.0
        %1643 = vmatmul.mubr.f32.gmra.mrb[0].mxu0 %v1448
        %v1644 = vpop.f32.mrb[0].mxu0
        %v1645 = vadd.f32 %v1321, %v1644
        %v1646 = vpop.f32.mrb[0].mxu0
        %1647 = vmatprep.mubr.f32.mxu0 0.0
        %1648 = vmatmul.mubr.f32.gmra.mrb[0].mxu0 %v1451
        %v1649 = vpop.f32.mrb[0].mxu0
        %v1650 = vadd.f32 %v1326, %v1649
        %v1651 = vpop.f32.mrb[0].mxu0
        %1652 = vmatprep.mubr.f32.mxu0 0.0
        %1653 = vmatmul.mubr.f32.gmra.mrb[0].mxu0 %v1454
        %v1654 = vpop.f32.mrb[0].mxu0
        %v1655 = vadd.f32 %v1331, %v1654
        %v1656 = vpop.f32.mrb[0].mxu0
        %1657 = vmatprep.mubr.f32.mxu0 0.0
        %1658 = vmatmul.mubr.f32.gmra.mrb[0].mxu0 %v1457
        %v1659 = vpop.f32.mrb[0].mxu0
        %v1660 = vadd.f32 %v1336, %v1659
        %v1661 = vpop.f32.mrb[0].mxu0
        %1662 = vmatprep.mubr.f32.mxu0 0.0
        %1663 = vmatmul.mubr.f32.gmra.mrb[0].mxu0 %v1460
        %v1664 = vpop.f32.mrb[0].mxu0
        %v1665 = vadd.f32 %v1341, %v1664
        %v1666 = vpop.f32.mrb[0].mxu0
        %1667 = vmatprep.mubr.f32.mxu0 0.0
        %1668 = vmatmul.mubr.f32.gmra.mrb[0].mxu0 %v1463
        %v1669 = vpop.f32.mrb[0].mxu0
        %v1670 = vadd.f32 %v1346, %v1669
        %v1671 = vpop.f32.mrb[0].mxu0
        %1672 = vmatprep.mubr.f32.mxu0 0.0
        %1673 = vmatmul.mubr.f32.gmra.mrb[0].mxu0 %v1466
        %v1674 = vpop.f32.mrb[0].mxu0
        %v1675 = vadd.f32 %v1351, %v1674
        %v1676 = vpop.f32.mrb[0].mxu0
        %1677 = vmatprep.mubr.f32.mxu0 0.0
        %1678 = vmatmul.mubr.f32.gmra.mrb[0].mxu0 %v1469
        %v1679 = vpop.f32.mrb[0].mxu0
        %v1680 = vadd.f32 %v1356, %v1679
        %v1681 = vpop.f32.mrb[0].mxu0
        %1682 = vmatprep.mubr.f32.mxu0 0.0
        %1683 = vmatmul.mubr.f32.gmra.mrb[0].mxu0 %v1472
        %v1684 = vpop.f32.mrb[0].mxu0
        %v1685 = vadd.f32 %v1361, %v1684
        %v1686 = vpop.f32.mrb[0].mxu0
        %1687 = vmatprep.mubr.f32.mxu0 0.0
        %1688 = vmatmul.mubr.f32.gmra.mrb[0].mxu0 %v1475
        %v1689 = vpop.f32.mrb[0].mxu0
        %v1690 = vadd.f32 %v1366, %v1689
        %v1691 = vpop.f32.mrb[0].mxu0
        %1692 = vmatprep.mubr.f32.mxu0 0.0
        %1693 = vmatmul.mubr.f32.gmra.mrb[0].mxu0 %v1478
        %v1694 = vpop.f32.mrb[0].mxu0
        %v1695 = vadd.f32 %v1371, %v1694
        %v1696 = vpop.f32.mrb[0].mxu0
        %1697 = vmatprep.mubr.f32.mxu0 0.0
        %1698 = vmatmul.mubr.f32.gmra.mrb[0].mxu0 %v1481
        %v1699 = vpop.f32.mrb[0].mxu0
        %v1700 = vadd.f32 %v1376, %v1699
        %v1701 = vpop.f32.mrb[0].mxu0
        %1702 = vmatprep.mubr.f32.mxu0 0.0
        %1703 = vmatmul.mubr.f32.gmra.mrb[0].mxu0 %v1484
        %v1704 = vpop.f32.mrb[0].mxu0
        %v1705 = vadd.f32 %v1381, %v1704
        %v1706 = vpop.f32.mrb[0].mxu0
        %1707 = vmatprep.mubr.f32.mxu0 0.0
        %1708 = vmatmul.mubr.f32.gmra.mrb[0].mxu0 %v1487
        %v1709 = vpop.f32.mrb[0].mxu0
        %v1710 = vadd.f32 %v1386, %v1709
        %v1711 = vpop.f32.mrb[0].mxu0
        %1712 = vmatprep.mubr.f32.mxu0 0.0
        %1713 = vmatmul.mubr.f32.gmra.mrb[0].mxu0 %v1490
        %v1714 = vpop.f32.mrb[0].mxu0
        %v1715 = vadd.f32 %v1391, %v1714
        %v1716 = vpop.f32.mrb[0].mxu0
        %1717 = vmatprep.mubr.f32.mxu0 0.0
        %1718 = vmatmul.mubr.f32.gmra.mrb[0].mxu0 %v1493
        %v1719 = vpop.f32.mrb[0].mxu0
        %v1720 = vadd.f32 %v1396, %v1719
        %v1721 = vpop.f32.mrb[0].mxu0
        %1722 = vdwg.mxu0
        %v1723 = vld [vmem:[#allocation2 + $0x2] sm:$0xff]
        %v1724 = vld [vmem:[#allocation2 + $0xa] sm:$0xff]
        %v1725 = vld [vmem:[#allocation2 + $0x1a] sm:$0xff]
        %v1726 = vld [vmem:[#allocation2 + $0x22] sm:$0xff]
        %v1727 = vld [vmem:[#allocation2 + $0x32] sm:$0xff]
        %v1728 = vld [vmem:[#allocation2 + $0x3a] sm:$0xff]
        %v1729 = vld [vmem:[#allocation2 + $0x4a] sm:$0xff]
        %v1730 = vld [vmem:[#allocation2 + $0x52] sm:$0xff]
        %v1731 = vld [vmem:[#allocation2 + $0x62] sm:$0xff]
        %v1732 = vld [vmem:[#allocation2 + $0x6a] sm:$0xff]
        %v1733 = vld [vmem:[#allocation2 + $0x7a] sm:$0xff]
        %v1734 = vld [vmem:[#allocation2 + $0x82] sm:$0xff]
        %v1735 = vld [vmem:[#allocation2 + $0x92] sm:$0xff]
        %v1736 = vld [vmem:[#allocation2 + $0x9a] sm:$0xff]
        %v1737 = vld [vmem:[#allocation2 + $0xaa] sm:$0xff]
        %v1738 = vld [vmem:[#allocation2 + $0xb2] sm:$0xff]
        %v1739 = vld [vmem:[#allocation2 + $0xc2] sm:$0xff]
        %v1740 = vld [vmem:[#allocation2 + $0xca] sm:$0xff]
        %v1741 = vld [vmem:[#allocation2 + $0xda] sm:$0xff]
        %v1742 = vld [vmem:[#allocation2 + $0xe2] sm:$0xff]
        %v1743 = vld [vmem:[#allocation2 + $0xf2] sm:$0xff]
        %v1744 = vld [vmem:[#allocation2 + $0xfa] sm:$0xff]
        %v1745 = vld [vmem:[#allocation2 + $0x10a] sm:$0xff]
        %v1746 = vld [vmem:[#allocation2 + $0x112] sm:$0xff]
        %v1747 = vld [vmem:[#allocation2 + $0x122] sm:$0xff]
        %v1748 = vld [vmem:[#allocation2 + $0x12a] sm:$0xff]
        %v1749 = vld [vmem:[#allocation2 + $0x13a] sm:$0xff]
        %v1750 = vld [vmem:[#allocation2 + $0x142] sm:$0xff]
        %v1751 = vld [vmem:[#allocation2 + $0x152] sm:$0xff]
        %v1752 = vld [vmem:[#allocation2 + $0x15a] sm:$0xff]
        %v1753 = vld [vmem:[#allocation2 + $0x16a] sm:$0xff]
        %v1754 = vld [vmem:[#allocation2 + $0x172] sm:$0xff]
        %s1755 = scalar_lea.vmem %s3, 8
        %v1756 = vld [vmem:[%s1755] sm:$0xf]
        %v1758 = vsel %vm703, %v1723, 0
        %v1761 = vsel %vm703, %v1724, 0
        %v1764 = vsel %vm703, %v1725, 0
        %v1767 = vsel %vm703, %v1726, 0
        %v1770 = vsel %vm703, %v1727, 0
        %v1773 = vsel %vm703, %v1728, 0
        %v1776 = vsel %vm703, %v1729, 0
        %v1779 = vsel %vm703, %v1730, 0
        %v1782 = vsel %vm703, %v1731, 0
        %v1785 = vsel %vm703, %v1732, 0
        %v1788 = vsel %vm703, %v1733, 0
        %v1791 = vsel %vm703, %v1734, 0
        %v1794 = vsel %vm703, %v1735, 0
        %v1797 = vsel %vm703, %v1736, 0
        %v1800 = vsel %vm703, %v1737, 0
        %v1803 = vsel %vm703, %v1738, 0
        %v1806 = vsel %vm703, %v1739, 0
        %v1809 = vsel %vm703, %v1740, 0
        %v1812 = vsel %vm703, %v1741, 0
        %v1815 = vsel %vm703, %v1742, 0
        %v1818 = vsel %vm703, %v1743, 0
        %v1821 = vsel %vm703, %v1744, 0
        %v1824 = vsel %vm703, %v1745, 0
        %v1827 = vsel %vm703, %v1746, 0
        %v1830 = vsel %vm703, %v1747, 0
        %v1833 = vsel %vm703, %v1748, 0
        %v1836 = vsel %vm703, %v1749, 0
        %v1839 = vsel %vm703, %v1750, 0
        %v1842 = vsel %vm703, %v1751, 0
        %v1845 = vsel %vm703, %v1752, 0
        %v1848 = vsel %vm703, %v1753, 0
        %v1851 = vsel %vm703, %v1754, 0
        %v1854 = vsel %vm1170, %v1756, 0
        %1856 = vmatprep.subr.mxu0 0.0
        %1857 = vmatpush1.msra.mxu0 %v1854
        %1858 = vmatprep.subr.mxu0 0.0
        %1859 = vmatpush1.msra.mxu0 0.0
        %1860 = vmatprep.subr.mxu0 0.0
        %1861 = vmatpush1.msra.mxu0 0.0
        %1862 = vmatprep.subr.mxu0 0.0
        %1863 = vmatpush1.msra.mxu0 0.0
        %1864 = vmatprep.subr.mxu0 0.0
        %1865 = vmatpush1.msra.mxu0 0.0
        %1866 = vmatprep.subr.mxu0 0.0
        %1867 = vmatpush1.msra.mxu0 0.0
        %1868 = vmatprep.subr.mxu0 0.0
        %1869 = vmatpush1.msra.mxu0 0.0
        %1870 = vmatprep.subr.mxu0 0.0
        %1871 = vmatpush1.msra.mxu0 0.0
        %1872 = vmatprep.subr.mxu0 0.0
        %1873 = vmatpush1.msra.mxu0 0.0
        %1874 = vmatprep.subr.mxu0 0.0
        %1875 = vmatpush1.msra.mxu0 0.0
        %1876 = vmatprep.subr.mxu0 0.0
        %1877 = vmatpush1.msra.mxu0 0.0
        %1878 = vmatprep.subr.mxu0 0.0
        %1879 = vmatpush1.msra.mxu0 0.0
        %1880 = vmatprep.subr.mxu0 0.0
        %1881 = vmatpush1.msra.mxu0 0.0
        %1882 = vmatprep.subr.mxu0 0.0
        %1883 = vmatpush1.msra.mxu0 0.0
        %1884 = vmatprep.subr.mxu0 0.0
        %1885 = vmatpush1.msra.mxu0 0.0
        %1886 = vmatprep.subr.mxu0 0.0
        %1887 = vmatpush1.msra.mxu0 0.0
        %1888 = vmatprep.subr.mxu0 0.0
        %1889 = vmatpush1.msra.mxu0 0.0
        %1890 = vmatprep.subr.mxu0 0.0
        %1891 = vmatpush1.msra.mxu0 0.0
        %1892 = vmatprep.subr.mxu0 0.0
        %1893 = vmatpush1.msra.mxu0 0.0
        %1894 = vmatprep.subr.mxu0 0.0
        %1895 = vmatpush1.msra.mxu0 0.0
        %1896 = vmatprep.subr.mxu0 0.0
        %1897 = vmatpush1.msra.mxu0 0.0
        %1898 = vmatprep.subr.mxu0 0.0
        %1899 = vmatpush1.msra.mxu0 0.0
        %1900 = vmatprep.subr.mxu0 0.0
        %1901 = vmatpush1.msra.mxu0 0.0
        %1902 = vmatprep.subr.mxu0 0.0
        %1903 = vmatpush1.msra.mxu0 0.0
        %1904 = vmatprep.subr.mxu0 0.0
        %1905 = vmatpush1.msra.mxu0 0.0
        %1906 = vmatprep.subr.mxu0 0.0
        %1907 = vmatpush1.msra.mxu0 0.0
        %1908 = vmatprep.subr.mxu0 0.0
        %1909 = vmatpush1.msra.mxu0 0.0
        %1910 = vmatprep.subr.mxu0 0.0
        %1911 = vmatpush1.msra.mxu0 0.0
        %1912 = vmatprep.subr.mxu0 0.0
        %1913 = vmatpush1.msra.mxu0 0.0
        %1914 = vmatprep.subr.mxu0 0.0
        %1915 = vmatpush1.msra.mxu0 0.0
        %1916 = vmatprep.subr.mxu0 0.0
        %1917 = vmatpush1.msra.mxu0 0.0
        %1918 = vmatprep.subr.mxu0 0.0
        %1919 = vmatpush1.msra.mxu0 0.0
        %1920 = vmatprep.mubr.f32.mxu0 0.0
        %1921 = vmatmul.mubr.f32.gmra.mrb[0].mxu0 %v1758
        %v1922 = vpop.f32.mrb[0].mxu0
        %v1923 = vadd.f32 0.0, %v1922
        %v1924 = vpop.f32.mrb[0].mxu0
        %1925 = vmatprep.mubr.f32.mxu0 0.0
        %1926 = vmatmul.mubr.f32.gmra.mrb[0].mxu0 %v1761
        %v1927 = vpop.f32.mrb[0].mxu0
        %v1928 = vadd.f32 0.0, %v1927
        %v1929 = vpop.f32.mrb[0].mxu0
        %1930 = vmatprep.mubr.f32.mxu0 0.0
        %1931 = vmatmul.mubr.f32.gmra.mrb[0].mxu0 %v1764
        %v1932 = vpop.f32.mrb[0].mxu0
        %v1933 = vadd.f32 0.0, %v1932
        %v1934 = vpop.f32.mrb[0].mxu0
        %1935 = vmatprep.mubr.f32.mxu0 0.0
        %1936 = vmatmul.mubr.f32.gmra.mrb[0].mxu0 %v1767
        %v1937 = vpop.f32.mrb[0].mxu0
        %v1938 = vadd.f32 0.0, %v1937
        %v1939 = vpop.f32.mrb[0].mxu0
        %1940 = vmatprep.mubr.f32.mxu0 0.0
        %1941 = vmatmul.mubr.f32.gmra.mrb[0].mxu0 %v1770
        %v1942 = vpop.f32.mrb[0].mxu0
        %v1943 = vadd.f32 0.0, %v1942
        %v1944 = vpop.f32.mrb[0].mxu0
        %1945 = vmatprep.mubr.f32.mxu0 0.0
        %1946 = vmatmul.mubr.f32.gmra.mrb[0].mxu0 %v1773
        %v1947 = vpop.f32.mrb[0].mxu0
        %v1948 = vadd.f32 0.0, %v1947
        %v1949 = vpop.f32.mrb[0].mxu0
        %1950 = vmatprep.mubr.f32.mxu0 0.0
        %1951 = vmatmul.mubr.f32.gmra.mrb[0].mxu0 %v1776
        %v1952 = vpop.f32.mrb[0].mxu0
        %v1953 = vadd.f32 0.0, %v1952
        %v1954 = vpop.f32.mrb[0].mxu0
        %1955 = vmatprep.mubr.f32.mxu0 0.0
        %1956 = vmatmul.mubr.f32.gmra.mrb[0].mxu0 %v1779
        %v1957 = vpop.f32.mrb[0].mxu0
        %v1958 = vadd.f32 0.0, %v1957
        %v1959 = vpop.f32.mrb[0].mxu0
        %1960 = vmatprep.mubr.f32.mxu0 0.0
        %1961 = vmatmul.mubr.f32.gmra.mrb[0].mxu0 %v1782
        %v1962 = vpop.f32.mrb[0].mxu0
        %v1963 = vadd.f32 0.0, %v1962
        %v1964 = vpop.f32.mrb[0].mxu0
        %1965 = vmatprep.mubr.f32.mxu0 0.0
        %1966 = vmatmul.mubr.f32.gmra.mrb[0].mxu0 %v1785
        %v1967 = vpop.f32.mrb[0].mxu0
        %v1968 = vadd.f32 0.0, %v1967
        %v1969 = vpop.f32.mrb[0].mxu0
        %1970 = vmatprep.mubr.f32.mxu0 0.0
        %1971 = vmatmul.mubr.f32.gmra.mrb[0].mxu0 %v1788
        %v1972 = vpop.f32.mrb[0].mxu0
        %v1973 = vadd.f32 0.0, %v1972
        %v1974 = vpop.f32.mrb[0].mxu0
        %1975 = vmatprep.mubr.f32.mxu0 0.0
        %1976 = vmatmul.mubr.f32.gmra.mrb[0].mxu0 %v1791
        %v1977 = vpop.f32.mrb[0].mxu0
        %v1978 = vadd.f32 0.0, %v1977
        %v1979 = vpop.f32.mrb[0].mxu0
        %1980 = vmatprep.mubr.f32.mxu0 0.0
        %1981 = vmatmul.mubr.f32.gmra.mrb[0].mxu0 %v1794
        %v1982 = vpop.f32.mrb[0].mxu0
        %v1983 = vadd.f32 0.0, %v1982
        %v1984 = vpop.f32.mrb[0].mxu0
        %1985 = vmatprep.mubr.f32.mxu0 0.0
        %1986 = vmatmul.mubr.f32.gmra.mrb[0].mxu0 %v1797
        %v1987 = vpop.f32.mrb[0].mxu0
        %v1988 = vadd.f32 0.0, %v1987
        %v1989 = vpop.f32.mrb[0].mxu0
        %1990 = vmatprep.mubr.f32.mxu0 0.0
        %1991 = vmatmul.mubr.f32.gmra.mrb[0].mxu0 %v1800
        %v1992 = vpop.f32.mrb[0].mxu0
        %v1993 = vadd.f32 0.0, %v1992
        %v1994 = vpop.f32.mrb[0].mxu0
        %1995 = vmatprep.mubr.f32.mxu0 0.0
        %1996 = vmatmul.mubr.f32.gmra.mrb[0].mxu0 %v1803
        %v1997 = vpop.f32.mrb[0].mxu0
        %v1998 = vadd.f32 0.0, %v1997
        %v1999 = vpop.f32.mrb[0].mxu0
        %2000 = vmatprep.mubr.f32.mxu0 0.0
        %2001 = vmatmul.mubr.f32.gmra.mrb[0].mxu0 %v1806
        %v2002 = vpop.f32.mrb[0].mxu0
        %v2003 = vadd.f32 0.0, %v2002
        %v2004 = vpop.f32.mrb[0].mxu0
        %2005 = vmatprep.mubr.f32.mxu0 0.0
        %2006 = vmatmul.mubr.f32.gmra.mrb[0].mxu0 %v1809
        %v2007 = vpop.f32.mrb[0].mxu0
        %v2008 = vadd.f32 0.0, %v2007
        %v2009 = vpop.f32.mrb[0].mxu0
        %2010 = vmatprep.mubr.f32.mxu0 0.0
        %2011 = vmatmul.mubr.f32.gmra.mrb[0].mxu0 %v1812
        %v2012 = vpop.f32.mrb[0].mxu0
        %v2013 = vadd.f32 0.0, %v2012
        %v2014 = vpop.f32.mrb[0].mxu0
        %2015 = vmatprep.mubr.f32.mxu0 0.0
        %2016 = vmatmul.mubr.f32.gmra.mrb[0].mxu0 %v1815
        %v2017 = vpop.f32.mrb[0].mxu0
        %v2018 = vadd.f32 0.0, %v2017
        %v2019 = vpop.f32.mrb[0].mxu0
        %2020 = vmatprep.mubr.f32.mxu0 0.0
        %2021 = vmatmul.mubr.f32.gmra.mrb[0].mxu0 %v1818
        %v2022 = vpop.f32.mrb[0].mxu0
        %v2023 = vadd.f32 0.0, %v2022
        %v2024 = vpop.f32.mrb[0].mxu0
        %2025 = vmatprep.mubr.f32.mxu0 0.0
        %2026 = vmatmul.mubr.f32.gmra.mrb[0].mxu0 %v1821
        %v2027 = vpop.f32.mrb[0].mxu0
        %v2028 = vadd.f32 0.0, %v2027
        %v2029 = vpop.f32.mrb[0].mxu0
        %2030 = vmatprep.mubr.f32.mxu0 0.0
        %2031 = vmatmul.mubr.f32.gmra.mrb[0].mxu0 %v1824
        %v2032 = vpop.f32.mrb[0].mxu0
        %v2033 = vadd.f32 0.0, %v2032
        %v2034 = vpop.f32.mrb[0].mxu0
        %2035 = vmatprep.mubr.f32.mxu0 0.0
        %2036 = vmatmul.mubr.f32.gmra.mrb[0].mxu0 %v1827
        %v2037 = vpop.f32.mrb[0].mxu0
        %v2038 = vadd.f32 0.0, %v2037
        %v2039 = vpop.f32.mrb[0].mxu0
        %2040 = vmatprep.mubr.f32.mxu0 0.0
        %2041 = vmatmul.mubr.f32.gmra.mrb[0].mxu0 %v1830
        %v2042 = vpop.f32.mrb[0].mxu0
        %v2043 = vadd.f32 0.0, %v2042
        %v2044 = vpop.f32.mrb[0].mxu0
        %2045 = vmatprep.mubr.f32.mxu0 0.0
        %2046 = vmatmul.mubr.f32.gmra.mrb[0].mxu0 %v1833
        %v2047 = vpop.f32.mrb[0].mxu0
        %v2048 = vadd.f32 0.0, %v2047
        %v2049 = vpop.f32.mrb[0].mxu0
        %2050 = vmatprep.mubr.f32.mxu0 0.0
        %2051 = vmatmul.mubr.f32.gmra.mrb[0].mxu0 %v1836
        %v2052 = vpop.f32.mrb[0].mxu0
        %v2053 = vadd.f32 0.0, %v2052
        %v2054 = vpop.f32.mrb[0].mxu0
        %2055 = vmatprep.mubr.f32.mxu0 0.0
        %2056 = vmatmul.mubr.f32.gmra.mrb[0].mxu0 %v1839
        %v2057 = vpop.f32.mrb[0].mxu0
        %v2058 = vadd.f32 0.0, %v2057
        %v2059 = vpop.f32.mrb[0].mxu0
        %2060 = vmatprep.mubr.f32.mxu0 0.0
        %2061 = vmatmul.mubr.f32.gmra.mrb[0].mxu0 %v1842
        %v2062 = vpop.f32.mrb[0].mxu0
        %v2063 = vadd.f32 0.0, %v2062
        %v2064 = vpop.f32.mrb[0].mxu0
        %2065 = vmatprep.mubr.f32.mxu0 0.0
        %2066 = vmatmul.mubr.f32.gmra.mrb[0].mxu0 %v1845
        %v2067 = vpop.f32.mrb[0].mxu0
        %v2068 = vadd.f32 0.0, %v2067
        %v2069 = vpop.f32.mrb[0].mxu0
        %2070 = vmatprep.mubr.f32.mxu0 0.0
        %2071 = vmatmul.mubr.f32.gmra.mrb[0].mxu0 %v1848
        %v2072 = vpop.f32.mrb[0].mxu0
        %v2073 = vadd.f32 0.0, %v2072
        %v2074 = vpop.f32.mrb[0].mxu0
        %2075 = vmatprep.mubr.f32.mxu0 0.0
        %2076 = vmatmul.mubr.f32.gmra.mrb[0].mxu0 %v1851
        %v2077 = vpop.f32.mrb[0].mxu0
        %v2078 = vadd.f32 0.0, %v2077
        %v2079 = vpop.f32.mrb[0].mxu0
        %2080 = vdwg.mxu0
        %v2081 = vadd.f32 %v1565, %v1923
        %v2082 = vadd.f32 %v1570, %v1928
        %v2083 = vadd.f32 %v1575, %v1933
        %v2084 = vadd.f32 %v1580, %v1938
        %v2085 = vadd.f32 %v1585, %v1943
        %v2086 = vadd.f32 %v1590, %v1948
        %v2087 = vadd.f32 %v1595, %v1953
        %v2088 = vadd.f32 %v1600, %v1958
        %v2089 = vadd.f32 %v1605, %v1963
        %v2090 = vadd.f32 %v1610, %v1968
        %v2091 = vadd.f32 %v1615, %v1973
        %v2092 = vadd.f32 %v1620, %v1978
        %v2093 = vadd.f32 %v1625, %v1983
        %v2094 = vadd.f32 %v1630, %v1988
        %v2095 = vadd.f32 %v1635, %v1993
        %v2096 = vadd.f32 %v1640, %v1998
        %v2097 = vadd.f32 %v1645, %v2003
        %v2098 = vadd.f32 %v1650, %v2008
        %v2099 = vadd.f32 %v1655, %v2013
        %v2100 = vadd.f32 %v1660, %v2018
        %v2101 = vadd.f32 %v1665, %v2023
        %v2102 = vadd.f32 %v1670, %v2028
        %v2103 = vadd.f32 %v1675, %v2033
        %v2104 = vadd.f32 %v1680, %v2038
        %v2105 = vadd.f32 %v1685, %v2043
        %v2106 = vadd.f32 %v1690, %v2048
        %v2107 = vadd.f32 %v1695, %v2053
        %v2108 = vadd.f32 %v1700, %v2058
        %v2109 = vadd.f32 %v1705, %v2063
        %v2110 = vadd.f32 %v1710, %v2068
        %v2111 = vadd.f32 %v1715, %v2073
        %v2112 = vadd.f32 %v1720, %v2078
        %v2113 = vld [vmem:[%s974] sm:$0xff]
        %v2114 = vld [vmem:[%s974 + $0x8] sm:$0xff]
        %v2115 = vld [vmem:[%s974 + $0x18] sm:$0xff]
        %v2116 = vld [vmem:[%s974 + $0x20] sm:$0xff]
        %v2117 = vld [vmem:[%s974 + $0x30] sm:$0xff]
        %v2118 = vld [vmem:[%s974 + $0x38] sm:$0xff]
        %v2119 = vld [vmem:[%s974 + $0x48] sm:$0xff]
        %v2120 = vld [vmem:[%s974 + $0x50] sm:$0xff]
        %v2121 = vld [vmem:[%s974 + $0x60] sm:$0xff]
        %v2122 = vld [vmem:[%s974 + $0x68] sm:$0xff]
        %v2123 = vld [vmem:[%s974 + $0x78] sm:$0xff]
        %v2124 = vld [vmem:[%s974 + $0x80] sm:$0xff]
        %v2125 = vld [vmem:[%s974 + $0x90] sm:$0xff]
        %v2126 = vld [vmem:[%s974 + $0x98] sm:$0xff]
        %v2127 = vld [vmem:[%s974 + $0xa8] sm:$0xff]
        %v2128 = vld [vmem:[%s974 + $0xb0] sm:$0xff]
        %v2129 = vld [vmem:[%s974 + $0xc0] sm:$0xff]
        %v2130 = vld [vmem:[%s974 + $0xc8] sm:$0xff]
        %v2131 = vld [vmem:[%s974 + $0xd8] sm:$0xff]
        %v2132 = vld [vmem:[%s974 + $0xe0] sm:$0xff]
        %v2133 = vld [vmem:[%s974 + $0xf0] sm:$0xff]
        %v2134 = vld [vmem:[%s974 + $0xf8] sm:$0xff]
        %v2135 = vld [vmem:[%s974 + $0x108] sm:$0xff]
        %v2136 = vld [vmem:[%s974 + $0x110] sm:$0xff]
        %v2137 = vld [vmem:[%s974 + $0x120] sm:$0xff]
        %v2138 = vld [vmem:[%s974 + $0x128] sm:$0xff]
        %v2139 = vld [vmem:[%s974 + $0x138] sm:$0xff]
        %v2140 = vld [vmem:[%s974 + $0x140] sm:$0xff]
        %v2141 = vld [vmem:[%s974 + $0x150] sm:$0xff]
        %v2142 = vld [vmem:[%s974 + $0x158] sm:$0xff]
        %v2143 = vld [vmem:[%s974 + $0x168] sm:$0xff]
        %v2144 = vld [vmem:[%s974 + $0x170] sm:$0xff]
        %s2145 = scalar_lea.vmem %s3, 12
        %v2146 = vld [vmem:[%s2145] sm:$0xf]
        %v2148 = vsel %vm703, %v2113, 0
        %v2151 = vsel %vm703, %v2114, 0
        %v2154 = vsel %vm703, %v2115, 0
        %v2157 = vsel %vm703, %v2116, 0
        %v2160 = vsel %vm703, %v2117, 0
        %v2163 = vsel %vm703, %v2118, 0
        %v2166 = vsel %vm703, %v2119, 0
        %v2169 = vsel %vm703, %v2120, 0
        %v2172 = vsel %vm703, %v2121, 0
        %v2175 = vsel %vm703, %v2122, 0
        %v2178 = vsel %vm703, %v2123, 0
        %v2181 = vsel %vm703, %v2124, 0
        %v2184 = vsel %vm703, %v2125, 0
        %v2187 = vsel %vm703, %v2126, 0
        %v2190 = vsel %vm703, %v2127, 0
        %v2193 = vsel %vm703, %v2128, 0
        %v2196 = vsel %vm703, %v2129, 0
        %v2199 = vsel %vm703, %v2130, 0
        %v2202 = vsel %vm703, %v2131, 0
        %v2205 = vsel %vm703, %v2132, 0
        %v2208 = vsel %vm703, %v2133, 0
        %v2211 = vsel %vm703, %v2134, 0
        %v2214 = vsel %vm703, %v2135, 0
        %v2217 = vsel %vm703, %v2136, 0
        %v2220 = vsel %vm703, %v2137, 0
        %v2223 = vsel %vm703, %v2138, 0
        %v2226 = vsel %vm703, %v2139, 0
        %v2229 = vsel %vm703, %v2140, 0
        %v2232 = vsel %vm703, %v2141, 0
        %v2235 = vsel %vm703, %v2142, 0
        %v2238 = vsel %vm703, %v2143, 0
        %v2241 = vsel %vm703, %v2144, 0
        %v2244 = vsel %vm1170, %v2146, 0
        %2246 = vmatprep.subr.mxu0 0.0
        %2247 = vmatpush1.msra.mxu0 %v2244
        %2248 = vmatprep.subr.mxu0 0.0
        %2249 = vmatpush1.msra.mxu0 0.0
        %2250 = vmatprep.subr.mxu0 0.0
        %2251 = vmatpush1.msra.mxu0 0.0
        %2252 = vmatprep.subr.mxu0 0.0
        %2253 = vmatpush1.msra.mxu0 0.0
        %2254 = vmatprep.subr.mxu0 0.0
        %2255 = vmatpush1.msra.mxu0 0.0
        %2256 = vmatprep.subr.mxu0 0.0
        %2257 = vmatpush1.msra.mxu0 0.0
        %2258 = vmatprep.subr.mxu0 0.0
        %2259 = vmatpush1.msra.mxu0 0.0
        %2260 = vmatprep.subr.mxu0 0.0
        %2261 = vmatpush1.msra.mxu0 0.0
        %2262 = vmatprep.subr.mxu0 0.0
        %2263 = vmatpush1.msra.mxu0 0.0
        %2264 = vmatprep.subr.mxu0 0.0
        %2265 = vmatpush1.msra.mxu0 0.0
        %2266 = vmatprep.subr.mxu0 0.0
        %2267 = vmatpush1.msra.mxu0 0.0
        %2268 = vmatprep.subr.mxu0 0.0
        %2269 = vmatpush1.msra.mxu0 0.0
        %2270 = vmatprep.subr.mxu0 0.0
        %2271 = vmatpush1.msra.mxu0 0.0
        %2272 = vmatprep.subr.mxu0 0.0
        %2273 = vmatpush1.msra.mxu0 0.0
        %2274 = vmatprep.subr.mxu0 0.0
        %2275 = vmatpush1.msra.mxu0 0.0
        %2276 = vmatprep.subr.mxu0 0.0
        %2277 = vmatpush1.msra.mxu0 0.0
        %2278 = vmatprep.subr.mxu0 0.0
        %2279 = vmatpush1.msra.mxu0 0.0
        %2280 = vmatprep.subr.mxu0 0.0
        %2281 = vmatpush1.msra.mxu0 0.0
        %2282 = vmatprep.subr.mxu0 0.0
        %2283 = vmatpush1.msra.mxu0 0.0
        %2284 = vmatprep.subr.mxu0 0.0
        %2285 = vmatpush1.msra.mxu0 0.0
        %2286 = vmatprep.subr.mxu0 0.0
        %2287 = vmatpush1.msra.mxu0 0.0
        %2288 = vmatprep.subr.mxu0 0.0
        %2289 = vmatpush1.msra.mxu0 0.0
        %2290 = vmatprep.subr.mxu0 0.0
        %2291 = vmatpush1.msra.mxu0 0.0
        %2292 = vmatprep.subr.mxu0 0.0
        %2293 = vmatpush1.msra.mxu0 0.0
        %2294 = vmatprep.subr.mxu0 0.0
        %2295 = vmatpush1.msra.mxu0 0.0
        %2296 = vmatprep.subr.mxu0 0.0
        %2297 = vmatpush1.msra.mxu0 0.0
        %2298 = vmatprep.subr.mxu0 0.0
        %2299 = vmatpush1.msra.mxu0 0.0
        %2300 = vmatprep.subr.mxu0 0.0
        %2301 = vmatpush1.msra.mxu0 0.0
        %2302 = vmatprep.subr.mxu0 0.0
        %2303 = vmatpush1.msra.mxu0 0.0
        %2304 = vmatprep.subr.mxu0 0.0
        %2305 = vmatpush1.msra.mxu0 0.0
        %2306 = vmatprep.subr.mxu0 0.0
        %2307 = vmatpush1.msra.mxu0 0.0
        %2308 = vmatprep.subr.mxu0 0.0
        %2309 = vmatpush1.msra.mxu0 0.0
        %2310 = vmatprep.mubr.f32.mxu0 0.0
        %2311 = vmatmul.mubr.f32.gmra.mrb[0].mxu0 %v2148
        %v2312 = vpop.f32.mrb[0].mxu0
        %v2313 = vadd.f32 0.0, %v2312
        %v2314 = vpop.f32.mrb[0].mxu0
        %2315 = vmatprep.mubr.f32.mxu0 0.0
        %2316 = vmatmul.mubr.f32.gmra.mrb[0].mxu0 %v2151
        %v2317 = vpop.f32.mrb[0].mxu0
        %v2318 = vadd.f32 0.0, %v2317
        %v2319 = vpop.f32.mrb[0].mxu0
        %2320 = vmatprep.mubr.f32.mxu0 0.0
        %2321 = vmatmul.mubr.f32.gmra.mrb[0].mxu0 %v2154
        %v2322 = vpop.f32.mrb[0].mxu0
        %v2323 = vadd.f32 0.0, %v2322
        %v2324 = vpop.f32.mrb[0].mxu0
        %2325 = vmatprep.mubr.f32.mxu0 0.0
        %2326 = vmatmul.mubr.f32.gmra.mrb[0].mxu0 %v2157
        %v2327 = vpop.f32.mrb[0].mxu0
        %v2328 = vadd.f32 0.0, %v2327
        %v2329 = vpop.f32.mrb[0].mxu0
        %2330 = vmatprep.mubr.f32.mxu0 0.0
        %2331 = vmatmul.mubr.f32.gmra.mrb[0].mxu0 %v2160
        %v2332 = vpop.f32.mrb[0].mxu0
        %v2333 = vadd.f32 0.0, %v2332
        %v2334 = vpop.f32.mrb[0].mxu0
        %2335 = vmatprep.mubr.f32.mxu0 0.0
        %2336 = vmatmul.mubr.f32.gmra.mrb[0].mxu0 %v2163
        %v2337 = vpop.f32.mrb[0].mxu0
        %v2338 = vadd.f32 0.0, %v2337
        %v2339 = vpop.f32.mrb[0].mxu0
        %2340 = vmatprep.mubr.f32.mxu0 0.0
        %2341 = vmatmul.mubr.f32.gmra.mrb[0].mxu0 %v2166
        %v2342 = vpop.f32.mrb[0].mxu0
        %v2343 = vadd.f32 0.0, %v2342
        %v2344 = vpop.f32.mrb[0].mxu0
        %2345 = vmatprep.mubr.f32.mxu0 0.0
        %2346 = vmatmul.mubr.f32.gmra.mrb[0].mxu0 %v2169
        %v2347 = vpop.f32.mrb[0].mxu0
        %v2348 = vadd.f32 0.0, %v2347
        %v2349 = vpop.f32.mrb[0].mxu0
        %2350 = vmatprep.mubr.f32.mxu0 0.0
        %2351 = vmatmul.mubr.f32.gmra.mrb[0].mxu0 %v2172
        %v2352 = vpop.f32.mrb[0].mxu0
        %v2353 = vadd.f32 0.0, %v2352
        %v2354 = vpop.f32.mrb[0].mxu0
        %2355 = vmatprep.mubr.f32.mxu0 0.0
        %2356 = vmatmul.mubr.f32.gmra.mrb[0].mxu0 %v2175
        %v2357 = vpop.f32.mrb[0].mxu0
        %v2358 = vadd.f32 0.0, %v2357
        %v2359 = vpop.f32.mrb[0].mxu0
        %2360 = vmatprep.mubr.f32.mxu0 0.0
        %2361 = vmatmul.mubr.f32.gmra.mrb[0].mxu0 %v2178
        %v2362 = vpop.f32.mrb[0].mxu0
        %v2363 = vadd.f32 0.0, %v2362
        %v2364 = vpop.f32.mrb[0].mxu0
        %2365 = vmatprep.mubr.f32.mxu0 0.0
        %2366 = vmatmul.mubr.f32.gmra.mrb[0].mxu0 %v2181
        %v2367 = vpop.f32.mrb[0].mxu0
        %v2368 = vadd.f32 0.0, %v2367
        %v2369 = vpop.f32.mrb[0].mxu0
        %2370 = vmatprep.mubr.f32.mxu0 0.0
        %2371 = vmatmul.mubr.f32.gmra.mrb[0].mxu0 %v2184
        %v2372 = vpop.f32.mrb[0].mxu0
        %v2373 = vadd.f32 0.0, %v2372
        %v2374 = vpop.f32.mrb[0].mxu0
        %2375 = vmatprep.mubr.f32.mxu0 0.0
        %2376 = vmatmul.mubr.f32.gmra.mrb[0].mxu0 %v2187
        %v2377 = vpop.f32.mrb[0].mxu0
        %v2378 = vadd.f32 0.0, %v2377
        %v2379 = vpop.f32.mrb[0].mxu0
        %2380 = vmatprep.mubr.f32.mxu0 0.0
        %2381 = vmatmul.mubr.f32.gmra.mrb[0].mxu0 %v2190
        %v2382 = vpop.f32.mrb[0].mxu0
        %v2383 = vadd.f32 0.0, %v2382
        %v2384 = vpop.f32.mrb[0].mxu0
        %2385 = vmatprep.mubr.f32.mxu0 0.0
        %2386 = vmatmul.mubr.f32.gmra.mrb[0].mxu0 %v2193
        %v2387 = vpop.f32.mrb[0].mxu0
        %v2388 = vadd.f32 0.0, %v2387
        %v2389 = vpop.f32.mrb[0].mxu0
        %2390 = vmatprep.mubr.f32.mxu0 0.0
        %2391 = vmatmul.mubr.f32.gmra.mrb[0].mxu0 %v2196
        %v2392 = vpop.f32.mrb[0].mxu0
        %v2393 = vadd.f32 0.0, %v2392
        %v2394 = vpop.f32.mrb[0].mxu0
        %2395 = vmatprep.mubr.f32.mxu0 0.0
        %2396 = vmatmul.mubr.f32.gmra.mrb[0].mxu0 %v2199
        %v2397 = vpop.f32.mrb[0].mxu0
        %v2398 = vadd.f32 0.0, %v2397
        %v2399 = vpop.f32.mrb[0].mxu0
        %2400 = vmatprep.mubr.f32.mxu0 0.0
        %2401 = vmatmul.mubr.f32.gmra.mrb[0].mxu0 %v2202
        %v2402 = vpop.f32.mrb[0].mxu0
        %v2403 = vadd.f32 0.0, %v2402
        %v2404 = vpop.f32.mrb[0].mxu0
        %2405 = vmatprep.mubr.f32.mxu0 0.0
        %2406 = vmatmul.mubr.f32.gmra.mrb[0].mxu0 %v2205
        %v2407 = vpop.f32.mrb[0].mxu0
        %v2408 = vadd.f32 0.0, %v2407
        %v2409 = vpop.f32.mrb[0].mxu0
        %2410 = vmatprep.mubr.f32.mxu0 0.0
        %2411 = vmatmul.mubr.f32.gmra.mrb[0].mxu0 %v2208
        %v2412 = vpop.f32.mrb[0].mxu0
        %v2413 = vadd.f32 0.0, %v2412
        %v2414 = vpop.f32.mrb[0].mxu0
        %2415 = vmatprep.mubr.f32.mxu0 0.0
        %2416 = vmatmul.mubr.f32.gmra.mrb[0].mxu0 %v2211
        %v2417 = vpop.f32.mrb[0].mxu0
        %v2418 = vadd.f32 0.0, %v2417
        %v2419 = vpop.f32.mrb[0].mxu0
        %2420 = vmatprep.mubr.f32.mxu0 0.0
        %2421 = vmatmul.mubr.f32.gmra.mrb[0].mxu0 %v2214
        %v2422 = vpop.f32.mrb[0].mxu0
        %v2423 = vadd.f32 0.0, %v2422
        %v2424 = vpop.f32.mrb[0].mxu0
        %2425 = vmatprep.mubr.f32.mxu0 0.0
        %2426 = vmatmul.mubr.f32.gmra.mrb[0].mxu0 %v2217
        %v2427 = vpop.f32.mrb[0].mxu0
        %v2428 = vadd.f32 0.0, %v2427
        %v2429 = vpop.f32.mrb[0].mxu0
        %2430 = vmatprep.mubr.f32.mxu0 0.0
        %2431 = vmatmul.mubr.f32.gmra.mrb[0].mxu0 %v2220
        %v2432 = vpop.f32.mrb[0].mxu0
        %v2433 = vadd.f32 0.0, %v2432
        %v2434 = vpop.f32.mrb[0].mxu0
        %2435 = vmatprep.mubr.f32.mxu0 0.0
        %2436 = vmatmul.mubr.f32.gmra.mrb[0].mxu0 %v2223
        %v2437 = vpop.f32.mrb[0].mxu0
        %v2438 = vadd.f32 0.0, %v2437
        %v2439 = vpop.f32.mrb[0].mxu0
        %2440 = vmatprep.mubr.f32.mxu0 0.0
        %2441 = vmatmul.mubr.f32.gmra.mrb[0].mxu0 %v2226
        %v2442 = vpop.f32.mrb[0].mxu0
        %v2443 = vadd.f32 0.0, %v2442
        %v2444 = vpop.f32.mrb[0].mxu0
        %2445 = vmatprep.mubr.f32.mxu0 0.0
        %2446 = vmatmul.mubr.f32.gmra.mrb[0].mxu0 %v2229
        %v2447 = vpop.f32.mrb[0].mxu0
        %v2448 = vadd.f32 0.0, %v2447
        %v2449 = vpop.f32.mrb[0].mxu0
        %2450 = vmatprep.mubr.f32.mxu0 0.0
        %2451 = vmatmul.mubr.f32.gmra.mrb[0].mxu0 %v2232
        %v2452 = vpop.f32.mrb[0].mxu0
        %v2453 = vadd.f32 0.0, %v2452
        %v2454 = vpop.f32.mrb[0].mxu0
        %2455 = vmatprep.mubr.f32.mxu0 0.0
        %2456 = vmatmul.mubr.f32.gmra.mrb[0].mxu0 %v2235
        %v2457 = vpop.f32.mrb[0].mxu0
        %v2458 = vadd.f32 0.0, %v2457
        %v2459 = vpop.f32.mrb[0].mxu0
        %2460 = vmatprep.mubr.f32.mxu0 0.0
        %2461 = vmatmul.mubr.f32.gmra.mrb[0].mxu0 %v2238
        %v2462 = vpop.f32.mrb[0].mxu0
        %v2463 = vadd.f32 0.0, %v2462
        %v2464 = vpop.f32.mrb[0].mxu0
        %2465 = vmatprep.mubr.f32.mxu0 0.0
        %2466 = vmatmul.mubr.f32.gmra.mrb[0].mxu0 %v2241
        %v2467 = vpop.f32.mrb[0].mxu0
        %v2468 = vadd.f32 0.0, %v2467
        %v2469 = vpop.f32.mrb[0].mxu0
        %2470 = vdwg.mxu0
        %v2471 = vadd.f32 %v2081, %v2313
        %v2472 = vadd.f32 %v2082, %v2318
        %v2473 = vadd.f32 %v2083, %v2323
        %v2474 = vadd.f32 %v2084, %v2328
        %v2475 = vadd.f32 %v2085, %v2333
        %v2476 = vadd.f32 %v2086, %v2338
        %v2477 = vadd.f32 %v2087, %v2343
        %v2478 = vadd.f32 %v2088, %v2348
        %v2479 = vadd.f32 %v2089, %v2353
        %v2480 = vadd.f32 %v2090, %v2358
        %v2481 = vadd.f32 %v2091, %v2363
        %v2482 = vadd.f32 %v2092, %v2368
        %v2483 = vadd.f32 %v2093, %v2373
        %v2484 = vadd.f32 %v2094, %v2378
        %v2485 = vadd.f32 %v2095, %v2383
        %v2486 = vadd.f32 %v2096, %v2388
        %v2487 = vadd.f32 %v2097, %v2393
        %v2488 = vadd.f32 %v2098, %v2398
        %v2489 = vadd.f32 %v2099, %v2403
        %v2490 = vadd.f32 %v2100, %v2408
        %v2491 = vadd.f32 %v2101, %v2413
        %v2492 = vadd.f32 %v2102, %v2418
        %v2493 = vadd.f32 %v2103, %v2423
        %v2494 = vadd.f32 %v2104, %v2428
        %v2495 = vadd.f32 %v2105, %v2433
        %v2496 = vadd.f32 %v2106, %v2438
        %v2497 = vadd.f32 %v2107, %v2443
        %v2498 = vadd.f32 %v2108, %v2448
        %v2499 = vadd.f32 %v2109, %v2453
        %v2500 = vadd.f32 %v2110, %v2458
        %v2501 = vadd.f32 %v2111, %v2463
        %v2502 = vadd.f32 %v2112, %v2468
        %v2503 = vld [vmem:[%s974 + $0x1] sm:$0xff]
        %v2504 = vld [vmem:[%s974 + $0x9] sm:$0xff]
        %v2505 = vld [vmem:[%s974 + $0x19] sm:$0xff]
        %v2506 = vld [vmem:[%s974 + $0x21] sm:$0xff]
        %v2507 = vld [vmem:[%s974 + $0x31] sm:$0xff]
        %v2508 = vld [vmem:[%s974 + $0x39] sm:$0xff]
        %v2509 = vld [vmem:[%s974 + $0x49] sm:$0xff]
        %v2510 = vld [vmem:[%s974 + $0x51] sm:$0xff]
        %v2511 = vld [vmem:[%s974 + $0x61] sm:$0xff]
        %v2512 = vld [vmem:[%s974 + $0x69] sm:$0xff]
        %v2513 = vld [vmem:[%s974 + $0x79] sm:$0xff]
        %v2514 = vld [vmem:[%s974 + $0x81] sm:$0xff]
        %v2515 = vld [vmem:[%s974 + $0x91] sm:$0xff]
        %v2516 = vld [vmem:[%s974 + $0x99] sm:$0xff]
        %v2517 = vld [vmem:[%s974 + $0xa9] sm:$0xff]
        %v2518 = vld [vmem:[%s974 + $0xb1] sm:$0xff]
        %v2519 = vld [vmem:[%s974 + $0xc1] sm:$0xff]
        %v2520 = vld [vmem:[%s974 + $0xc9] sm:$0xff]
        %v2521 = vld [vmem:[%s974 + $0xd9] sm:$0xff]
        %v2522 = vld [vmem:[%s974 + $0xe1] sm:$0xff]
        %v2523 = vld [vmem:[%s974 + $0xf1] sm:$0xff]
        %v2524 = vld [vmem:[%s974 + $0xf9] sm:$0xff]
        %v2525 = vld [vmem:[%s974 + $0x109] sm:$0xff]
        %v2526 = vld [vmem:[%s974 + $0x111] sm:$0xff]
        %v2527 = vld [vmem:[%s974 + $0x121] sm:$0xff]
        %v2528 = vld [vmem:[%s974 + $0x129] sm:$0xff]
        %v2529 = vld [vmem:[%s974 + $0x139] sm:$0xff]
        %v2530 = vld [vmem:[%s974 + $0x141] sm:$0xff]
        %v2531 = vld [vmem:[%s974 + $0x151] sm:$0xff]
        %v2532 = vld [vmem:[%s974 + $0x159] sm:$0xff]
        %v2533 = vld [vmem:[%s974 + $0x169] sm:$0xff]
        %v2534 = vld [vmem:[%s974 + $0x171] sm:$0xff]
        %s2535 = scalar_lea.vmem %s3, 16
        %v2536 = vld [vmem:[%s2535] sm:$0xf]
        %v2538 = vsel %vm703, %v2503, 0
        %v2541 = vsel %vm703, %v2504, 0
        %v2544 = vsel %vm703, %v2505, 0
        %v2547 = vsel %vm703, %v2506, 0
        %v2550 = vsel %vm703, %v2507, 0
        %v2553 = vsel %vm703, %v2508, 0
        %v2556 = vsel %vm703, %v2509, 0
        %v2559 = vsel %vm703, %v2510, 0
        %v2562 = vsel %vm703, %v2511, 0
        %v2565 = vsel %vm703, %v2512, 0
        %v2568 = vsel %vm703, %v2513, 0
        %v2571 = vsel %vm703, %v2514, 0
        %v2574 = vsel %vm703, %v2515, 0
        %v2577 = vsel %vm703, %v2516, 0
        %v2580 = vsel %vm703, %v2517, 0
        %v2583 = vsel %vm703, %v2518, 0
        %v2586 = vsel %vm703, %v2519, 0
        %v2589 = vsel %vm703, %v2520, 0
        %v2592 = vsel %vm703, %v2521, 0
        %v2595 = vsel %vm703, %v2522, 0
        %v2598 = vsel %vm703, %v2523, 0
        %v2601 = vsel %vm703, %v2524, 0
        %v2604 = vsel %vm703, %v2525, 0
        %v2607 = vsel %vm703, %v2526, 0
        %v2610 = vsel %vm703, %v2527, 0
        %v2613 = vsel %vm703, %v2528, 0
        %v2616 = vsel %vm703, %v2529, 0
        %v2619 = vsel %vm703, %v2530, 0
        %v2622 = vsel %vm703, %v2531, 0
        %v2625 = vsel %vm703, %v2532, 0
        %v2628 = vsel %vm703, %v2533, 0
        %v2631 = vsel %vm703, %v2534, 0
        %v2634 = vsel %vm1170, %v2536, 0
        %2636 = vmatprep.subr.mxu0 0.0
        %2637 = vmatpush1.msra.mxu0 %v2634
        %2638 = vmatprep.subr.mxu0 0.0
        %2639 = vmatpush1.msra.mxu0 0.0
        %2640 = vmatprep.subr.mxu0 0.0
        %2641 = vmatpush1.msra.mxu0 0.0
        %2642 = vmatprep.subr.mxu0 0.0
        %2643 = vmatpush1.msra.mxu0 0.0
        %2644 = vmatprep.subr.mxu0 0.0
        %2645 = vmatpush1.msra.mxu0 0.0
        %2646 = vmatprep.subr.mxu0 0.0
        %2647 = vmatpush1.msra.mxu0 0.0
        %2648 = vmatprep.subr.mxu0 0.0
        %2649 = vmatpush1.msra.mxu0 0.0
        %2650 = vmatprep.subr.mxu0 0.0
        %2651 = vmatpush1.msra.mxu0 0.0
        %2652 = vmatprep.subr.mxu0 0.0
        %2653 = vmatpush1.msra.mxu0 0.0
        %2654 = vmatprep.subr.mxu0 0.0
        %2655 = vmatpush1.msra.mxu0 0.0
        %2656 = vmatprep.subr.mxu0 0.0
        %2657 = vmatpush1.msra.mxu0 0.0
        %2658 = vmatprep.subr.mxu0 0.0
        %2659 = vmatpush1.msra.mxu0 0.0
        %2660 = vmatprep.subr.mxu0 0.0
        %2661 = vmatpush1.msra.mxu0 0.0
        %2662 = vmatprep.subr.mxu0 0.0
        %2663 = vmatpush1.msra.mxu0 0.0
        %2664 = vmatprep.subr.mxu0 0.0
        %2665 = vmatpush1.msra.mxu0 0.0
        %2666 = vmatprep.subr.mxu0 0.0
        %2667 = vmatpush1.msra.mxu0 0.0
        %2668 = vmatprep.subr.mxu0 0.0
        %2669 = vmatpush1.msra.mxu0 0.0
        %2670 = vmatprep.subr.mxu0 0.0
        %2671 = vmatpush1.msra.mxu0 0.0
        %2672 = vmatprep.subr.mxu0 0.0
        %2673 = vmatpush1.msra.mxu0 0.0
        %2674 = vmatprep.subr.mxu0 0.0
        %2675 = vmatpush1.msra.mxu0 0.0
        %2676 = vmatprep.subr.mxu0 0.0
        %2677 = vmatpush1.msra.mxu0 0.0
        %2678 = vmatprep.subr.mxu0 0.0
        %2679 = vmatpush1.msra.mxu0 0.0
        %2680 = vmatprep.subr.mxu0 0.0
        %2681 = vmatpush1.msra.mxu0 0.0
        %2682 = vmatprep.subr.mxu0 0.0
        %2683 = vmatpush1.msra.mxu0 0.0
        %2684 = vmatprep.subr.mxu0 0.0
        %2685 = vmatpush1.msra.mxu0 0.0
        %2686 = vmatprep.subr.mxu0 0.0
        %2687 = vmatpush1.msra.mxu0 0.0
        %2688 = vmatprep.subr.mxu0 0.0
        %2689 = vmatpush1.msra.mxu0 0.0
        %2690 = vmatprep.subr.mxu0 0.0
        %2691 = vmatpush1.msra.mxu0 0.0
        %2692 = vmatprep.subr.mxu0 0.0
        %2693 = vmatpush1.msra.mxu0 0.0
        %2694 = vmatprep.subr.mxu0 0.0
        %2695 = vmatpush1.msra.mxu0 0.0
        %2696 = vmatprep.subr.mxu0 0.0
        %2697 = vmatpush1.msra.mxu0 0.0
        %2698 = vmatprep.subr.mxu0 0.0
        %2699 = vmatpush1.msra.mxu0 0.0
        %2700 = vmatprep.mubr.f32.mxu0 0.0
        %2701 = vmatmul.mubr.f32.gmra.mrb[0].mxu0 %v2538
        %v2702 = vpop.f32.mrb[0].mxu0
        %v2703 = vadd.f32 0.0, %v2702
        %v2704 = vpop.f32.mrb[0].mxu0
        %2705 = vmatprep.mubr.f32.mxu0 0.0
        %2706 = vmatmul.mubr.f32.gmra.mrb[0].mxu0 %v2541
        %v2707 = vpop.f32.mrb[0].mxu0
        %v2708 = vadd.f32 0.0, %v2707
        %v2709 = vpop.f32.mrb[0].mxu0
        %2710 = vmatprep.mubr.f32.mxu0 0.0
        %2711 = vmatmul.mubr.f32.gmra.mrb[0].mxu0 %v2544
        %v2712 = vpop.f32.mrb[0].mxu0
        %v2713 = vadd.f32 0.0, %v2712
        %v2714 = vpop.f32.mrb[0].mxu0
        %2715 = vmatprep.mubr.f32.mxu0 0.0
        %2716 = vmatmul.mubr.f32.gmra.mrb[0].mxu0 %v2547
        %v2717 = vpop.f32.mrb[0].mxu0
        %v2718 = vadd.f32 0.0, %v2717
        %v2719 = vpop.f32.mrb[0].mxu0
        %2720 = vmatprep.mubr.f32.mxu0 0.0
        %2721 = vmatmul.mubr.f32.gmra.mrb[0].mxu0 %v2550
        %v2722 = vpop.f32.mrb[0].mxu0
        %v2723 = vadd.f32 0.0, %v2722
        %v2724 = vpop.f32.mrb[0].mxu0
        %2725 = vmatprep.mubr.f32.mxu0 0.0
        %2726 = vmatmul.mubr.f32.gmra.mrb[0].mxu0 %v2553
        %v2727 = vpop.f32.mrb[0].mxu0
        %v2728 = vadd.f32 0.0, %v2727
        %v2729 = vpop.f32.mrb[0].mxu0
        %2730 = vmatprep.mubr.f32.mxu0 0.0
        %2731 = vmatmul.mubr.f32.gmra.mrb[0].mxu0 %v2556
        %v2732 = vpop.f32.mrb[0].mxu0
        %v2733 = vadd.f32 0.0, %v2732
        %v2734 = vpop.f32.mrb[0].mxu0
        %2735 = vmatprep.mubr.f32.mxu0 0.0
        %2736 = vmatmul.mubr.f32.gmra.mrb[0].mxu0 %v2559
        %v2737 = vpop.f32.mrb[0].mxu0
        %v2738 = vadd.f32 0.0, %v2737
        %v2739 = vpop.f32.mrb[0].mxu0
        %2740 = vmatprep.mubr.f32.mxu0 0.0
        %2741 = vmatmul.mubr.f32.gmra.mrb[0].mxu0 %v2562
        %v2742 = vpop.f32.mrb[0].mxu0
        %v2743 = vadd.f32 0.0, %v2742
        %v2744 = vpop.f32.mrb[0].mxu0
        %2745 = vmatprep.mubr.f32.mxu0 0.0
        %2746 = vmatmul.mubr.f32.gmra.mrb[0].mxu0 %v2565
        %v2747 = vpop.f32.mrb[0].mxu0
        %v2748 = vadd.f32 0.0, %v2747
        %v2749 = vpop.f32.mrb[0].mxu0
        %2750 = vmatprep.mubr.f32.mxu0 0.0
        %2751 = vmatmul.mubr.f32.gmra.mrb[0].mxu0 %v2568
        %v2752 = vpop.f32.mrb[0].mxu0
        %v2753 = vadd.f32 0.0, %v2752
        %v2754 = vpop.f32.mrb[0].mxu0
        %2755 = vmatprep.mubr.f32.mxu0 0.0
        %2756 = vmatmul.mubr.f32.gmra.mrb[0].mxu0 %v2571
        %v2757 = vpop.f32.mrb[0].mxu0
        %v2758 = vadd.f32 0.0, %v2757
        %v2759 = vpop.f32.mrb[0].mxu0
        %2760 = vmatprep.mubr.f32.mxu0 0.0
        %2761 = vmatmul.mubr.f32.gmra.mrb[0].mxu0 %v2574
        %v2762 = vpop.f32.mrb[0].mxu0
        %v2763 = vadd.f32 0.0, %v2762
        %v2764 = vpop.f32.mrb[0].mxu0
        %2765 = vmatprep.mubr.f32.mxu0 0.0
        %2766 = vmatmul.mubr.f32.gmra.mrb[0].mxu0 %v2577
        %v2767 = vpop.f32.mrb[0].mxu0
        %v2768 = vadd.f32 0.0, %v2767
        %v2769 = vpop.f32.mrb[0].mxu0
        %2770 = vmatprep.mubr.f32.mxu0 0.0
        %2771 = vmatmul.mubr.f32.gmra.mrb[0].mxu0 %v2580
        %v2772 = vpop.f32.mrb[0].mxu0
        %v2773 = vadd.f32 0.0, %v2772
        %v2774 = vpop.f32.mrb[0].mxu0
        %2775 = vmatprep.mubr.f32.mxu0 0.0
        %2776 = vmatmul.mubr.f32.gmra.mrb[0].mxu0 %v2583
        %v2777 = vpop.f32.mrb[0].mxu0
        %v2778 = vadd.f32 0.0, %v2777
        %v2779 = vpop.f32.mrb[0].mxu0
        %2780 = vmatprep.mubr.f32.mxu0 0.0
        %2781 = vmatmul.mubr.f32.gmra.mrb[0].mxu0 %v2586
        %v2782 = vpop.f32.mrb[0].mxu0
        %v2783 = vadd.f32 0.0, %v2782
        %v2784 = vpop.f32.mrb[0].mxu0
        %2785 = vmatprep.mubr.f32.mxu0 0.0
        %2786 = vmatmul.mubr.f32.gmra.mrb[0].mxu0 %v2589
        %v2787 = vpop.f32.mrb[0].mxu0
        %v2788 = vadd.f32 0.0, %v2787
        %v2789 = vpop.f32.mrb[0].mxu0
        %2790 = vmatprep.mubr.f32.mxu0 0.0
        %2791 = vmatmul.mubr.f32.gmra.mrb[0].mxu0 %v2592
        %v2792 = vpop.f32.mrb[0].mxu0
        %v2793 = vadd.f32 0.0, %v2792
        %v2794 = vpop.f32.mrb[0].mxu0
        %2795 = vmatprep.mubr.f32.mxu0 0.0
        %2796 = vmatmul.mubr.f32.gmra.mrb[0].mxu0 %v2595
        %v2797 = vpop.f32.mrb[0].mxu0
        %v2798 = vadd.f32 0.0, %v2797
        %v2799 = vpop.f32.mrb[0].mxu0
        %2800 = vmatprep.mubr.f32.mxu0 0.0
        %2801 = vmatmul.mubr.f32.gmra.mrb[0].mxu0 %v2598
        %v2802 = vpop.f32.mrb[0].mxu0
        %v2803 = vadd.f32 0.0, %v2802
        %v2804 = vpop.f32.mrb[0].mxu0
        %2805 = vmatprep.mubr.f32.mxu0 0.0
        %2806 = vmatmul.mubr.f32.gmra.mrb[0].mxu0 %v2601
        %v2807 = vpop.f32.mrb[0].mxu0
        %v2808 = vadd.f32 0.0, %v2807
        %v2809 = vpop.f32.mrb[0].mxu0
        %2810 = vmatprep.mubr.f32.mxu0 0.0
        %2811 = vmatmul.mubr.f32.gmra.mrb[0].mxu0 %v2604
        %v2812 = vpop.f32.mrb[0].mxu0
        %v2813 = vadd.f32 0.0, %v2812
        %v2814 = vpop.f32.mrb[0].mxu0
        %2815 = vmatprep.mubr.f32.mxu0 0.0
        %2816 = vmatmul.mubr.f32.gmra.mrb[0].mxu0 %v2607
        %v2817 = vpop.f32.mrb[0].mxu0
        %v2818 = vadd.f32 0.0, %v2817
        %v2819 = vpop.f32.mrb[0].mxu0
        %2820 = vmatprep.mubr.f32.mxu0 0.0
        %2821 = vmatmul.mubr.f32.gmra.mrb[0].mxu0 %v2610
        %v2822 = vpop.f32.mrb[0].mxu0
        %v2823 = vadd.f32 0.0, %v2822
        %v2824 = vpop.f32.mrb[0].mxu0
        %2825 = vmatprep.mubr.f32.mxu0 0.0
        %2826 = vmatmul.mubr.f32.gmra.mrb[0].mxu0 %v2613
        %v2827 = vpop.f32.mrb[0].mxu0
        %v2828 = vadd.f32 0.0, %v2827
        %v2829 = vpop.f32.mrb[0].mxu0
        %2830 = vmatprep.mubr.f32.mxu0 0.0
        %2831 = vmatmul.mubr.f32.gmra.mrb[0].mxu0 %v2616
        %v2832 = vpop.f32.mrb[0].mxu0
        %v2833 = vadd.f32 0.0, %v2832
        %v2834 = vpop.f32.mrb[0].mxu0
        %2835 = vmatprep.mubr.f32.mxu0 0.0
        %2836 = vmatmul.mubr.f32.gmra.mrb[0].mxu0 %v2619
        %v2837 = vpop.f32.mrb[0].mxu0
        %v2838 = vadd.f32 0.0, %v2837
        %v2839 = vpop.f32.mrb[0].mxu0
        %2840 = vmatprep.mubr.f32.mxu0 0.0
        %2841 = vmatmul.mubr.f32.gmra.mrb[0].mxu0 %v2622
        %v2842 = vpop.f32.mrb[0].mxu0
        %v2843 = vadd.f32 0.0, %v2842
        %v2844 = vpop.f32.mrb[0].mxu0
        %2845 = vmatprep.mubr.f32.mxu0 0.0
        %2846 = vmatmul.mubr.f32.gmra.mrb[0].mxu0 %v2625
        %v2847 = vpop.f32.mrb[0].mxu0
        %v2848 = vadd.f32 0.0, %v2847
        %v2849 = vpop.f32.mrb[0].mxu0
        %2850 = vmatprep.mubr.f32.mxu0 0.0
        %2851 = vmatmul.mubr.f32.gmra.mrb[0].mxu0 %v2628
        %v2852 = vpop.f32.mrb[0].mxu0
        %v2853 = vadd.f32 0.0, %v2852
        %v2854 = vpop.f32.mrb[0].mxu0
        %2855 = vmatprep.mubr.f32.mxu0 0.0
        %2856 = vmatmul.mubr.f32.gmra.mrb[0].mxu0 %v2631
        %v2857 = vpop.f32.mrb[0].mxu0
        %v2858 = vadd.f32 0.0, %v2857
        %v2859 = vpop.f32.mrb[0].mxu0
        %2860 = vdwg.mxu0
        %v2861 = vadd.f32 %v2471, %v2703
        %v2862 = vadd.f32 %v2472, %v2708
        %v2863 = vadd.f32 %v2473, %v2713
        %v2864 = vadd.f32 %v2474, %v2718
        %v2865 = vadd.f32 %v2475, %v2723
        %v2866 = vadd.f32 %v2476, %v2728
        %v2867 = vadd.f32 %v2477, %v2733
        %v2868 = vadd.f32 %v2478, %v2738
        %v2869 = vadd.f32 %v2479, %v2743
        %v2870 = vadd.f32 %v2480, %v2748
        %v2871 = vadd.f32 %v2481, %v2753
        %v2872 = vadd.f32 %v2482, %v2758
        %v2873 = vadd.f32 %v2483, %v2763
        %v2874 = vadd.f32 %v2484, %v2768
        %v2875 = vadd.f32 %v2485, %v2773
        %v2876 = vadd.f32 %v2486, %v2778
        %v2877 = vadd.f32 %v2487, %v2783
        %v2878 = vadd.f32 %v2488, %v2788
        %v2879 = vadd.f32 %v2489, %v2793
        %v2880 = vadd.f32 %v2490, %v2798
        %v2881 = vadd.f32 %v2491, %v2803
        %v2882 = vadd.f32 %v2492, %v2808
        %v2883 = vadd.f32 %v2493, %v2813
        %v2884 = vadd.f32 %v2494, %v2818
        %v2885 = vadd.f32 %v2495, %v2823
        %v2886 = vadd.f32 %v2496, %v2828
        %v2887 = vadd.f32 %v2497, %v2833
        %v2888 = vadd.f32 %v2498, %v2838
        %v2889 = vadd.f32 %v2499, %v2843
        %v2890 = vadd.f32 %v2500, %v2848
        %v2891 = vadd.f32 %v2501, %v2853
        %v2892 = vadd.f32 %v2502, %v2858
        %v2893 = vld [vmem:[%s974 + $0x2] sm:$0xff]
        %v2894 = vld [vmem:[%s974 + $0xa] sm:$0xff]
        %v2895 = vld [vmem:[%s974 + $0x1a] sm:$0xff]
        %v2896 = vld [vmem:[%s974 + $0x22] sm:$0xff]
        %v2897 = vld [vmem:[%s974 + $0x32] sm:$0xff]
        %v2898 = vld [vmem:[%s974 + $0x3a] sm:$0xff]
        %v2899 = vld [vmem:[%s974 + $0x4a] sm:$0xff]
        %v2900 = vld [vmem:[%s974 + $0x52] sm:$0xff]
        %v2901 = vld [vmem:[%s974 + $0x62] sm:$0xff]
        %v2902 = vld [vmem:[%s974 + $0x6a] sm:$0xff]
        %v2903 = vld [vmem:[%s974 + $0x7a] sm:$0xff]
        %v2904 = vld [vmem:[%s974 + $0x82] sm:$0xff]
        %v2905 = vld [vmem:[%s974 + $0x92] sm:$0xff]
        %v2906 = vld [vmem:[%s974 + $0x9a] sm:$0xff]
        %v2907 = vld [vmem:[%s974 + $0xaa] sm:$0xff]
        %v2908 = vld [vmem:[%s974 + $0xb2] sm:$0xff]
        %v2909 = vld [vmem:[%s974 + $0xc2] sm:$0xff]
        %v2910 = vld [vmem:[%s974 + $0xca] sm:$0xff]
        %v2911 = vld [vmem:[%s974 + $0xda] sm:$0xff]
        %v2912 = vld [vmem:[%s974 + $0xe2] sm:$0xff]
        %v2913 = vld [vmem:[%s974 + $0xf2] sm:$0xff]
        %v2914 = vld [vmem:[%s974 + $0xfa] sm:$0xff]
        %v2915 = vld [vmem:[%s974 + $0x10a] sm:$0xff]
        %v2916 = vld [vmem:[%s974 + $0x112] sm:$0xff]
        %v2917 = vld [vmem:[%s974 + $0x122] sm:$0xff]
        %v2918 = vld [vmem:[%s974 + $0x12a] sm:$0xff]
        %v2919 = vld [vmem:[%s974 + $0x13a] sm:$0xff]
        %v2920 = vld [vmem:[%s974 + $0x142] sm:$0xff]
        %v2921 = vld [vmem:[%s974 + $0x152] sm:$0xff]
        %v2922 = vld [vmem:[%s974 + $0x15a] sm:$0xff]
        %v2923 = vld [vmem:[%s974 + $0x16a] sm:$0xff]
        %v2924 = vld [vmem:[%s974 + $0x172] sm:$0xff]
        %s2925 = scalar_lea.vmem %s3, 20
        %v2926 = vld [vmem:[%s2925] sm:$0xf]
        %v2928 = vsel %vm703, %v2893, 0
        %v2931 = vsel %vm703, %v2894, 0
        %v2934 = vsel %vm703, %v2895, 0
        %v2937 = vsel %vm703, %v2896, 0
        %v2940 = vsel %vm703, %v2897, 0
        %v2943 = vsel %vm703, %v2898, 0
        %v2946 = vsel %vm703, %v2899, 0
        %v2949 = vsel %vm703, %v2900, 0
        %v2952 = vsel %vm703, %v2901, 0
        %v2955 = vsel %vm703, %v2902, 0
        %v2958 = vsel %vm703, %v2903, 0
        %v2961 = vsel %vm703, %v2904, 0
        %v2964 = vsel %vm703, %v2905, 0
        %v2967 = vsel %vm703, %v2906, 0
        %v2970 = vsel %vm703, %v2907, 0
        %v2973 = vsel %vm703, %v2908, 0
        %v2976 = vsel %vm703, %v2909, 0
        %v2979 = vsel %vm703, %v2910, 0
        %v2982 = vsel %vm703, %v2911, 0
        %v2985 = vsel %vm703, %v2912, 0
        %v2988 = vsel %vm703, %v2913, 0
        %v2991 = vsel %vm703, %v2914, 0
        %v2994 = vsel %vm703, %v2915, 0
        %v2997 = vsel %vm703, %v2916, 0
        %v3000 = vsel %vm703, %v2917, 0
        %v3003 = vsel %vm703, %v2918, 0
        %v3006 = vsel %vm703, %v2919, 0
        %v3009 = vsel %vm703, %v2920, 0
        %v3012 = vsel %vm703, %v2921, 0
        %v3015 = vsel %vm703, %v2922, 0
        %v3018 = vsel %vm703, %v2923, 0
        %v3021 = vsel %vm703, %v2924, 0
        %v3024 = vsel %vm1170, %v2926, 0
        %3026 = vmatprep.subr.mxu0 0.0
        %3027 = vmatpush1.msra.mxu0 %v3024
        %3028 = vmatprep.subr.mxu0 0.0
        %3029 = vmatpush1.msra.mxu0 0.0
        %3030 = vmatprep.subr.mxu0 0.0
        %3031 = vmatpush1.msra.mxu0 0.0
        %3032 = vmatprep.subr.mxu0 0.0
        %3033 = vmatpush1.msra.mxu0 0.0
        %3034 = vmatprep.subr.mxu0 0.0
        %3035 = vmatpush1.msra.mxu0 0.0
        %3036 = vmatprep.subr.mxu0 0.0
        %3037 = vmatpush1.msra.mxu0 0.0
        %3038 = vmatprep.subr.mxu0 0.0
        %3039 = vmatpush1.msra.mxu0 0.0
        %3040 = vmatprep.subr.mxu0 0.0
        %3041 = vmatpush1.msra.mxu0 0.0
        %3042 = vmatprep.subr.mxu0 0.0
        %3043 = vmatpush1.msra.mxu0 0.0
        %3044 = vmatprep.subr.mxu0 0.0
        %3045 = vmatpush1.msra.mxu0 0.0
        %3046 = vmatprep.subr.mxu0 0.0
        %3047 = vmatpush1.msra.mxu0 0.0
        %3048 = vmatprep.subr.mxu0 0.0
        %3049 = vmatpush1.msra.mxu0 0.0
        %3050 = vmatprep.subr.mxu0 0.0
        %3051 = vmatpush1.msra.mxu0 0.0
        %3052 = vmatprep.subr.mxu0 0.0
        %3053 = vmatpush1.msra.mxu0 0.0
        %3054 = vmatprep.subr.mxu0 0.0
        %3055 = vmatpush1.msra.mxu0 0.0
        %3056 = vmatprep.subr.mxu0 0.0
        %3057 = vmatpush1.msra.mxu0 0.0
        %3058 = vmatprep.subr.mxu0 0.0
        %3059 = vmatpush1.msra.mxu0 0.0
        %3060 = vmatprep.subr.mxu0 0.0
        %3061 = vmatpush1.msra.mxu0 0.0
        %3062 = vmatprep.subr.mxu0 0.0
        %3063 = vmatpush1.msra.mxu0 0.0
        %3064 = vmatprep.subr.mxu0 0.0
        %3065 = vmatpush1.msra.mxu0 0.0
        %3066 = vmatprep.subr.mxu0 0.0
        %3067 = vmatpush1.msra.mxu0 0.0
        %3068 = vmatprep.subr.mxu0 0.0
        %3069 = vmatpush1.msra.mxu0 0.0
        %3070 = vmatprep.subr.mxu0 0.0
        %3071 = vmatpush1.msra.mxu0 0.0
        %3072 = vmatprep.subr.mxu0 0.0
        %3073 = vmatpush1.msra.mxu0 0.0
        %3074 = vmatprep.subr.mxu0 0.0
        %3075 = vmatpush1.msra.mxu0 0.0
        %3076 = vmatprep.subr.mxu0 0.0
        %3077 = vmatpush1.msra.mxu0 0.0
        %3078 = vmatprep.subr.mxu0 0.0
        %3079 = vmatpush1.msra.mxu0 0.0
        %3080 = vmatprep.subr.mxu0 0.0
        %3081 = vmatpush1.msra.mxu0 0.0
        %3082 = vmatprep.subr.mxu0 0.0
        %3083 = vmatpush1.msra.mxu0 0.0
        %3084 = vmatprep.subr.mxu0 0.0
        %3085 = vmatpush1.msra.mxu0 0.0
        %3086 = vmatprep.subr.mxu0 0.0
        %3087 = vmatpush1.msra.mxu0 0.0
        %3088 = vmatprep.subr.mxu0 0.0
        %3089 = vmatpush1.msra.mxu0 0.0
        %3090 = vmatprep.mubr.f32.mxu0 0.0
        %3091 = vmatmul.mubr.f32.gmra.mrb[0].mxu0 %v2928
        %v3092 = vpop.f32.mrb[0].mxu0
        %v3093 = vadd.f32 0.0, %v3092
        %v3094 = vpop.f32.mrb[0].mxu0
        %3095 = vmatprep.mubr.f32.mxu0 0.0
        %3096 = vmatmul.mubr.f32.gmra.mrb[0].mxu0 %v2931
        %v3097 = vpop.f32.mrb[0].mxu0
        %v3098 = vadd.f32 0.0, %v3097
        %v3099 = vpop.f32.mrb[0].mxu0
        %3100 = vmatprep.mubr.f32.mxu0 0.0
        %3101 = vmatmul.mubr.f32.gmra.mrb[0].mxu0 %v2934
        %v3102 = vpop.f32.mrb[0].mxu0
        %v3103 = vadd.f32 0.0, %v3102
        %v3104 = vpop.f32.mrb[0].mxu0
        %3105 = vmatprep.mubr.f32.mxu0 0.0
        %3106 = vmatmul.mubr.f32.gmra.mrb[0].mxu0 %v2937
        %v3107 = vpop.f32.mrb[0].mxu0
        %v3108 = vadd.f32 0.0, %v3107
        %v3109 = vpop.f32.mrb[0].mxu0
        %3110 = vmatprep.mubr.f32.mxu0 0.0
        %3111 = vmatmul.mubr.f32.gmra.mrb[0].mxu0 %v2940
        %v3112 = vpop.f32.mrb[0].mxu0
        %v3113 = vadd.f32 0.0, %v3112
        %v3114 = vpop.f32.mrb[0].mxu0
        %3115 = vmatprep.mubr.f32.mxu0 0.0
        %3116 = vmatmul.mubr.f32.gmra.mrb[0].mxu0 %v2943
        %v3117 = vpop.f32.mrb[0].mxu0
        %v3118 = vadd.f32 0.0, %v3117
        %v3119 = vpop.f32.mrb[0].mxu0
        %3120 = vmatprep.mubr.f32.mxu0 0.0
        %3121 = vmatmul.mubr.f32.gmra.mrb[0].mxu0 %v2946
        %v3122 = vpop.f32.mrb[0].mxu0
        %v3123 = vadd.f32 0.0, %v3122
        %v3124 = vpop.f32.mrb[0].mxu0
        %3125 = vmatprep.mubr.f32.mxu0 0.0
        %3126 = vmatmul.mubr.f32.gmra.mrb[0].mxu0 %v2949
        %v3127 = vpop.f32.mrb[0].mxu0
        %v3128 = vadd.f32 0.0, %v3127
        %v3129 = vpop.f32.mrb[0].mxu0
        %3130 = vmatprep.mubr.f32.mxu0 0.0
        %3131 = vmatmul.mubr.f32.gmra.mrb[0].mxu0 %v2952
        %v3132 = vpop.f32.mrb[0].mxu0
        %v3133 = vadd.f32 0.0, %v3132
        %v3134 = vpop.f32.mrb[0].mxu0
        %3135 = vmatprep.mubr.f32.mxu0 0.0
        %3136 = vmatmul.mubr.f32.gmra.mrb[0].mxu0 %v2955
        %v3137 = vpop.f32.mrb[0].mxu0
        %v3138 = vadd.f32 0.0, %v3137
        %v3139 = vpop.f32.mrb[0].mxu0
        %3140 = vmatprep.mubr.f32.mxu0 0.0
        %3141 = vmatmul.mubr.f32.gmra.mrb[0].mxu0 %v2958
        %v3142 = vpop.f32.mrb[0].mxu0
        %v3143 = vadd.f32 0.0, %v3142
        %v3144 = vpop.f32.mrb[0].mxu0
        %3145 = vmatprep.mubr.f32.mxu0 0.0
        %3146 = vmatmul.mubr.f32.gmra.mrb[0].mxu0 %v2961
        %v3147 = vpop.f32.mrb[0].mxu0
        %v3148 = vadd.f32 0.0, %v3147
        %v3149 = vpop.f32.mrb[0].mxu0
        %3150 = vmatprep.mubr.f32.mxu0 0.0
        %3151 = vmatmul.mubr.f32.gmra.mrb[0].mxu0 %v2964
        %v3152 = vpop.f32.mrb[0].mxu0
        %v3153 = vadd.f32 0.0, %v3152
        %v3154 = vpop.f32.mrb[0].mxu0
        %3155 = vmatprep.mubr.f32.mxu0 0.0
        %3156 = vmatmul.mubr.f32.gmra.mrb[0].mxu0 %v2967
        %v3157 = vpop.f32.mrb[0].mxu0
        %v3158 = vadd.f32 0.0, %v3157
        %v3159 = vpop.f32.mrb[0].mxu0
        %3160 = vmatprep.mubr.f32.mxu0 0.0
        %3161 = vmatmul.mubr.f32.gmra.mrb[0].mxu0 %v2970
        %v3162 = vpop.f32.mrb[0].mxu0
        %v3163 = vadd.f32 0.0, %v3162
        %v3164 = vpop.f32.mrb[0].mxu0
        %3165 = vmatprep.mubr.f32.mxu0 0.0
        %3166 = vmatmul.mubr.f32.gmra.mrb[0].mxu0 %v2973
        %v3167 = vpop.f32.mrb[0].mxu0
        %v3168 = vadd.f32 0.0, %v3167
        %v3169 = vpop.f32.mrb[0].mxu0
        %3170 = vmatprep.mubr.f32.mxu0 0.0
        %3171 = vmatmul.mubr.f32.gmra.mrb[0].mxu0 %v2976
        %v3172 = vpop.f32.mrb[0].mxu0
        %v3173 = vadd.f32 0.0, %v3172
        %v3174 = vpop.f32.mrb[0].mxu0
        %3175 = vmatprep.mubr.f32.mxu0 0.0
        %3176 = vmatmul.mubr.f32.gmra.mrb[0].mxu0 %v2979
        %v3177 = vpop.f32.mrb[0].mxu0
        %v3178 = vadd.f32 0.0, %v3177
        %v3179 = vpop.f32.mrb[0].mxu0
        %3180 = vmatprep.mubr.f32.mxu0 0.0
        %3181 = vmatmul.mubr.f32.gmra.mrb[0].mxu0 %v2982
        %v3182 = vpop.f32.mrb[0].mxu0
        %v3183 = vadd.f32 0.0, %v3182
        %v3184 = vpop.f32.mrb[0].mxu0
        %3185 = vmatprep.mubr.f32.mxu0 0.0
        %3186 = vmatmul.mubr.f32.gmra.mrb[0].mxu0 %v2985
        %v3187 = vpop.f32.mrb[0].mxu0
        %v3188 = vadd.f32 0.0, %v3187
        %v3189 = vpop.f32.mrb[0].mxu0
        %3190 = vmatprep.mubr.f32.mxu0 0.0
        %3191 = vmatmul.mubr.f32.gmra.mrb[0].mxu0 %v2988
        %v3192 = vpop.f32.mrb[0].mxu0
        %v3193 = vadd.f32 0.0, %v3192
        %v3194 = vpop.f32.mrb[0].mxu0
        %3195 = vmatprep.mubr.f32.mxu0 0.0
        %3196 = vmatmul.mubr.f32.gmra.mrb[0].mxu0 %v2991
        %v3197 = vpop.f32.mrb[0].mxu0
        %v3198 = vadd.f32 0.0, %v3197
        %v3199 = vpop.f32.mrb[0].mxu0
        %3200 = vmatprep.mubr.f32.mxu0 0.0
        %3201 = vmatmul.mubr.f32.gmra.mrb[0].mxu0 %v2994
        %v3202 = vpop.f32.mrb[0].mxu0
        %v3203 = vadd.f32 0.0, %v3202
        %v3204 = vpop.f32.mrb[0].mxu0
        %3205 = vmatprep.mubr.f32.mxu0 0.0
        %3206 = vmatmul.mubr.f32.gmra.mrb[0].mxu0 %v2997
        %v3207 = vpop.f32.mrb[0].mxu0
        %v3208 = vadd.f32 0.0, %v3207
        %v3209 = vpop.f32.mrb[0].mxu0
        %3210 = vmatprep.mubr.f32.mxu0 0.0
        %3211 = vmatmul.mubr.f32.gmra.mrb[0].mxu0 %v3000
        %v3212 = vpop.f32.mrb[0].mxu0
        %v3213 = vadd.f32 0.0, %v3212
        %v3214 = vpop.f32.mrb[0].mxu0
        %3215 = vmatprep.mubr.f32.mxu0 0.0
        %3216 = vmatmul.mubr.f32.gmra.mrb[0].mxu0 %v3003
        %v3217 = vpop.f32.mrb[0].mxu0
        %v3218 = vadd.f32 0.0, %v3217
        %v3219 = vpop.f32.mrb[0].mxu0
        %3220 = vmatprep.mubr.f32.mxu0 0.0
        %3221 = vmatmul.mubr.f32.gmra.mrb[0].mxu0 %v3006
        %v3222 = vpop.f32.mrb[0].mxu0
        %v3223 = vadd.f32 0.0, %v3222
        %v3224 = vpop.f32.mrb[0].mxu0
        %3225 = vmatprep.mubr.f32.mxu0 0.0
        %3226 = vmatmul.mubr.f32.gmra.mrb[0].mxu0 %v3009
        %v3227 = vpop.f32.mrb[0].mxu0
        %v3228 = vadd.f32 0.0, %v3227
        %v3229 = vpop.f32.mrb[0].mxu0
        %3230 = vmatprep.mubr.f32.mxu0 0.0
        %3231 = vmatmul.mubr.f32.gmra.mrb[0].mxu0 %v3012
        %v3232 = vpop.f32.mrb[0].mxu0
        %v3233 = vadd.f32 0.0, %v3232
        %v3234 = vpop.f32.mrb[0].mxu0
        %3235 = vmatprep.mubr.f32.mxu0 0.0
        %3236 = vmatmul.mubr.f32.gmra.mrb[0].mxu0 %v3015
        %v3237 = vpop.f32.mrb[0].mxu0
        %v3238 = vadd.f32 0.0, %v3237
        %v3239 = vpop.f32.mrb[0].mxu0
        %3240 = vmatprep.mubr.f32.mxu0 0.0
        %3241 = vmatmul.mubr.f32.gmra.mrb[0].mxu0 %v3018
        %v3242 = vpop.f32.mrb[0].mxu0
        %v3243 = vadd.f32 0.0, %v3242
        %v3244 = vpop.f32.mrb[0].mxu0
        %3245 = vmatprep.mubr.f32.mxu0 0.0
        %3246 = vmatmul.mubr.f32.gmra.mrb[0].mxu0 %v3021
        %v3247 = vpop.f32.mrb[0].mxu0
        %v3248 = vadd.f32 0.0, %v3247
        %v3249 = vpop.f32.mrb[0].mxu0
        %3250 = vdwg.mxu0
        %v3251 = vadd.f32 %v2861, %v3093
        %v3252 = vadd.f32 %v2862, %v3098
        %v3253 = vadd.f32 %v2863, %v3103
        %v3254 = vadd.f32 %v2864, %v3108
        %v3255 = vadd.f32 %v2865, %v3113
        %v3256 = vadd.f32 %v2866, %v3118
        %v3257 = vadd.f32 %v2867, %v3123
        %v3258 = vadd.f32 %v2868, %v3128
        %v3259 = vadd.f32 %v2869, %v3133
        %v3260 = vadd.f32 %v2870, %v3138
        %v3261 = vadd.f32 %v2871, %v3143
        %v3262 = vadd.f32 %v2872, %v3148
        %v3263 = vadd.f32 %v2873, %v3153
        %v3264 = vadd.f32 %v2874, %v3158
        %v3265 = vadd.f32 %v2875, %v3163
        %v3266 = vadd.f32 %v2876, %v3168
        %v3267 = vadd.f32 %v2877, %v3173
        %v3268 = vadd.f32 %v2878, %v3178
        %v3269 = vadd.f32 %v2879, %v3183
        %v3270 = vadd.f32 %v2880, %v3188
        %v3271 = vadd.f32 %v2881, %v3193
        %v3272 = vadd.f32 %v2882, %v3198
        %v3273 = vadd.f32 %v2883, %v3203
        %v3274 = vadd.f32 %v2884, %v3208
        %v3275 = vadd.f32 %v2885, %v3213
        %v3276 = vadd.f32 %v2886, %v3218
        %v3277 = vadd.f32 %v2887, %v3223
        %v3278 = vadd.f32 %v2888, %v3228
        %v3279 = vadd.f32 %v2889, %v3233
        %v3280 = vadd.f32 %v2890, %v3238
        %v3281 = vadd.f32 %v2891, %v3243
        %v3282 = vadd.f32 %v2892, %v3248
        %s3283 = scalar_lea.vmem [#allocation2], 48
        %v3284 = vld [vmem:[%s3283] sm:$0xff]
        %v3285 = vld [vmem:[%s3283 + $0x8] sm:$0xff]
        %v3286 = vld [vmem:[%s3283 + $0x18] sm:$0xff]
        %v3287 = vld [vmem:[%s3283 + $0x20] sm:$0xff]
        %v3288 = vld [vmem:[%s3283 + $0x30] sm:$0xff]
        %v3289 = vld [vmem:[%s3283 + $0x38] sm:$0xff]
        %v3290 = vld [vmem:[%s3283 + $0x48] sm:$0xff]
        %v3291 = vld [vmem:[%s3283 + $0x50] sm:$0xff]
        %v3292 = vld [vmem:[%s3283 + $0x60] sm:$0xff]
        %v3293 = vld [vmem:[%s3283 + $0x68] sm:$0xff]
        %v3294 = vld [vmem:[%s3283 + $0x78] sm:$0xff]
        %v3295 = vld [vmem:[%s3283 + $0x80] sm:$0xff]
        %v3296 = vld [vmem:[%s3283 + $0x90] sm:$0xff]
        %v3297 = vld [vmem:[%s3283 + $0x98] sm:$0xff]
        %v3298 = vld [vmem:[%s3283 + $0xa8] sm:$0xff]
        %v3299 = vld [vmem:[%s3283 + $0xb0] sm:$0xff]
        %v3300 = vld [vmem:[%s3283 + $0xc0] sm:$0xff]
        %v3301 = vld [vmem:[%s3283 + $0xc8] sm:$0xff]
        %v3302 = vld [vmem:[%s3283 + $0xd8] sm:$0xff]
        %v3303 = vld [vmem:[%s3283 + $0xe0] sm:$0xff]
        %v3304 = vld [vmem:[%s3283 + $0xf0] sm:$0xff]
        %v3305 = vld [vmem:[%s3283 + $0xf8] sm:$0xff]
        %v3306 = vld [vmem:[%s3283 + $0x108] sm:$0xff]
        %v3307 = vld [vmem:[%s3283 + $0x110] sm:$0xff]
        %v3308 = vld [vmem:[%s3283 + $0x120] sm:$0xff]
        %v3309 = vld [vmem:[%s3283 + $0x128] sm:$0xff]
        %v3310 = vld [vmem:[%s3283 + $0x138] sm:$0xff]
        %v3311 = vld [vmem:[%s3283 + $0x140] sm:$0xff]
        %v3312 = vld [vmem:[%s3283 + $0x150] sm:$0xff]
        %v3313 = vld [vmem:[%s3283 + $0x158] sm:$0xff]
        %v3314 = vld [vmem:[%s3283 + $0x168] sm:$0xff]
        %v3315 = vld [vmem:[%s3283 + $0x170] sm:$0xff]
        %s3316 = scalar_lea.vmem %s3, 24
        %v3317 = vld [vmem:[%s3316] sm:$0xf]
        %v3319 = vsel %vm703, %v3284, 0
        %v3322 = vsel %vm703, %v3285, 0
        %v3325 = vsel %vm703, %v3286, 0
        %v3328 = vsel %vm703, %v3287, 0
        %v3331 = vsel %vm703, %v3288, 0
        %v3334 = vsel %vm703, %v3289, 0
        %v3337 = vsel %vm703, %v3290, 0
        %v3340 = vsel %vm703, %v3291, 0
        %v3343 = vsel %vm703, %v3292, 0
        %v3346 = vsel %vm703, %v3293, 0
        %v3349 = vsel %vm703, %v3294, 0
        %v3352 = vsel %vm703, %v3295, 0
        %v3355 = vsel %vm703, %v3296, 0
        %v3358 = vsel %vm703, %v3297, 0
        %v3361 = vsel %vm703, %v3298, 0
        %v3364 = vsel %vm703, %v3299, 0
        %v3367 = vsel %vm703, %v3300, 0
        %v3370 = vsel %vm703, %v3301, 0
        %v3373 = vsel %vm703, %v3302, 0
        %v3376 = vsel %vm703, %v3303, 0
        %v3379 = vsel %vm703, %v3304, 0
        %v3382 = vsel %vm703, %v3305, 0
        %v3385 = vsel %vm703, %v3306, 0
        %v3388 = vsel %vm703, %v3307, 0
        %v3391 = vsel %vm703, %v3308, 0
        %v3394 = vsel %vm703, %v3309, 0
        %v3397 = vsel %vm703, %v3310, 0
        %v3400 = vsel %vm703, %v3311, 0
        %v3403 = vsel %vm703, %v3312, 0
        %v3406 = vsel %vm703, %v3313, 0
        %v3409 = vsel %vm703, %v3314, 0
        %v3412 = vsel %vm703, %v3315, 0
        %v3415 = vsel %vm1170, %v3317, 0
        %3417 = vmatprep.subr.mxu0 0.0
        %3418 = vmatpush1.msra.mxu0 %v3415
        %3419 = vmatprep.subr.mxu0 0.0
        %3420 = vmatpush1.msra.mxu0 0.0
        %3421 = vmatprep.subr.mxu0 0.0
        %3422 = vmatpush1.msra.mxu0 0.0
        %3423 = vmatprep.subr.mxu0 0.0
        %3424 = vmatpush1.msra.mxu0 0.0
        %3425 = vmatprep.subr.mxu0 0.0
        %3426 = vmatpush1.msra.mxu0 0.0
        %3427 = vmatprep.subr.mxu0 0.0
        %3428 = vmatpush1.msra.mxu0 0.0
        %3429 = vmatprep.subr.mxu0 0.0
        %3430 = vmatpush1.msra.mxu0 0.0
        %3431 = vmatprep.subr.mxu0 0.0
        %3432 = vmatpush1.msra.mxu0 0.0
        %3433 = vmatprep.subr.mxu0 0.0
        %3434 = vmatpush1.msra.mxu0 0.0
        %3435 = vmatprep.subr.mxu0 0.0
        %3436 = vmatpush1.msra.mxu0 0.0
        %3437 = vmatprep.subr.mxu0 0.0
        %3438 = vmatpush1.msra.mxu0 0.0
        %3439 = vmatprep.subr.mxu0 0.0
        %3440 = vmatpush1.msra.mxu0 0.0
        %3441 = vmatprep.subr.mxu0 0.0
        %3442 = vmatpush1.msra.mxu0 0.0
        %3443 = vmatprep.subr.mxu0 0.0
        %3444 = vmatpush1.msra.mxu0 0.0
        %3445 = vmatprep.subr.mxu0 0.0
        %3446 = vmatpush1.msra.mxu0 0.0
        %3447 = vmatprep.subr.mxu0 0.0
        %3448 = vmatpush1.msra.mxu0 0.0
        %3449 = vmatprep.subr.mxu0 0.0
        %3450 = vmatpush1.msra.mxu0 0.0
        %3451 = vmatprep.subr.mxu0 0.0
        %3452 = vmatpush1.msra.mxu0 0.0
        %3453 = vmatprep.subr.mxu0 0.0
        %3454 = vmatpush1.msra.mxu0 0.0
        %3455 = vmatprep.subr.mxu0 0.0
        %3456 = vmatpush1.msra.mxu0 0.0
        %3457 = vmatprep.subr.mxu0 0.0
        %3458 = vmatpush1.msra.mxu0 0.0
        %3459 = vmatprep.subr.mxu0 0.0
        %3460 = vmatpush1.msra.mxu0 0.0
        %3461 = vmatprep.subr.mxu0 0.0
        %3462 = vmatpush1.msra.mxu0 0.0
        %3463 = vmatprep.subr.mxu0 0.0
        %3464 = vmatpush1.msra.mxu0 0.0
        %3465 = vmatprep.subr.mxu0 0.0
        %3466 = vmatpush1.msra.mxu0 0.0
        %3467 = vmatprep.subr.mxu0 0.0
        %3468 = vmatpush1.msra.mxu0 0.0
        %3469 = vmatprep.subr.mxu0 0.0
        %3470 = vmatpush1.msra.mxu0 0.0
        %3471 = vmatprep.subr.mxu0 0.0
        %3472 = vmatpush1.msra.mxu0 0.0
        %3473 = vmatprep.subr.mxu0 0.0
        %3474 = vmatpush1.msra.mxu0 0.0
        %3475 = vmatprep.subr.mxu0 0.0
        %3476 = vmatpush1.msra.mxu0 0.0
        %3477 = vmatprep.subr.mxu0 0.0
        %3478 = vmatpush1.msra.mxu0 0.0
        %3479 = vmatprep.subr.mxu0 0.0
        %3480 = vmatpush1.msra.mxu0 0.0
        %3481 = vmatprep.mubr.f32.mxu0 0.0
        %3482 = vmatmul.mubr.f32.gmra.mrb[0].mxu0 %v3319
        %v3483 = vpop.f32.mrb[0].mxu0
        %v3484 = vadd.f32 0.0, %v3483
        %v3485 = vpop.f32.mrb[0].mxu0
        %3486 = vmatprep.mubr.f32.mxu0 0.0
        %3487 = vmatmul.mubr.f32.gmra.mrb[0].mxu0 %v3322
        %v3488 = vpop.f32.mrb[0].mxu0
        %v3489 = vadd.f32 0.0, %v3488
        %v3490 = vpop.f32.mrb[0].mxu0
        %3491 = vmatprep.mubr.f32.mxu0 0.0
        %3492 = vmatmul.mubr.f32.gmra.mrb[0].mxu0 %v3325
        %v3493 = vpop.f32.mrb[0].mxu0
        %v3494 = vadd.f32 0.0, %v3493
        %v3495 = vpop.f32.mrb[0].mxu0
        %3496 = vmatprep.mubr.f32.mxu0 0.0
        %3497 = vmatmul.mubr.f32.gmra.mrb[0].mxu0 %v3328
        %v3498 = vpop.f32.mrb[0].mxu0
        %v3499 = vadd.f32 0.0, %v3498
        %v3500 = vpop.f32.mrb[0].mxu0
        %3501 = vmatprep.mubr.f32.mxu0 0.0
        %3502 = vmatmul.mubr.f32.gmra.mrb[0].mxu0 %v3331
        %v3503 = vpop.f32.mrb[0].mxu0
        %v3504 = vadd.f32 0.0, %v3503
        %v3505 = vpop.f32.mrb[0].mxu0
        %3506 = vmatprep.mubr.f32.mxu0 0.0
        %3507 = vmatmul.mubr.f32.gmra.mrb[0].mxu0 %v3334
        %v3508 = vpop.f32.mrb[0].mxu0
        %v3509 = vadd.f32 0.0, %v3508
        %v3510 = vpop.f32.mrb[0].mxu0
        %3511 = vmatprep.mubr.f32.mxu0 0.0
        %3512 = vmatmul.mubr.f32.gmra.mrb[0].mxu0 %v3337
        %v3513 = vpop.f32.mrb[0].mxu0
        %v3514 = vadd.f32 0.0, %v3513
        %v3515 = vpop.f32.mrb[0].mxu0
        %3516 = vmatprep.mubr.f32.mxu0 0.0
        %3517 = vmatmul.mubr.f32.gmra.mrb[0].mxu0 %v3340
        %v3518 = vpop.f32.mrb[0].mxu0
        %v3519 = vadd.f32 0.0, %v3518
        %v3520 = vpop.f32.mrb[0].mxu0
        %3521 = vmatprep.mubr.f32.mxu0 0.0
        %3522 = vmatmul.mubr.f32.gmra.mrb[0].mxu0 %v3343
        %v3523 = vpop.f32.mrb[0].mxu0
        %v3524 = vadd.f32 0.0, %v3523
        %v3525 = vpop.f32.mrb[0].mxu0
        %3526 = vmatprep.mubr.f32.mxu0 0.0
        %3527 = vmatmul.mubr.f32.gmra.mrb[0].mxu0 %v3346
        %v3528 = vpop.f32.mrb[0].mxu0
        %v3529 = vadd.f32 0.0, %v3528
        %v3530 = vpop.f32.mrb[0].mxu0
        %3531 = vmatprep.mubr.f32.mxu0 0.0
        %3532 = vmatmul.mubr.f32.gmra.mrb[0].mxu0 %v3349
        %v3533 = vpop.f32.mrb[0].mxu0
        %v3534 = vadd.f32 0.0, %v3533
        %v3535 = vpop.f32.mrb[0].mxu0
        %3536 = vmatprep.mubr.f32.mxu0 0.0
        %3537 = vmatmul.mubr.f32.gmra.mrb[0].mxu0 %v3352
        %v3538 = vpop.f32.mrb[0].mxu0
        %v3539 = vadd.f32 0.0, %v3538
        %v3540 = vpop.f32.mrb[0].mxu0
        %3541 = vmatprep.mubr.f32.mxu0 0.0
        %3542 = vmatmul.mubr.f32.gmra.mrb[0].mxu0 %v3355
        %v3543 = vpop.f32.mrb[0].mxu0
        %v3544 = vadd.f32 0.0, %v3543
        %v3545 = vpop.f32.mrb[0].mxu0
        %3546 = vmatprep.mubr.f32.mxu0 0.0
        %3547 = vmatmul.mubr.f32.gmra.mrb[0].mxu0 %v3358
        %v3548 = vpop.f32.mrb[0].mxu0
        %v3549 = vadd.f32 0.0, %v3548
        %v3550 = vpop.f32.mrb[0].mxu0
        %3551 = vmatprep.mubr.f32.mxu0 0.0
        %3552 = vmatmul.mubr.f32.gmra.mrb[0].mxu0 %v3361
        %v3553 = vpop.f32.mrb[0].mxu0
        %v3554 = vadd.f32 0.0, %v3553
        %v3555 = vpop.f32.mrb[0].mxu0
        %3556 = vmatprep.mubr.f32.mxu0 0.0
        %3557 = vmatmul.mubr.f32.gmra.mrb[0].mxu0 %v3364
        %v3558 = vpop.f32.mrb[0].mxu0
        %v3559 = vadd.f32 0.0, %v3558
        %v3560 = vpop.f32.mrb[0].mxu0
        %3561 = vmatprep.mubr.f32.mxu0 0.0
        %3562 = vmatmul.mubr.f32.gmra.mrb[0].mxu0 %v3367
        %v3563 = vpop.f32.mrb[0].mxu0
        %v3564 = vadd.f32 0.0, %v3563
        %v3565 = vpop.f32.mrb[0].mxu0
        %3566 = vmatprep.mubr.f32.mxu0 0.0
        %3567 = vmatmul.mubr.f32.gmra.mrb[0].mxu0 %v3370
        %v3568 = vpop.f32.mrb[0].mxu0
        %v3569 = vadd.f32 0.0, %v3568
        %v3570 = vpop.f32.mrb[0].mxu0
        %3571 = vmatprep.mubr.f32.mxu0 0.0
        %3572 = vmatmul.mubr.f32.gmra.mrb[0].mxu0 %v3373
        %v3573 = vpop.f32.mrb[0].mxu0
        %v3574 = vadd.f32 0.0, %v3573
        %v3575 = vpop.f32.mrb[0].mxu0
        %3576 = vmatprep.mubr.f32.mxu0 0.0
        %3577 = vmatmul.mubr.f32.gmra.mrb[0].mxu0 %v3376
        %v3578 = vpop.f32.mrb[0].mxu0
        %v3579 = vadd.f32 0.0, %v3578
        %v3580 = vpop.f32.mrb[0].mxu0
        %3581 = vmatprep.mubr.f32.mxu0 0.0
        %3582 = vmatmul.mubr.f32.gmra.mrb[0].mxu0 %v3379
        %v3583 = vpop.f32.mrb[0].mxu0
        %v3584 = vadd.f32 0.0, %v3583
        %v3585 = vpop.f32.mrb[0].mxu0
        %3586 = vmatprep.mubr.f32.mxu0 0.0
        %3587 = vmatmul.mubr.f32.gmra.mrb[0].mxu0 %v3382
        %v3588 = vpop.f32.mrb[0].mxu0
        %v3589 = vadd.f32 0.0, %v3588
        %v3590 = vpop.f32.mrb[0].mxu0
        %3591 = vmatprep.mubr.f32.mxu0 0.0
        %3592 = vmatmul.mubr.f32.gmra.mrb[0].mxu0 %v3385
        %v3593 = vpop.f32.mrb[0].mxu0
        %v3594 = vadd.f32 0.0, %v3593
        %v3595 = vpop.f32.mrb[0].mxu0
        %3596 = vmatprep.mubr.f32.mxu0 0.0
        %3597 = vmatmul.mubr.f32.gmra.mrb[0].mxu0 %v3388
        %v3598 = vpop.f32.mrb[0].mxu0
        %v3599 = vadd.f32 0.0, %v3598
        %v3600 = vpop.f32.mrb[0].mxu0
        %3601 = vmatprep.mubr.f32.mxu0 0.0
        %3602 = vmatmul.mubr.f32.gmra.mrb[0].mxu0 %v3391
        %v3603 = vpop.f32.mrb[0].mxu0
        %v3604 = vadd.f32 0.0, %v3603
        %v3605 = vpop.f32.mrb[0].mxu0
        %3606 = vmatprep.mubr.f32.mxu0 0.0
        %3607 = vmatmul.mubr.f32.gmra.mrb[0].mxu0 %v3394
        %v3608 = vpop.f32.mrb[0].mxu0
        %v3609 = vadd.f32 0.0, %v3608
        %v3610 = vpop.f32.mrb[0].mxu0
        %3611 = vmatprep.mubr.f32.mxu0 0.0
        %3612 = vmatmul.mubr.f32.gmra.mrb[0].mxu0 %v3397
        %v3613 = vpop.f32.mrb[0].mxu0
        %v3614 = vadd.f32 0.0, %v3613
        %v3615 = vpop.f32.mrb[0].mxu0
        %3616 = vmatprep.mubr.f32.mxu0 0.0
        %3617 = vmatmul.mubr.f32.gmra.mrb[0].mxu0 %v3400
        %v3618 = vpop.f32.mrb[0].mxu0
        %v3619 = vadd.f32 0.0, %v3618
        %v3620 = vpop.f32.mrb[0].mxu0
        %3621 = vmatprep.mubr.f32.mxu0 0.0
        %3622 = vmatmul.mubr.f32.gmra.mrb[0].mxu0 %v3403
        %v3623 = vpop.f32.mrb[0].mxu0
        %v3624 = vadd.f32 0.0, %v3623
        %v3625 = vpop.f32.mrb[0].mxu0
        %3626 = vmatprep.mubr.f32.mxu0 0.0
        %3627 = vmatmul.mubr.f32.gmra.mrb[0].mxu0 %v3406
        %v3628 = vpop.f32.mrb[0].mxu0
        %v3629 = vadd.f32 0.0, %v3628
        %v3630 = vpop.f32.mrb[0].mxu0
        %3631 = vmatprep.mubr.f32.mxu0 0.0
        %3632 = vmatmul.mubr.f32.gmra.mrb[0].mxu0 %v3409
        %v3633 = vpop.f32.mrb[0].mxu0
        %v3634 = vadd.f32 0.0, %v3633
        %v3635 = vpop.f32.mrb[0].mxu0
        %3636 = vmatprep.mubr.f32.mxu0 0.0
        %3637 = vmatmul.mubr.f32.gmra.mrb[0].mxu0 %v3412
        %v3638 = vpop.f32.mrb[0].mxu0
        %v3639 = vadd.f32 0.0, %v3638
        %v3640 = vpop.f32.mrb[0].mxu0
        %3641 = vdwg.mxu0
        %v3642 = vadd.f32 %v3251, %v3484
        %v3643 = vadd.f32 %v3252, %v3489
        %v3644 = vadd.f32 %v3253, %v3494
        %v3645 = vadd.f32 %v3254, %v3499
        %v3646 = vadd.f32 %v3255, %v3504
        %v3647 = vadd.f32 %v3256, %v3509
        %v3648 = vadd.f32 %v3257, %v3514
        %v3649 = vadd.f32 %v3258, %v3519
        %v3650 = vadd.f32 %v3259, %v3524
        %v3651 = vadd.f32 %v3260, %v3529
        %v3652 = vadd.f32 %v3261, %v3534
        %v3653 = vadd.f32 %v3262, %v3539
        %v3654 = vadd.f32 %v3263, %v3544
        %v3655 = vadd.f32 %v3264, %v3549
        %v3656 = vadd.f32 %v3265, %v3554
        %v3657 = vadd.f32 %v3266, %v3559
        %v3658 = vadd.f32 %v3267, %v3564
        %v3659 = vadd.f32 %v3268, %v3569
        %v3660 = vadd.f32 %v3269, %v3574
        %v3661 = vadd.f32 %v3270, %v3579
        %v3662 = vadd.f32 %v3271, %v3584
        %v3663 = vadd.f32 %v3272, %v3589
        %v3664 = vadd.f32 %v3273, %v3594
        %v3665 = vadd.f32 %v3274, %v3599
        %v3666 = vadd.f32 %v3275, %v3604
        %v3667 = vadd.f32 %v3276, %v3609
        %v3668 = vadd.f32 %v3277, %v3614
        %v3669 = vadd.f32 %v3278, %v3619
        %v3670 = vadd.f32 %v3279, %v3624
        %v3671 = vadd.f32 %v3280, %v3629
        %v3672 = vadd.f32 %v3281, %v3634
        %v3673 = vadd.f32 %v3282, %v3639
        %v3674 = vld [vmem:[%s3283 + $0x1] sm:$0xff]
        %v3675 = vld [vmem:[%s3283 + $0x9] sm:$0xff]
        %v3676 = vld [vmem:[%s3283 + $0x19] sm:$0xff]
        %v3677 = vld [vmem:[%s3283 + $0x21] sm:$0xff]
        %v3678 = vld [vmem:[%s3283 + $0x31] sm:$0xff]
        %v3679 = vld [vmem:[%s3283 + $0x39] sm:$0xff]
        %v3680 = vld [vmem:[%s3283 + $0x49] sm:$0xff]
        %v3681 = vld [vmem:[%s3283 + $0x51] sm:$0xff]
        %v3682 = vld [vmem:[%s3283 + $0x61] sm:$0xff]
        %v3683 = vld [vmem:[%s3283 + $0x69] sm:$0xff]
        %v3684 = vld [vmem:[%s3283 + $0x79] sm:$0xff]
        %v3685 = vld [vmem:[%s3283 + $0x81] sm:$0xff]
        %v3686 = vld [vmem:[%s3283 + $0x91] sm:$0xff]
        %v3687 = vld [vmem:[%s3283 + $0x99] sm:$0xff]
        %v3688 = vld [vmem:[%s3283 + $0xa9] sm:$0xff]
        %v3689 = vld [vmem:[%s3283 + $0xb1] sm:$0xff]
        %v3690 = vld [vmem:[%s3283 + $0xc1] sm:$0xff]
        %v3691 = vld [vmem:[%s3283 + $0xc9] sm:$0xff]
        %v3692 = vld [vmem:[%s3283 + $0xd9] sm:$0xff]
        %v3693 = vld [vmem:[%s3283 + $0xe1] sm:$0xff]
        %v3694 = vld [vmem:[%s3283 + $0xf1] sm:$0xff]
        %v3695 = vld [vmem:[%s3283 + $0xf9] sm:$0xff]
        %v3696 = vld [vmem:[%s3283 + $0x109] sm:$0xff]
        %v3697 = vld [vmem:[%s3283 + $0x111] sm:$0xff]
        %v3698 = vld [vmem:[%s3283 + $0x121] sm:$0xff]
        %v3699 = vld [vmem:[%s3283 + $0x129] sm:$0xff]
        %v3700 = vld [vmem:[%s3283 + $0x139] sm:$0xff]
        %v3701 = vld [vmem:[%s3283 + $0x141] sm:$0xff]
        %v3702 = vld [vmem:[%s3283 + $0x151] sm:$0xff]
        %v3703 = vld [vmem:[%s3283 + $0x159] sm:$0xff]
        %v3704 = vld [vmem:[%s3283 + $0x169] sm:$0xff]
        %v3705 = vld [vmem:[%s3283 + $0x171] sm:$0xff]
        %s3706 = scalar_lea.vmem %s3, 28
        %v3707 = vld [vmem:[%s3706] sm:$0xf]
        %v3709 = vsel %vm703, %v3674, 0
        %v3712 = vsel %vm703, %v3675, 0
        %v3715 = vsel %vm703, %v3676, 0
        %v3718 = vsel %vm703, %v3677, 0
        %v3721 = vsel %vm703, %v3678, 0
        %v3724 = vsel %vm703, %v3679, 0
        %v3727 = vsel %vm703, %v3680, 0
        %v3730 = vsel %vm703, %v3681, 0
        %v3733 = vsel %vm703, %v3682, 0
        %v3736 = vsel %vm703, %v3683, 0
        %v3739 = vsel %vm703, %v3684, 0
        %v3742 = vsel %vm703, %v3685, 0
        %v3745 = vsel %vm703, %v3686, 0
        %v3748 = vsel %vm703, %v3687, 0
        %v3751 = vsel %vm703, %v3688, 0
        %v3754 = vsel %vm703, %v3689, 0
        %v3757 = vsel %vm703, %v3690, 0
        %v3760 = vsel %vm703, %v3691, 0
        %v3763 = vsel %vm703, %v3692, 0
        %v3766 = vsel %vm703, %v3693, 0
        %v3769 = vsel %vm703, %v3694, 0
        %v3772 = vsel %vm703, %v3695, 0
        %v3775 = vsel %vm703, %v3696, 0
        %v3778 = vsel %vm703, %v3697, 0
        %v3781 = vsel %vm703, %v3698, 0
        %v3784 = vsel %vm703, %v3699, 0
        %v3787 = vsel %vm703, %v3700, 0
        %v3790 = vsel %vm703, %v3701, 0
        %v3793 = vsel %vm703, %v3702, 0
        %v3796 = vsel %vm703, %v3703, 0
        %v3799 = vsel %vm703, %v3704, 0
        %v3802 = vsel %vm703, %v3705, 0
        %v3805 = vsel %vm1170, %v3707, 0
        %3807 = vmatprep.subr.mxu0 0.0
        %3808 = vmatpush1.msra.mxu0 %v3805
        %3809 = vmatprep.subr.mxu0 0.0
        %3810 = vmatpush1.msra.mxu0 0.0
        %3811 = vmatprep.subr.mxu0 0.0
        %3812 = vmatpush1.msra.mxu0 0.0
        %3813 = vmatprep.subr.mxu0 0.0
        %3814 = vmatpush1.msra.mxu0 0.0
        %3815 = vmatprep.subr.mxu0 0.0
        %3816 = vmatpush1.msra.mxu0 0.0
        %3817 = vmatprep.subr.mxu0 0.0
        %3818 = vmatpush1.msra.mxu0 0.0
        %3819 = vmatprep.subr.mxu0 0.0
        %3820 = vmatpush1.msra.mxu0 0.0
        %3821 = vmatprep.subr.mxu0 0.0
        %3822 = vmatpush1.msra.mxu0 0.0
        %3823 = vmatprep.subr.mxu0 0.0
        %3824 = vmatpush1.msra.mxu0 0.0
        %3825 = vmatprep.subr.mxu0 0.0
        %3826 = vmatpush1.msra.mxu0 0.0
        %3827 = vmatprep.subr.mxu0 0.0
        %3828 = vmatpush1.msra.mxu0 0.0
        %3829 = vmatprep.subr.mxu0 0.0
        %3830 = vmatpush1.msra.mxu0 0.0
        %3831 = vmatprep.subr.mxu0 0.0
        %3832 = vmatpush1.msra.mxu0 0.0
        %3833 = vmatprep.subr.mxu0 0.0
        %3834 = vmatpush1.msra.mxu0 0.0
        %3835 = vmatprep.subr.mxu0 0.0
        %3836 = vmatpush1.msra.mxu0 0.0
        %3837 = vmatprep.subr.mxu0 0.0
        %3838 = vmatpush1.msra.mxu0 0.0
        %3839 = vmatprep.subr.mxu0 0.0
        %3840 = vmatpush1.msra.mxu0 0.0
        %3841 = vmatprep.subr.mxu0 0.0
        %3842 = vmatpush1.msra.mxu0 0.0
        %3843 = vmatprep.subr.mxu0 0.0
        %3844 = vmatpush1.msra.mxu0 0.0
        %3845 = vmatprep.subr.mxu0 0.0
        %3846 = vmatpush1.msra.mxu0 0.0
        %3847 = vmatprep.subr.mxu0 0.0
        %3848 = vmatpush1.msra.mxu0 0.0
        %3849 = vmatprep.subr.mxu0 0.0
        %3850 = vmatpush1.msra.mxu0 0.0
        %3851 = vmatprep.subr.mxu0 0.0
        %3852 = vmatpush1.msra.mxu0 0.0
        %3853 = vmatprep.subr.mxu0 0.0
        %3854 = vmatpush1.msra.mxu0 0.0
        %3855 = vmatprep.subr.mxu0 0.0
        %3856 = vmatpush1.msra.mxu0 0.0
        %3857 = vmatprep.subr.mxu0 0.0
        %3858 = vmatpush1.msra.mxu0 0.0
        %3859 = vmatprep.subr.mxu0 0.0
        %3860 = vmatpush1.msra.mxu0 0.0
        %3861 = vmatprep.subr.mxu0 0.0
        %3862 = vmatpush1.msra.mxu0 0.0
        %3863 = vmatprep.subr.mxu0 0.0
        %3864 = vmatpush1.msra.mxu0 0.0
        %3865 = vmatprep.subr.mxu0 0.0
        %3866 = vmatpush1.msra.mxu0 0.0
        %3867 = vmatprep.subr.mxu0 0.0
        %3868 = vmatpush1.msra.mxu0 0.0
        %3869 = vmatprep.subr.mxu0 0.0
        %3870 = vmatpush1.msra.mxu0 0.0
        %3871 = vmatprep.mubr.f32.mxu0 0.0
        %3872 = vmatmul.mubr.f32.gmra.mrb[0].mxu0 %v3709
        %v3873 = vpop.f32.mrb[0].mxu0
        %v3874 = vadd.f32 0.0, %v3873
        %v3875 = vpop.f32.mrb[0].mxu0
        %3876 = vmatprep.mubr.f32.mxu0 0.0
        %3877 = vmatmul.mubr.f32.gmra.mrb[0].mxu0 %v3712
        %v3878 = vpop.f32.mrb[0].mxu0
        %v3879 = vadd.f32 0.0, %v3878
        %v3880 = vpop.f32.mrb[0].mxu0
        %3881 = vmatprep.mubr.f32.mxu0 0.0
        %3882 = vmatmul.mubr.f32.gmra.mrb[0].mxu0 %v3715
        %v3883 = vpop.f32.mrb[0].mxu0
        %v3884 = vadd.f32 0.0, %v3883
        %v3885 = vpop.f32.mrb[0].mxu0
        %3886 = vmatprep.mubr.f32.mxu0 0.0
        %3887 = vmatmul.mubr.f32.gmra.mrb[0].mxu0 %v3718
        %v3888 = vpop.f32.mrb[0].mxu0
        %v3889 = vadd.f32 0.0, %v3888
        %v3890 = vpop.f32.mrb[0].mxu0
        %3891 = vmatprep.mubr.f32.mxu0 0.0
        %3892 = vmatmul.mubr.f32.gmra.mrb[0].mxu0 %v3721
        %v3893 = vpop.f32.mrb[0].mxu0
        %v3894 = vadd.f32 0.0, %v3893
        %v3895 = vpop.f32.mrb[0].mxu0
        %3896 = vmatprep.mubr.f32.mxu0 0.0
        %3897 = vmatmul.mubr.f32.gmra.mrb[0].mxu0 %v3724
        %v3898 = vpop.f32.mrb[0].mxu0
        %v3899 = vadd.f32 0.0, %v3898
        %v3900 = vpop.f32.mrb[0].mxu0
        %3901 = vmatprep.mubr.f32.mxu0 0.0
        %3902 = vmatmul.mubr.f32.gmra.mrb[0].mxu0 %v3727
        %v3903 = vpop.f32.mrb[0].mxu0
        %v3904 = vadd.f32 0.0, %v3903
        %v3905 = vpop.f32.mrb[0].mxu0
        %3906 = vmatprep.mubr.f32.mxu0 0.0
        %3907 = vmatmul.mubr.f32.gmra.mrb[0].mxu0 %v3730
        %v3908 = vpop.f32.mrb[0].mxu0
        %v3909 = vadd.f32 0.0, %v3908
        %v3910 = vpop.f32.mrb[0].mxu0
        %3911 = vmatprep.mubr.f32.mxu0 0.0
        %3912 = vmatmul.mubr.f32.gmra.mrb[0].mxu0 %v3733
        %v3913 = vpop.f32.mrb[0].mxu0
        %v3914 = vadd.f32 0.0, %v3913
        %v3915 = vpop.f32.mrb[0].mxu0
        %3916 = vmatprep.mubr.f32.mxu0 0.0
        %3917 = vmatmul.mubr.f32.gmra.mrb[0].mxu0 %v3736
        %v3918 = vpop.f32.mrb[0].mxu0
        %v3919 = vadd.f32 0.0, %v3918
        %v3920 = vpop.f32.mrb[0].mxu0
        %3921 = vmatprep.mubr.f32.mxu0 0.0
        %3922 = vmatmul.mubr.f32.gmra.mrb[0].mxu0 %v3739
        %v3923 = vpop.f32.mrb[0].mxu0
        %v3924 = vadd.f32 0.0, %v3923
        %v3925 = vpop.f32.mrb[0].mxu0
        %3926 = vmatprep.mubr.f32.mxu0 0.0
        %3927 = vmatmul.mubr.f32.gmra.mrb[0].mxu0 %v3742
        %v3928 = vpop.f32.mrb[0].mxu0
        %v3929 = vadd.f32 0.0, %v3928
        %v3930 = vpop.f32.mrb[0].mxu0
        %3931 = vmatprep.mubr.f32.mxu0 0.0
        %3932 = vmatmul.mubr.f32.gmra.mrb[0].mxu0 %v3745
        %v3933 = vpop.f32.mrb[0].mxu0
        %v3934 = vadd.f32 0.0, %v3933
        %v3935 = vpop.f32.mrb[0].mxu0
        %3936 = vmatprep.mubr.f32.mxu0 0.0
        %3937 = vmatmul.mubr.f32.gmra.mrb[0].mxu0 %v3748
        %v3938 = vpop.f32.mrb[0].mxu0
        %v3939 = vadd.f32 0.0, %v3938
        %v3940 = vpop.f32.mrb[0].mxu0
        %3941 = vmatprep.mubr.f32.mxu0 0.0
        %3942 = vmatmul.mubr.f32.gmra.mrb[0].mxu0 %v3751
        %v3943 = vpop.f32.mrb[0].mxu0
        %v3944 = vadd.f32 0.0, %v3943
        %v3945 = vpop.f32.mrb[0].mxu0
        %3946 = vmatprep.mubr.f32.mxu0 0.0
        %3947 = vmatmul.mubr.f32.gmra.mrb[0].mxu0 %v3754
        %v3948 = vpop.f32.mrb[0].mxu0
        %v3949 = vadd.f32 0.0, %v3948
        %v3950 = vpop.f32.mrb[0].mxu0
        %3951 = vmatprep.mubr.f32.mxu0 0.0
        %3952 = vmatmul.mubr.f32.gmra.mrb[0].mxu0 %v3757
        %v3953 = vpop.f32.mrb[0].mxu0
        %v3954 = vadd.f32 0.0, %v3953
        %v3955 = vpop.f32.mrb[0].mxu0
        %3956 = vmatprep.mubr.f32.mxu0 0.0
        %3957 = vmatmul.mubr.f32.gmra.mrb[0].mxu0 %v3760
        %v3958 = vpop.f32.mrb[0].mxu0
        %v3959 = vadd.f32 0.0, %v3958
        %v3960 = vpop.f32.mrb[0].mxu0
        %3961 = vmatprep.mubr.f32.mxu0 0.0
        %3962 = vmatmul.mubr.f32.gmra.mrb[0].mxu0 %v3763
        %v3963 = vpop.f32.mrb[0].mxu0
        %v3964 = vadd.f32 0.0, %v3963
        %v3965 = vpop.f32.mrb[0].mxu0
        %3966 = vmatprep.mubr.f32.mxu0 0.0
        %3967 = vmatmul.mubr.f32.gmra.mrb[0].mxu0 %v3766
        %v3968 = vpop.f32.mrb[0].mxu0
        %v3969 = vadd.f32 0.0, %v3968
        %v3970 = vpop.f32.mrb[0].mxu0
        %3971 = vmatprep.mubr.f32.mxu0 0.0
        %3972 = vmatmul.mubr.f32.gmra.mrb[0].mxu0 %v3769
        %v3973 = vpop.f32.mrb[0].mxu0
        %v3974 = vadd.f32 0.0, %v3973
        %v3975 = vpop.f32.mrb[0].mxu0
        %3976 = vmatprep.mubr.f32.mxu0 0.0
        %3977 = vmatmul.mubr.f32.gmra.mrb[0].mxu0 %v3772
        %v3978 = vpop.f32.mrb[0].mxu0
        %v3979 = vadd.f32 0.0, %v3978
        %v3980 = vpop.f32.mrb[0].mxu0
        %3981 = vmatprep.mubr.f32.mxu0 0.0
        %3982 = vmatmul.mubr.f32.gmra.mrb[0].mxu0 %v3775
        %v3983 = vpop.f32.mrb[0].mxu0
        %v3984 = vadd.f32 0.0, %v3983
        %v3985 = vpop.f32.mrb[0].mxu0
        %3986 = vmatprep.mubr.f32.mxu0 0.0
        %3987 = vmatmul.mubr.f32.gmra.mrb[0].mxu0 %v3778
        %v3988 = vpop.f32.mrb[0].mxu0
        %v3989 = vadd.f32 0.0, %v3988
        %v3990 = vpop.f32.mrb[0].mxu0
        %3991 = vmatprep.mubr.f32.mxu0 0.0
        %3992 = vmatmul.mubr.f32.gmra.mrb[0].mxu0 %v3781
        %v3993 = vpop.f32.mrb[0].mxu0
        %v3994 = vadd.f32 0.0, %v3993
        %v3995 = vpop.f32.mrb[0].mxu0
        %3996 = vmatprep.mubr.f32.mxu0 0.0
        %3997 = vmatmul.mubr.f32.gmra.mrb[0].mxu0 %v3784
        %v3998 = vpop.f32.mrb[0].mxu0
        %v3999 = vadd.f32 0.0, %v3998
        %v4000 = vpop.f32.mrb[0].mxu0
        %4001 = vmatprep.mubr.f32.mxu0 0.0
        %4002 = vmatmul.mubr.f32.gmra.mrb[0].mxu0 %v3787
        %v4003 = vpop.f32.mrb[0].mxu0
        %v4004 = vadd.f32 0.0, %v4003
        %v4005 = vpop.f32.mrb[0].mxu0
        %4006 = vmatprep.mubr.f32.mxu0 0.0
        %4007 = vmatmul.mubr.f32.gmra.mrb[0].mxu0 %v3790
        %v4008 = vpop.f32.mrb[0].mxu0
        %v4009 = vadd.f32 0.0, %v4008
        %v4010 = vpop.f32.mrb[0].mxu0
        %4011 = vmatprep.mubr.f32.mxu0 0.0
        %4012 = vmatmul.mubr.f32.gmra.mrb[0].mxu0 %v3793
        %v4013 = vpop.f32.mrb[0].mxu0
        %v4014 = vadd.f32 0.0, %v4013
        %v4015 = vpop.f32.mrb[0].mxu0
        %4016 = vmatprep.mubr.f32.mxu0 0.0
        %4017 = vmatmul.mubr.f32.gmra.mrb[0].mxu0 %v3796
        %v4018 = vpop.f32.mrb[0].mxu0
        %v4019 = vadd.f32 0.0, %v4018
        %v4020 = vpop.f32.mrb[0].mxu0
        %4021 = vmatprep.mubr.f32.mxu0 0.0
        %4022 = vmatmul.mubr.f32.gmra.mrb[0].mxu0 %v3799
        %v4023 = vpop.f32.mrb[0].mxu0
        %v4024 = vadd.f32 0.0, %v4023
        %v4025 = vpop.f32.mrb[0].mxu0
        %4026 = vmatprep.mubr.f32.mxu0 0.0
        %4027 = vmatmul.mubr.f32.gmra.mrb[0].mxu0 %v3802
        %v4028 = vpop.f32.mrb[0].mxu0
        %v4029 = vadd.f32 0.0, %v4028
        %v4030 = vpop.f32.mrb[0].mxu0
        %4031 = vdwg.mxu0
        %v4032 = vadd.f32 %v3642, %v3874
        %v4033 = vadd.f32 %v3643, %v3879
        %v4034 = vadd.f32 %v3644, %v3884
        %v4035 = vadd.f32 %v3645, %v3889
        %v4036 = vadd.f32 %v3646, %v3894
        %v4037 = vadd.f32 %v3647, %v3899
        %v4038 = vadd.f32 %v3648, %v3904
        %v4039 = vadd.f32 %v3649, %v3909
        %v4040 = vadd.f32 %v3650, %v3914
        %v4041 = vadd.f32 %v3651, %v3919
        %v4042 = vadd.f32 %v3652, %v3924
        %v4043 = vadd.f32 %v3653, %v3929
        %v4044 = vadd.f32 %v3654, %v3934
        %v4045 = vadd.f32 %v3655, %v3939
        %v4046 = vadd.f32 %v3656, %v3944
        %v4047 = vadd.f32 %v3657, %v3949
        %v4048 = vadd.f32 %v3658, %v3954
        %v4049 = vadd.f32 %v3659, %v3959
        %v4050 = vadd.f32 %v3660, %v3964
        %v4051 = vadd.f32 %v3661, %v3969
        %v4052 = vadd.f32 %v3662, %v3974
        %v4053 = vadd.f32 %v3663, %v3979
        %v4054 = vadd.f32 %v3664, %v3984
        %v4055 = vadd.f32 %v3665, %v3989
        %v4056 = vadd.f32 %v3666, %v3994
        %v4057 = vadd.f32 %v3667, %v3999
        %v4058 = vadd.f32 %v3668, %v4004
        %v4059 = vadd.f32 %v3669, %v4009
        %v4060 = vadd.f32 %v3670, %v4014
        %v4061 = vadd.f32 %v3671, %v4019
        %v4062 = vadd.f32 %v3672, %v4024
        %v4063 = vadd.f32 %v3673, %v4029
        %v4064 = vld [vmem:[%s3283 + $0x2] sm:$0xff]
        %v4065 = vld [vmem:[%s3283 + $0xa] sm:$0xff]
        %v4066 = vld [vmem:[%s3283 + $0x1a] sm:$0xff]
        %v4067 = vld [vmem:[%s3283 + $0x22] sm:$0xff]
        %v4068 = vld [vmem:[%s3283 + $0x32] sm:$0xff]
        %v4069 = vld [vmem:[%s3283 + $0x3a] sm:$0xff]
        %v4070 = vld [vmem:[%s3283 + $0x4a] sm:$0xff]
        %v4071 = vld [vmem:[%s3283 + $0x52] sm:$0xff]
        %v4072 = vld [vmem:[%s3283 + $0x62] sm:$0xff]
        %v4073 = vld [vmem:[%s3283 + $0x6a] sm:$0xff]
        %v4074 = vld [vmem:[%s3283 + $0x7a] sm:$0xff]
        %v4075 = vld [vmem:[%s3283 + $0x82] sm:$0xff]
        %v4076 = vld [vmem:[%s3283 + $0x92] sm:$0xff]
        %v4077 = vld [vmem:[%s3283 + $0x9a] sm:$0xff]
        %v4078 = vld [vmem:[%s3283 + $0xaa] sm:$0xff]
        %v4079 = vld [vmem:[%s3283 + $0xb2] sm:$0xff]
        %v4080 = vld [vmem:[%s3283 + $0xc2] sm:$0xff]
        %v4081 = vld [vmem:[%s3283 + $0xca] sm:$0xff]
        %v4082 = vld [vmem:[%s3283 + $0xda] sm:$0xff]
        %v4083 = vld [vmem:[%s3283 + $0xe2] sm:$0xff]
        %v4084 = vld [vmem:[%s3283 + $0xf2] sm:$0xff]
        %v4085 = vld [vmem:[%s3283 + $0xfa] sm:$0xff]
        %v4086 = vld [vmem:[%s3283 + $0x10a] sm:$0xff]
        %v4087 = vld [vmem:[%s3283 + $0x112] sm:$0xff]
        %v4088 = vld [vmem:[%s3283 + $0x122] sm:$0xff]
        %v4089 = vld [vmem:[%s3283 + $0x12a] sm:$0xff]
        %v4090 = vld [vmem:[%s3283 + $0x13a] sm:$0xff]
        %v4091 = vld [vmem:[%s3283 + $0x142] sm:$0xff]
        %v4092 = vld [vmem:[%s3283 + $0x152] sm:$0xff]
        %v4093 = vld [vmem:[%s3283 + $0x15a] sm:$0xff]
        %v4094 = vld [vmem:[%s3283 + $0x16a] sm:$0xff]
        %v4095 = vld [vmem:[%s3283 + $0x172] sm:$0xff]
        %s4096 = scalar_lea.vmem %s3, 32
        %v4097 = vld [vmem:[%s4096] sm:$0xf]
        %v4099 = vsel %vm703, %v4064, 0
        %v4102 = vsel %vm703, %v4065, 0
        %v4105 = vsel %vm703, %v4066, 0
        %v4108 = vsel %vm703, %v4067, 0
        %v4111 = vsel %vm703, %v4068, 0
        %v4114 = vsel %vm703, %v4069, 0
        %v4117 = vsel %vm703, %v4070, 0
        %v4120 = vsel %vm703, %v4071, 0
        %v4123 = vsel %vm703, %v4072, 0
        %v4126 = vsel %vm703, %v4073, 0
        %v4129 = vsel %vm703, %v4074, 0
        %v4132 = vsel %vm703, %v4075, 0
        %v4135 = vsel %vm703, %v4076, 0
        %v4138 = vsel %vm703, %v4077, 0
        %v4141 = vsel %vm703, %v4078, 0
        %v4144 = vsel %vm703, %v4079, 0
        %v4147 = vsel %vm703, %v4080, 0
        %v4150 = vsel %vm703, %v4081, 0
        %v4153 = vsel %vm703, %v4082, 0
        %v4156 = vsel %vm703, %v4083, 0
        %v4159 = vsel %vm703, %v4084, 0
        %v4162 = vsel %vm703, %v4085, 0
        %v4165 = vsel %vm703, %v4086, 0
        %v4168 = vsel %vm703, %v4087, 0
        %v4171 = vsel %vm703, %v4088, 0
        %v4174 = vsel %vm703, %v4089, 0
        %v4177 = vsel %vm703, %v4090, 0
        %v4180 = vsel %vm703, %v4091, 0
        %v4183 = vsel %vm703, %v4092, 0
        %v4186 = vsel %vm703, %v4093, 0
        %v4189 = vsel %vm703, %v4094, 0
        %v4192 = vsel %vm703, %v4095, 0
        %v4195 = vsel %vm1170, %v4097, 0
        %4197 = vmatprep.subr.mxu0 0.0
        %4198 = vmatpush1.msra.mxu0 %v4195
        %4199 = vmatprep.subr.mxu0 0.0
        %4200 = vmatpush1.msra.mxu0 0.0
        %4201 = vmatprep.subr.mxu0 0.0
        %4202 = vmatpush1.msra.mxu0 0.0
        %4203 = vmatprep.subr.mxu0 0.0
        %4204 = vmatpush1.msra.mxu0 0.0
        %4205 = vmatprep.subr.mxu0 0.0
        %4206 = vmatpush1.msra.mxu0 0.0
        %4207 = vmatprep.subr.mxu0 0.0
        %4208 = vmatpush1.msra.mxu0 0.0
        %4209 = vmatprep.subr.mxu0 0.0
        %4210 = vmatpush1.msra.mxu0 0.0
        %4211 = vmatprep.subr.mxu0 0.0
        %4212 = vmatpush1.msra.mxu0 0.0
        %4213 = vmatprep.subr.mxu0 0.0
        %4214 = vmatpush1.msra.mxu0 0.0
        %4215 = vmatprep.subr.mxu0 0.0
        %4216 = vmatpush1.msra.mxu0 0.0
        %4217 = vmatprep.subr.mxu0 0.0
        %4218 = vmatpush1.msra.mxu0 0.0
        %4219 = vmatprep.subr.mxu0 0.0
        %4220 = vmatpush1.msra.mxu0 0.0
        %4221 = vmatprep.subr.mxu0 0.0
        %4222 = vmatpush1.msra.mxu0 0.0
        %4223 = vmatprep.subr.mxu0 0.0
        %4224 = vmatpush1.msra.mxu0 0.0
        %4225 = vmatprep.subr.mxu0 0.0
        %4226 = vmatpush1.msra.mxu0 0.0
        %4227 = vmatprep.subr.mxu0 0.0
        %4228 = vmatpush1.msra.mxu0 0.0
        %4229 = vmatprep.subr.mxu0 0.0
        %4230 = vmatpush1.msra.mxu0 0.0
        %4231 = vmatprep.subr.mxu0 0.0
        %4232 = vmatpush1.msra.mxu0 0.0
        %4233 = vmatprep.subr.mxu0 0.0
        %4234 = vmatpush1.msra.mxu0 0.0
        %4235 = vmatprep.subr.mxu0 0.0
        %4236 = vmatpush1.msra.mxu0 0.0
        %4237 = vmatprep.subr.mxu0 0.0
        %4238 = vmatpush1.msra.mxu0 0.0
        %4239 = vmatprep.subr.mxu0 0.0
        %4240 = vmatpush1.msra.mxu0 0.0
        %4241 = vmatprep.subr.mxu0 0.0
        %4242 = vmatpush1.msra.mxu0 0.0
        %4243 = vmatprep.subr.mxu0 0.0
        %4244 = vmatpush1.msra.mxu0 0.0
        %4245 = vmatprep.subr.mxu0 0.0
        %4246 = vmatpush1.msra.mxu0 0.0
        %4247 = vmatprep.subr.mxu0 0.0
        %4248 = vmatpush1.msra.mxu0 0.0
        %4249 = vmatprep.subr.mxu0 0.0
        %4250 = vmatpush1.msra.mxu0 0.0
        %4251 = vmatprep.subr.mxu0 0.0
        %4252 = vmatpush1.msra.mxu0 0.0
        %4253 = vmatprep.subr.mxu0 0.0
        %4254 = vmatpush1.msra.mxu0 0.0
        %4255 = vmatprep.subr.mxu0 0.0
        %4256 = vmatpush1.msra.mxu0 0.0
        %4257 = vmatprep.subr.mxu0 0.0
        %4258 = vmatpush1.msra.mxu0 0.0
        %4259 = vmatprep.subr.mxu0 0.0
        %4260 = vmatpush1.msra.mxu0 0.0
        %4261 = vmatprep.mubr.f32.mxu0 0.0
        %4262 = vmatmul.mubr.f32.gmra.mrb[0].mxu0 %v4099
        %v4263 = vpop.f32.mrb[0].mxu0
        %v4264 = vadd.f32 0.0, %v4263
        %v4265 = vpop.f32.mrb[0].mxu0
        %4266 = vmatprep.mubr.f32.mxu0 0.0
        %4267 = vmatmul.mubr.f32.gmra.mrb[0].mxu0 %v4102
        %v4268 = vpop.f32.mrb[0].mxu0
        %v4269 = vadd.f32 0.0, %v4268
        %v4270 = vpop.f32.mrb[0].mxu0
        %4271 = vmatprep.mubr.f32.mxu0 0.0
        %4272 = vmatmul.mubr.f32.gmra.mrb[0].mxu0 %v4105
        %v4273 = vpop.f32.mrb[0].mxu0
        %v4274 = vadd.f32 0.0, %v4273
        %v4275 = vpop.f32.mrb[0].mxu0
        %4276 = vmatprep.mubr.f32.mxu0 0.0
        %4277 = vmatmul.mubr.f32.gmra.mrb[0].mxu0 %v4108
        %v4278 = vpop.f32.mrb[0].mxu0
        %v4279 = vadd.f32 0.0, %v4278
        %v4280 = vpop.f32.mrb[0].mxu0
        %4281 = vmatprep.mubr.f32.mxu0 0.0
        %4282 = vmatmul.mubr.f32.gmra.mrb[0].mxu0 %v4111
        %v4283 = vpop.f32.mrb[0].mxu0
        %v4284 = vadd.f32 0.0, %v4283
        %v4285 = vpop.f32.mrb[0].mxu0
        %4286 = vmatprep.mubr.f32.mxu0 0.0
        %4287 = vmatmul.mubr.f32.gmra.mrb[0].mxu0 %v4114
        %v4288 = vpop.f32.mrb[0].mxu0
        %v4289 = vadd.f32 0.0, %v4288
        %v4290 = vpop.f32.mrb[0].mxu0
        %4291 = vmatprep.mubr.f32.mxu0 0.0
        %4292 = vmatmul.mubr.f32.gmra.mrb[0].mxu0 %v4117
        %v4293 = vpop.f32.mrb[0].mxu0
        %v4294 = vadd.f32 0.0, %v4293
        %v4295 = vpop.f32.mrb[0].mxu0
        %4296 = vmatprep.mubr.f32.mxu0 0.0
        %4297 = vmatmul.mubr.f32.gmra.mrb[0].mxu0 %v4120
        %v4298 = vpop.f32.mrb[0].mxu0
        %v4299 = vadd.f32 0.0, %v4298
        %v4300 = vpop.f32.mrb[0].mxu0
        %4301 = vmatprep.mubr.f32.mxu0 0.0
        %4302 = vmatmul.mubr.f32.gmra.mrb[0].mxu0 %v4123
        %v4303 = vpop.f32.mrb[0].mxu0
        %v4304 = vadd.f32 0.0, %v4303
        %v4305 = vpop.f32.mrb[0].mxu0
        %4306 = vmatprep.mubr.f32.mxu0 0.0
        %4307 = vmatmul.mubr.f32.gmra.mrb[0].mxu0 %v4126
        %v4308 = vpop.f32.mrb[0].mxu0
        %v4309 = vadd.f32 0.0, %v4308
        %v4310 = vpop.f32.mrb[0].mxu0
        %4311 = vmatprep.mubr.f32.mxu0 0.0
        %4312 = vmatmul.mubr.f32.gmra.mrb[0].mxu0 %v4129
        %v4313 = vpop.f32.mrb[0].mxu0
        %v4314 = vadd.f32 0.0, %v4313
        %v4315 = vpop.f32.mrb[0].mxu0
        %4316 = vmatprep.mubr.f32.mxu0 0.0
        %4317 = vmatmul.mubr.f32.gmra.mrb[0].mxu0 %v4132
        %v4318 = vpop.f32.mrb[0].mxu0
        %v4319 = vadd.f32 0.0, %v4318
        %v4320 = vpop.f32.mrb[0].mxu0
        %4321 = vmatprep.mubr.f32.mxu0 0.0
        %4322 = vmatmul.mubr.f32.gmra.mrb[0].mxu0 %v4135
        %v4323 = vpop.f32.mrb[0].mxu0
        %v4324 = vadd.f32 0.0, %v4323
        %v4325 = vpop.f32.mrb[0].mxu0
        %4326 = vmatprep.mubr.f32.mxu0 0.0
        %4327 = vmatmul.mubr.f32.gmra.mrb[0].mxu0 %v4138
        %v4328 = vpop.f32.mrb[0].mxu0
        %v4329 = vadd.f32 0.0, %v4328
        %v4330 = vpop.f32.mrb[0].mxu0
        %4331 = vmatprep.mubr.f32.mxu0 0.0
        %4332 = vmatmul.mubr.f32.gmra.mrb[0].mxu0 %v4141
        %v4333 = vpop.f32.mrb[0].mxu0
        %v4334 = vadd.f32 0.0, %v4333
        %v4335 = vpop.f32.mrb[0].mxu0
        %4336 = vmatprep.mubr.f32.mxu0 0.0
        %4337 = vmatmul.mubr.f32.gmra.mrb[0].mxu0 %v4144
        %v4338 = vpop.f32.mrb[0].mxu0
        %v4339 = vadd.f32 0.0, %v4338
        %v4340 = vpop.f32.mrb[0].mxu0
        %4341 = vmatprep.mubr.f32.mxu0 0.0
        %4342 = vmatmul.mubr.f32.gmra.mrb[0].mxu0 %v4147
        %v4343 = vpop.f32.mrb[0].mxu0
        %v4344 = vadd.f32 0.0, %v4343
        %v4345 = vpop.f32.mrb[0].mxu0
        %4346 = vmatprep.mubr.f32.mxu0 0.0
        %4347 = vmatmul.mubr.f32.gmra.mrb[0].mxu0 %v4150
        %v4348 = vpop.f32.mrb[0].mxu0
        %v4349 = vadd.f32 0.0, %v4348
        %v4350 = vpop.f32.mrb[0].mxu0
        %4351 = vmatprep.mubr.f32.mxu0 0.0
        %4352 = vmatmul.mubr.f32.gmra.mrb[0].mxu0 %v4153
        %v4353 = vpop.f32.mrb[0].mxu0
        %v4354 = vadd.f32 0.0, %v4353
        %v4355 = vpop.f32.mrb[0].mxu0
        %4356 = vmatprep.mubr.f32.mxu0 0.0
        %4357 = vmatmul.mubr.f32.gmra.mrb[0].mxu0 %v4156
        %v4358 = vpop.f32.mrb[0].mxu0
        %v4359 = vadd.f32 0.0, %v4358
        %v4360 = vpop.f32.mrb[0].mxu0
        %4361 = vmatprep.mubr.f32.mxu0 0.0
        %4362 = vmatmul.mubr.f32.gmra.mrb[0].mxu0 %v4159
        %v4363 = vpop.f32.mrb[0].mxu0
        %v4364 = vadd.f32 0.0, %v4363
        %v4365 = vpop.f32.mrb[0].mxu0
        %4366 = vmatprep.mubr.f32.mxu0 0.0
        %4367 = vmatmul.mubr.f32.gmra.mrb[0].mxu0 %v4162
        %v4368 = vpop.f32.mrb[0].mxu0
        %v4369 = vadd.f32 0.0, %v4368
        %v4370 = vpop.f32.mrb[0].mxu0
        %4371 = vmatprep.mubr.f32.mxu0 0.0
        %4372 = vmatmul.mubr.f32.gmra.mrb[0].mxu0 %v4165
        %v4373 = vpop.f32.mrb[0].mxu0
        %v4374 = vadd.f32 0.0, %v4373
        %v4375 = vpop.f32.mrb[0].mxu0
        %4376 = vmatprep.mubr.f32.mxu0 0.0
        %4377 = vmatmul.mubr.f32.gmra.mrb[0].mxu0 %v4168
        %v4378 = vpop.f32.mrb[0].mxu0
        %v4379 = vadd.f32 0.0, %v4378
        %v4380 = vpop.f32.mrb[0].mxu0
        %4381 = vmatprep.mubr.f32.mxu0 0.0
        %4382 = vmatmul.mubr.f32.gmra.mrb[0].mxu0 %v4171
        %v4383 = vpop.f32.mrb[0].mxu0
        %v4384 = vadd.f32 0.0, %v4383
        %v4385 = vpop.f32.mrb[0].mxu0
        %4386 = vmatprep.mubr.f32.mxu0 0.0
        %4387 = vmatmul.mubr.f32.gmra.mrb[0].mxu0 %v4174
        %v4388 = vpop.f32.mrb[0].mxu0
        %v4389 = vadd.f32 0.0, %v4388
        %v4390 = vpop.f32.mrb[0].mxu0
        %4391 = vmatprep.mubr.f32.mxu0 0.0
        %4392 = vmatmul.mubr.f32.gmra.mrb[0].mxu0 %v4177
        %v4393 = vpop.f32.mrb[0].mxu0
        %v4394 = vadd.f32 0.0, %v4393
        %v4395 = vpop.f32.mrb[0].mxu0
        %4396 = vmatprep.mubr.f32.mxu0 0.0
        %4397 = vmatmul.mubr.f32.gmra.mrb[0].mxu0 %v4180
        %v4398 = vpop.f32.mrb[0].mxu0
        %v4399 = vadd.f32 0.0, %v4398
        %v4400 = vpop.f32.mrb[0].mxu0
        %4401 = vmatprep.mubr.f32.mxu0 0.0
        %4402 = vmatmul.mubr.f32.gmra.mrb[0].mxu0 %v4183
        %v4403 = vpop.f32.mrb[0].mxu0
        %v4404 = vadd.f32 0.0, %v4403
        %v4405 = vpop.f32.mrb[0].mxu0
        %4406 = vmatprep.mubr.f32.mxu0 0.0
        %4407 = vmatmul.mubr.f32.gmra.mrb[0].mxu0 %v4186
        %v4408 = vpop.f32.mrb[0].mxu0
        %v4409 = vadd.f32 0.0, %v4408
        %v4410 = vpop.f32.mrb[0].mxu0
        %4411 = vmatprep.mubr.f32.mxu0 0.0
        %4412 = vmatmul.mubr.f32.gmra.mrb[0].mxu0 %v4189
        %v4413 = vpop.f32.mrb[0].mxu0
        %v4414 = vadd.f32 0.0, %v4413
        %v4415 = vpop.f32.mrb[0].mxu0
        %4416 = vmatprep.mubr.f32.mxu0 0.0
        %4417 = vmatmul.mubr.f32.gmra.mrb[0].mxu0 %v4192
        %v4418 = vpop.f32.mrb[0].mxu0
        %v4419 = vadd.f32 0.0, %v4418
        %v4420 = vpop.f32.mrb[0].mxu0
        %4421 = vdwg.mxu0
        %v4422 = vadd.f32 %v4032, %v4264
        %v4423 = vadd.f32 %v4033, %v4269
        %v4424 = vadd.f32 %v4034, %v4274
        %v4425 = vadd.f32 %v4035, %v4279
        %v4426 = vadd.f32 %v4036, %v4284
        %v4427 = vadd.f32 %v4037, %v4289
        %v4428 = vadd.f32 %v4038, %v4294
        %v4429 = vadd.f32 %v4039, %v4299
        %v4430 = vadd.f32 %v4040, %v4304
        %v4431 = vadd.f32 %v4041, %v4309
        %v4432 = vadd.f32 %v4042, %v4314
        %v4433 = vadd.f32 %v4043, %v4319
        %v4434 = vadd.f32 %v4044, %v4324
        %v4435 = vadd.f32 %v4045, %v4329
        %v4436 = vadd.f32 %v4046, %v4334
        %v4437 = vadd.f32 %v4047, %v4339
        %v4438 = vadd.f32 %v4048, %v4344
        %v4439 = vadd.f32 %v4049, %v4349
        %v4440 = vadd.f32 %v4050, %v4354
        %v4441 = vadd.f32 %v4051, %v4359
        %v4442 = vadd.f32 %v4052, %v4364
        %v4443 = vadd.f32 %v4053, %v4369
        %v4444 = vadd.f32 %v4054, %v4374
        %v4445 = vadd.f32 %v4055, %v4379
        %v4446 = vadd.f32 %v4056, %v4384
        %v4447 = vadd.f32 %v4057, %v4389
        %v4448 = vadd.f32 %v4058, %v4394
        %v4449 = vadd.f32 %v4059, %v4399
        %v4450 = vadd.f32 %v4060, %v4404
        %v4451 = vadd.f32 %v4061, %v4409
        %v4452 = vadd.f32 %v4062, %v4414
        %v4453 = vadd.f32 %v4063, %v4419
        %s4454 = sld [smem:[#allocation3 + $0x1]]
        %v4455 = vmul.f32 %v4422, %v4422
        %v4456 = vmul.f32 %v4423, %v4423
        %v4457 = vmul.f32 %v4424, %v4424
        %v4458 = vmul.f32 %v4425, %v4425
        %v4459 = vmul.f32 %v4426, %v4426
        %v4460 = vmul.f32 %v4427, %v4427
        %v4461 = vmul.f32 %v4428, %v4428
        %v4462 = vmul.f32 %v4429, %v4429
        %v4463 = vmul.f32 %v4430, %v4430
        %v4464 = vmul.f32 %v4431, %v4431
        %v4465 = vmul.f32 %v4432, %v4432
        %v4466 = vmul.f32 %v4433, %v4433
        %v4467 = vmul.f32 %v4434, %v4434
        %v4468 = vmul.f32 %v4435, %v4435
        %v4469 = vmul.f32 %v4436, %v4436
        %v4470 = vmul.f32 %v4437, %v4437
        %v4471 = vmul.f32 %v4438, %v4438
        %v4472 = vmul.f32 %v4439, %v4439
        %v4473 = vmul.f32 %v4440, %v4440
        %v4474 = vmul.f32 %v4441, %v4441
        %v4475 = vmul.f32 %v4442, %v4442
        %v4476 = vmul.f32 %v4443, %v4443
        %v4477 = vmul.f32 %v4444, %v4444
        %v4478 = vmul.f32 %v4445, %v4445
        %v4479 = vmul.f32 %v4446, %v4446
        %v4480 = vmul.f32 %v4447, %v4447
        %v4481 = vmul.f32 %v4448, %v4448
        %v4482 = vmul.f32 %v4449, %v4449
        %v4483 = vmul.f32 %v4450, %v4450
        %v4484 = vmul.f32 %v4451, %v4451
        %v4485 = vmul.f32 %v4452, %v4452
        %v4486 = vmul.f32 %v4453, %v4453
        %v4487 = vsel %vm703, %v4455, 0.0
        %v4488 = vsel %vm703, %v4456, 0.0
        %v4489 = vadd.f32 %v4487, %v4488
        %v4490 = vsel %vm703, %v4457, 0.0
        %v4491 = vadd.f32 %v4489, %v4490
        %v4492 = vsel %vm703, %v4458, 0.0
        %v4493 = vadd.f32 %v4491, %v4492
        %v4494 = vsel %vm703, %v4459, 0.0
        %v4495 = vadd.f32 %v4493, %v4494
        %v4496 = vsel %vm703, %v4460, 0.0
        %v4497 = vadd.f32 %v4495, %v4496
        %v4498 = vsel %vm703, %v4461, 0.0
        %v4499 = vadd.f32 %v4497, %v4498
        %v4500 = vsel %vm703, %v4462, 0.0
        %v4501 = vadd.f32 %v4499, %v4500
        %v4502 = vsel %vm703, %v4463, 0.0
        %v4503 = vadd.f32 %v4501, %v4502
        %v4504 = vsel %vm703, %v4464, 0.0
        %v4505 = vadd.f32 %v4503, %v4504
        %v4506 = vsel %vm703, %v4465, 0.0
        %v4507 = vadd.f32 %v4505, %v4506
        %v4508 = vsel %vm703, %v4466, 0.0
        %v4509 = vadd.f32 %v4507, %v4508
        %v4510 = vsel %vm703, %v4467, 0.0
        %v4511 = vadd.f32 %v4509, %v4510
        %v4512 = vsel %vm703, %v4468, 0.0
        %v4513 = vadd.f32 %v4511, %v4512
        %v4514 = vsel %vm703, %v4469, 0.0
        %v4515 = vadd.f32 %v4513, %v4514
        %v4516 = vsel %vm703, %v4470, 0.0
        %v4517 = vadd.f32 %v4515, %v4516
        %v4518 = vsel %vm703, %v4471, 0.0
        %v4519 = vadd.f32 %v4517, %v4518
        %v4520 = vsel %vm703, %v4472, 0.0
        %v4521 = vadd.f32 %v4519, %v4520
        %v4522 = vsel %vm703, %v4473, 0.0
        %v4523 = vadd.f32 %v4521, %v4522
        %v4524 = vsel %vm703, %v4474, 0.0
        %v4525 = vadd.f32 %v4523, %v4524
        %v4526 = vsel %vm703, %v4475, 0.0
        %v4527 = vadd.f32 %v4525, %v4526
        %v4528 = vsel %vm703, %v4476, 0.0
        %v4529 = vadd.f32 %v4527, %v4528
        %v4530 = vsel %vm703, %v4477, 0.0
        %v4531 = vadd.f32 %v4529, %v4530
        %v4532 = vsel %vm703, %v4478, 0.0
        %v4533 = vadd.f32 %v4531, %v4532
        %v4534 = vsel %vm703, %v4479, 0.0
        %v4535 = vadd.f32 %v4533, %v4534
        %v4536 = vsel %vm703, %v4480, 0.0
        %v4537 = vadd.f32 %v4535, %v4536
        %v4538 = vsel %vm703, %v4481, 0.0
        %v4539 = vadd.f32 %v4537, %v4538
        %v4540 = vsel %vm703, %v4482, 0.0
        %v4541 = vadd.f32 %v4539, %v4540
        %v4542 = vsel %vm703, %v4483, 0.0
        %v4543 = vadd.f32 %v4541, %v4542
        %v4544 = vsel %vm703, %v4484, 0.0
        %v4545 = vadd.f32 %v4543, %v4544
        %v4546 = vsel %vm703, %v4485, 0.0
        %v4547 = vadd.f32 %v4545, %v4546
        %v4548 = vsel %vm703, %v4486, 0.0
        %v4549 = vadd.f32 %v4547, %v4548
        %v4550 = vrot.slane %v4549, 4
        %v4551 = vadd.f32 %v4549, %v4550
        %v4552 = vrot.slane %v4551, 2
        %v4553 = vadd.f32 %v4551, %v4552
        %v4554 = vrot.slane %v4553, 1
        %v4555 = vadd.f32 %v4553, %v4554
        %v4556 = vmul.f32 %v4555, %v773
        %s4557 = sand.u32 2147483647, %s4454
        %v4558 = vstv %s4557
        %v4559 = vadd.f32 %v4556, %v4558
        %v4560 = vrsqrt.pop %v4559
        %v4561 = vmul.f32 %v4422, %v4560
        %v4562 = vmul.f32 %v4423, %v4560
        %v4563 = vmul.f32 %v4424, %v4560
        %v4564 = vmul.f32 %v4425, %v4560
        %v4565 = vmul.f32 %v4426, %v4560
        %v4566 = vmul.f32 %v4427, %v4560
        %v4567 = vmul.f32 %v4428, %v4560
        %v4568 = vmul.f32 %v4429, %v4560
        %v4569 = vmul.f32 %v4430, %v4560
        %v4570 = vmul.f32 %v4431, %v4560
        %v4571 = vmul.f32 %v4432, %v4560
        %v4572 = vmul.f32 %v4433, %v4560
        %v4573 = vmul.f32 %v4434, %v4560
        %v4574 = vmul.f32 %v4435, %v4560
        %v4575 = vmul.f32 %v4436, %v4560
        %v4576 = vmul.f32 %v4437, %v4560
        %v4577 = vmul.f32 %v4438, %v4560
        %v4578 = vmul.f32 %v4439, %v4560
        %v4579 = vmul.f32 %v4440, %v4560
        %v4580 = vmul.f32 %v4441, %v4560
        %v4581 = vmul.f32 %v4442, %v4560
        %v4582 = vmul.f32 %v4443, %v4560
        %v4583 = vmul.f32 %v4444, %v4560
        %v4584 = vmul.f32 %v4445, %v4560
        %v4585 = vmul.f32 %v4446, %v4560
        %v4586 = vmul.f32 %v4447, %v4560
        %v4587 = vmul.f32 %v4448, %v4560
        %v4588 = vmul.f32 %v4449, %v4560
        %v4589 = vmul.f32 %v4450, %v4560
        %v4590 = vmul.f32 %v4451, %v4560
        %v4591 = vmul.f32 %v4452, %v4560
        %v4592 = vmul.f32 %v4453, %v4560
        %v4593 = vlaneseq
        %v4594 = vshrl.u32 %v4593, 7
        %v4595 = vsub.s32 3, %v4594
        %v4596 = vrot.slane %v311, %v4595
        %v4597 = vmul.f32 %v4596, %v4561
        %v4598 = vmul.f32 %v4596, %v4562
        %v4599 = vmul.f32 %v4596, %v4563
        %v4600 = vmul.f32 %v4596, %v4564
        %v4601 = vmul.f32 %v4596, %v4565
        %v4602 = vmul.f32 %v4596, %v4566
        %v4603 = vmul.f32 %v4596, %v4567
        %v4604 = vmul.f32 %v4596, %v4568
        %v4605 = vmul.f32 %v4596, %v4569
        %v4606 = vmul.f32 %v4596, %v4570
        %v4607 = vmul.f32 %v4596, %v4571
        %v4608 = vmul.f32 %v4596, %v4572
        %v4609 = vmul.f32 %v4596, %v4573
        %v4610 = vmul.f32 %v4596, %v4574
        %v4611 = vmul.f32 %v4596, %v4575
        %v4612 = vmul.f32 %v4596, %v4576
        %v4613 = vmul.f32 %v4596, %v4577
        %v4614 = vmul.f32 %v4596, %v4578
        %v4615 = vmul.f32 %v4596, %v4579
        %v4616 = vmul.f32 %v4596, %v4580
        %v4617 = vmul.f32 %v4596, %v4581
        %v4618 = vmul.f32 %v4596, %v4582
        %v4619 = vmul.f32 %v4596, %v4583
        %v4620 = vmul.f32 %v4596, %v4584
        %v4621 = vmul.f32 %v4596, %v4585
        %v4622 = vmul.f32 %v4596, %v4586
        %v4623 = vmul.f32 %v4596, %v4587
        %v4624 = vmul.f32 %v4596, %v4588
        %v4625 = vmul.f32 %v4596, %v4589
        %v4626 = vmul.f32 %v4596, %v4590
        %v4627 = vmul.f32 %v4596, %v4591
        %v4628 = vmul.f32 %v4596, %v4592
        %v4629 = vlaneseq
        %v4630 = vshrl.u32 %v4629, 7
        %v4631 = vsub.s32 4, %v4630
        %v4632 = vrot.slane %v311, %v4631
        %v4633 = vadd.f32 %v4597, %v4632
        %v4634 = vadd.f32 %v4598, %v4632
        %v4635 = vadd.f32 %v4599, %v4632
        %v4636 = vadd.f32 %v4600, %v4632
        %v4637 = vadd.f32 %v4601, %v4632
        %v4638 = vadd.f32 %v4602, %v4632
        %v4639 = vadd.f32 %v4603, %v4632
        %v4640 = vadd.f32 %v4604, %v4632
        %v4641 = vadd.f32 %v4605, %v4632
        %v4642 = vadd.f32 %v4606, %v4632
        %v4643 = vadd.f32 %v4607, %v4632
        %v4644 = vadd.f32 %v4608, %v4632
        %v4645 = vadd.f32 %v4609, %v4632
        %v4646 = vadd.f32 %v4610, %v4632
        %v4647 = vadd.f32 %v4611, %v4632
        %v4648 = vadd.f32 %v4612, %v4632
        %v4649 = vadd.f32 %v4613, %v4632
        %v4650 = vadd.f32 %v4614, %v4632
        %v4651 = vadd.f32 %v4615, %v4632
        %v4652 = vadd.f32 %v4616, %v4632
        %v4653 = vadd.f32 %v4617, %v4632
        %v4654 = vadd.f32 %v4618, %v4632
        %v4655 = vadd.f32 %v4619, %v4632
        %v4656 = vadd.f32 %v4620, %v4632
        %v4657 = vadd.f32 %v4621, %v4632
        %v4658 = vadd.f32 %v4622, %v4632
        %v4659 = vadd.f32 %v4623, %v4632
        %v4660 = vadd.f32 %v4624, %v4632
        %v4661 = vadd.f32 %v4625, %v4632
        %v4662 = vadd.f32 %v4626, %v4632
        %v4663 = vadd.f32 %v4627, %v4632
        %v4664 = vadd.f32 %v4628, %v4632
        %v4665 = vlaneseq
        %v4666 = vshrl.u32 %v4665, 7
        %v4667 = vsub.s32 5, %v4666
        %v4668 = vrot.slane %v313, %v4667
        %v4669 = vmax.f32 %v4633, %v4668
        %v4670 = vmax.f32 %v4634, %v4668
        %v4671 = vmax.f32 %v4635, %v4668
        %v4672 = vmax.f32 %v4636, %v4668
        %v4673 = vmax.f32 %v4637, %v4668
        %v4674 = vmax.f32 %v4638, %v4668
        %v4675 = vmax.f32 %v4639, %v4668
        %v4676 = vmax.f32 %v4640, %v4668
        %v4677 = vmax.f32 %v4641, %v4668
        %v4678 = vmax.f32 %v4642, %v4668
        %v4679 = vmax.f32 %v4643, %v4668
        %v4680 = vmax.f32 %v4644, %v4668
        %v4681 = vmax.f32 %v4645, %v4668
        %v4682 = vmax.f32 %v4646, %v4668
        %v4683 = vmax.f32 %v4647, %v4668
        %v4684 = vmax.f32 %v4648, %v4668
        %v4685 = vmax.f32 %v4649, %v4668
        %v4686 = vmax.f32 %v4650, %v4668
        %v4687 = vmax.f32 %v4651, %v4668
        %v4688 = vmax.f32 %v4652, %v4668
        %v4689 = vmax.f32 %v4653, %v4668
        %v4690 = vmax.f32 %v4654, %v4668
        %v4691 = vmax.f32 %v4655, %v4668
        %v4692 = vmax.f32 %v4656, %v4668
        %v4693 = vmax.f32 %v4657, %v4668
        %v4694 = vmax.f32 %v4658, %v4668
        %v4695 = vmax.f32 %v4659, %v4668
        %v4696 = vmax.f32 %v4660, %v4668
        %v4697 = vmax.f32 %v4661, %v4668
        %v4698 = vmax.f32 %v4662, %v4668
        %v4699 = vmax.f32 %v4663, %v4668
        %v4700 = vmax.f32 %v4664, %v4668
        %v4701 = vld [vmem:[%s4] sm:$0xf]
        %v4703 = vsel %vm703, %v4669, 0
        %v4706 = vsel %vm703, %v4670, 0
        %v4709 = vsel %vm703, %v4671, 0
        %v4712 = vsel %vm703, %v4672, 0
        %v4715 = vsel %vm703, %v4673, 0
        %v4718 = vsel %vm703, %v4674, 0
        %v4721 = vsel %vm703, %v4675, 0
        %v4724 = vsel %vm703, %v4676, 0
        %v4727 = vsel %vm703, %v4677, 0
        %v4730 = vsel %vm703, %v4678, 0
        %v4733 = vsel %vm703, %v4679, 0
        %v4736 = vsel %vm703, %v4680, 0
        %v4739 = vsel %vm703, %v4681, 0
        %v4742 = vsel %vm703, %v4682, 0
        %v4745 = vsel %vm703, %v4683, 0
        %v4748 = vsel %vm703, %v4684, 0
        %v4751 = vsel %vm703, %v4685, 0
        %v4754 = vsel %vm703, %v4686, 0
        %v4757 = vsel %vm703, %v4687, 0
        %v4760 = vsel %vm703, %v4688, 0
        %v4763 = vsel %vm703, %v4689, 0
        %v4766 = vsel %vm703, %v4690, 0
        %v4769 = vsel %vm703, %v4691, 0
        %v4772 = vsel %vm703, %v4692, 0
        %v4775 = vsel %vm703, %v4693, 0
        %v4778 = vsel %vm703, %v4694, 0
        %v4781 = vsel %vm703, %v4695, 0
        %v4784 = vsel %vm703, %v4696, 0
        %v4787 = vsel %vm703, %v4697, 0
        %v4790 = vsel %vm703, %v4698, 0
        %v4793 = vsel %vm703, %v4699, 0
        %v4796 = vsel %vm703, %v4700, 0
        %v4799 = vsel %vm1170, %v4701, 0
        %4801 = vmatprep.subr.mxu0 0.0
        %4802 = vmatpush1.msra.mxu0 %v4799
        %4803 = vmatprep.subr.mxu0 0.0
        %4804 = vmatpush1.msra.mxu0 0.0
        %4805 = vmatprep.subr.mxu0 0.0
        %4806 = vmatpush1.msra.mxu0 0.0
        %4807 = vmatprep.subr.mxu0 0.0
        %4808 = vmatpush1.msra.mxu0 0.0
        %4809 = vmatprep.subr.mxu0 0.0
        %4810 = vmatpush1.msra.mxu0 0.0
        %4811 = vmatprep.subr.mxu0 0.0
        %4812 = vmatpush1.msra.mxu0 0.0
        %4813 = vmatprep.subr.mxu0 0.0
        %4814 = vmatpush1.msra.mxu0 0.0
        %4815 = vmatprep.subr.mxu0 0.0
        %4816 = vmatpush1.msra.mxu0 0.0
        %4817 = vmatprep.subr.mxu0 0.0
        %4818 = vmatpush1.msra.mxu0 0.0
        %4819 = vmatprep.subr.mxu0 0.0
        %4820 = vmatpush1.msra.mxu0 0.0
        %4821 = vmatprep.subr.mxu0 0.0
        %4822 = vmatpush1.msra.mxu0 0.0
        %4823 = vmatprep.subr.mxu0 0.0
        %4824 = vmatpush1.msra.mxu0 0.0
        %4825 = vmatprep.subr.mxu0 0.0
        %4826 = vmatpush1.msra.mxu0 0.0
        %4827 = vmatprep.subr.mxu0 0.0
        %4828 = vmatpush1.msra.mxu0 0.0
        %4829 = vmatprep.subr.mxu0 0.0
        %4830 = vmatpush1.msra.mxu0 0.0
        %4831 = vmatprep.subr.mxu0 0.0
        %4832 = vmatpush1.msra.mxu0 0.0
        %4833 = vmatprep.subr.mxu0 0.0
        %4834 = vmatpush1.msra.mxu0 0.0
        %4835 = vmatprep.subr.mxu0 0.0
        %4836 = vmatpush1.msra.mxu0 0.0
        %4837 = vmatprep.subr.mxu0 0.0
        %4838 = vmatpush1.msra.mxu0 0.0
        %4839 = vmatprep.subr.mxu0 0.0
        %4840 = vmatpush1.msra.mxu0 0.0
        %4841 = vmatprep.subr.mxu0 0.0
        %4842 = vmatpush1.msra.mxu0 0.0
        %4843 = vmatprep.subr.mxu0 0.0
        %4844 = vmatpush1.msra.mxu0 0.0
        %4845 = vmatprep.subr.mxu0 0.0
        %4846 = vmatpush1.msra.mxu0 0.0
        %4847 = vmatprep.subr.mxu0 0.0
        %4848 = vmatpush1.msra.mxu0 0.0
        %4849 = vmatprep.subr.mxu0 0.0
        %4850 = vmatpush1.msra.mxu0 0.0
        %4851 = vmatprep.subr.mxu0 0.0
        %4852 = vmatpush1.msra.mxu0 0.0
        %4853 = vmatprep.subr.mxu0 0.0
        %4854 = vmatpush1.msra.mxu0 0.0
        %4855 = vmatprep.subr.mxu0 0.0
        %4856 = vmatpush1.msra.mxu0 0.0
        %4857 = vmatprep.subr.mxu0 0.0
        %4858 = vmatpush1.msra.mxu0 0.0
        %4859 = vmatprep.subr.mxu0 0.0
        %4860 = vmatpush1.msra.mxu0 0.0
        %4861 = vmatprep.subr.mxu0 0.0
        %4862 = vmatpush1.msra.mxu0 0.0
        %4863 = vmatprep.subr.mxu0 0.0
        %4864 = vmatpush1.msra.mxu0 0.0
        %4865 = vmatprep.mubr.f32.mxu0 0.0
        %4866 = vmatmul.mubr.f32.gmra.mrb[0].mxu0 %v4703
        %v4867 = vpop.f32.mrb[0].mxu0
        %v4868 = vadd.f32 0.0, %v4867
        %v4869 = vpop.f32.mrb[0].mxu0
        %4870 = vmatprep.mubr.f32.mxu0 0.0
        %4871 = vmatmul.mubr.f32.gmra.mrb[0].mxu0 %v4706
        %v4872 = vpop.f32.mrb[0].mxu0
        %v4873 = vadd.f32 0.0, %v4872
        %v4874 = vpop.f32.mrb[0].mxu0
        %4875 = vmatprep.mubr.f32.mxu0 0.0
        %4876 = vmatmul.mubr.f32.gmra.mrb[0].mxu0 %v4709
        %v4877 = vpop.f32.mrb[0].mxu0
        %v4878 = vadd.f32 0.0, %v4877
        %v4879 = vpop.f32.mrb[0].mxu0
        %4880 = vmatprep.mubr.f32.mxu0 0.0
        %4881 = vmatmul.mubr.f32.gmra.mrb[0].mxu0 %v4712
        %v4882 = vpop.f32.mrb[0].mxu0
        %v4883 = vadd.f32 0.0, %v4882
        %v4884 = vpop.f32.mrb[0].mxu0
        %4885 = vmatprep.mubr.f32.mxu0 0.0
        %4886 = vmatmul.mubr.f32.gmra.mrb[0].mxu0 %v4715
        %v4887 = vpop.f32.mrb[0].mxu0
        %v4888 = vadd.f32 0.0, %v4887
        %v4889 = vpop.f32.mrb[0].mxu0
        %4890 = vmatprep.mubr.f32.mxu0 0.0
        %4891 = vmatmul.mubr.f32.gmra.mrb[0].mxu0 %v4718
        %v4892 = vpop.f32.mrb[0].mxu0
        %v4893 = vadd.f32 0.0, %v4892
        %v4894 = vpop.f32.mrb[0].mxu0
        %4895 = vmatprep.mubr.f32.mxu0 0.0
        %4896 = vmatmul.mubr.f32.gmra.mrb[0].mxu0 %v4721
        %v4897 = vpop.f32.mrb[0].mxu0
        %v4898 = vadd.f32 0.0, %v4897
        %v4899 = vpop.f32.mrb[0].mxu0
        %4900 = vmatprep.mubr.f32.mxu0 0.0
        %4901 = vmatmul.mubr.f32.gmra.mrb[0].mxu0 %v4724
        %v4902 = vpop.f32.mrb[0].mxu0
        %v4903 = vadd.f32 0.0, %v4902
        %v4904 = vpop.f32.mrb[0].mxu0
        %4905 = vmatprep.mubr.f32.mxu0 0.0
        %4906 = vmatmul.mubr.f32.gmra.mrb[0].mxu0 %v4727
        %v4907 = vpop.f32.mrb[0].mxu0
        %v4908 = vadd.f32 0.0, %v4907
        %v4909 = vpop.f32.mrb[0].mxu0
        %4910 = vmatprep.mubr.f32.mxu0 0.0
        %4911 = vmatmul.mubr.f32.gmra.mrb[0].mxu0 %v4730
        %v4912 = vpop.f32.mrb[0].mxu0
        %v4913 = vadd.f32 0.0, %v4912
        %v4914 = vpop.f32.mrb[0].mxu0
        %4915 = vmatprep.mubr.f32.mxu0 0.0
        %4916 = vmatmul.mubr.f32.gmra.mrb[0].mxu0 %v4733
        %v4917 = vpop.f32.mrb[0].mxu0
        %v4918 = vadd.f32 0.0, %v4917
        %v4919 = vpop.f32.mrb[0].mxu0
        %4920 = vmatprep.mubr.f32.mxu0 0.0
        %4921 = vmatmul.mubr.f32.gmra.mrb[0].mxu0 %v4736
        %v4922 = vpop.f32.mrb[0].mxu0
        %v4923 = vadd.f32 0.0, %v4922
        %v4924 = vpop.f32.mrb[0].mxu0
        %4925 = vmatprep.mubr.f32.mxu0 0.0
        %4926 = vmatmul.mubr.f32.gmra.mrb[0].mxu0 %v4739
        %v4927 = vpop.f32.mrb[0].mxu0
        %v4928 = vadd.f32 0.0, %v4927
        %v4929 = vpop.f32.mrb[0].mxu0
        %4930 = vmatprep.mubr.f32.mxu0 0.0
        %4931 = vmatmul.mubr.f32.gmra.mrb[0].mxu0 %v4742
        %v4932 = vpop.f32.mrb[0].mxu0
        %v4933 = vadd.f32 0.0, %v4932
        %v4934 = vpop.f32.mrb[0].mxu0
        %4935 = vmatprep.mubr.f32.mxu0 0.0
        %4936 = vmatmul.mubr.f32.gmra.mrb[0].mxu0 %v4745
        %v4937 = vpop.f32.mrb[0].mxu0
        %v4938 = vadd.f32 0.0, %v4937
        %v4939 = vpop.f32.mrb[0].mxu0
        %4940 = vmatprep.mubr.f32.mxu0 0.0
        %4941 = vmatmul.mubr.f32.gmra.mrb[0].mxu0 %v4748
        %v4942 = vpop.f32.mrb[0].mxu0
        %v4943 = vadd.f32 0.0, %v4942
        %v4944 = vpop.f32.mrb[0].mxu0
        %4945 = vmatprep.mubr.f32.mxu0 0.0
        %4946 = vmatmul.mubr.f32.gmra.mrb[0].mxu0 %v4751
        %v4947 = vpop.f32.mrb[0].mxu0
        %v4948 = vadd.f32 0.0, %v4947
        %v4949 = vpop.f32.mrb[0].mxu0
        %4950 = vmatprep.mubr.f32.mxu0 0.0
        %4951 = vmatmul.mubr.f32.gmra.mrb[0].mxu0 %v4754
        %v4952 = vpop.f32.mrb[0].mxu0
        %v4953 = vadd.f32 0.0, %v4952
        %v4954 = vpop.f32.mrb[0].mxu0
        %4955 = vmatprep.mubr.f32.mxu0 0.0
        %4956 = vmatmul.mubr.f32.gmra.mrb[0].mxu0 %v4757
        %v4957 = vpop.f32.mrb[0].mxu0
        %v4958 = vadd.f32 0.0, %v4957
        %v4959 = vpop.f32.mrb[0].mxu0
        %4960 = vmatprep.mubr.f32.mxu0 0.0
        %4961 = vmatmul.mubr.f32.gmra.mrb[0].mxu0 %v4760
        %v4962 = vpop.f32.mrb[0].mxu0
        %v4963 = vadd.f32 0.0, %v4962
        %v4964 = vpop.f32.mrb[0].mxu0
        %4965 = vmatprep.mubr.f32.mxu0 0.0
        %4966 = vmatmul.mubr.f32.gmra.mrb[0].mxu0 %v4763
        %v4967 = vpop.f32.mrb[0].mxu0
        %v4968 = vadd.f32 0.0, %v4967
        %v4969 = vpop.f32.mrb[0].mxu0
        %4970 = vmatprep.mubr.f32.mxu0 0.0
        %4971 = vmatmul.mubr.f32.gmra.mrb[0].mxu0 %v4766
        %v4972 = vpop.f32.mrb[0].mxu0
        %v4973 = vadd.f32 0.0, %v4972
        %v4974 = vpop.f32.mrb[0].mxu0
        %4975 = vmatprep.mubr.f32.mxu0 0.0
        %4976 = vmatmul.mubr.f32.gmra.mrb[0].mxu0 %v4769
        %v4977 = vpop.f32.mrb[0].mxu0
        %v4978 = vadd.f32 0.0, %v4977
        %v4979 = vpop.f32.mrb[0].mxu0
        %4980 = vmatprep.mubr.f32.mxu0 0.0
        %4981 = vmatmul.mubr.f32.gmra.mrb[0].mxu0 %v4772
        %v4982 = vpop.f32.mrb[0].mxu0
        %v4983 = vadd.f32 0.0, %v4982
        %v4984 = vpop.f32.mrb[0].mxu0
        %4985 = vmatprep.mubr.f32.mxu0 0.0
        %4986 = vmatmul.mubr.f32.gmra.mrb[0].mxu0 %v4775
        %v4987 = vpop.f32.mrb[0].mxu0
        %v4988 = vadd.f32 0.0, %v4987
        %v4989 = vpop.f32.mrb[0].mxu0
        %4990 = vmatprep.mubr.f32.mxu0 0.0
        %4991 = vmatmul.mubr.f32.gmra.mrb[0].mxu0 %v4778
        %v4992 = vpop.f32.mrb[0].mxu0
        %v4993 = vadd.f32 0.0, %v4992
        %v4994 = vpop.f32.mrb[0].mxu0
        %4995 = vmatprep.mubr.f32.mxu0 0.0
        %4996 = vmatmul.mubr.f32.gmra.mrb[0].mxu0 %v4781
        %v4997 = vpop.f32.mrb[0].mxu0
        %v4998 = vadd.f32 0.0, %v4997
        %v4999 = vpop.f32.mrb[0].mxu0
        %5000 = vmatprep.mubr.f32.mxu0 0.0
        %5001 = vmatmul.mubr.f32.gmra.mrb[0].mxu0 %v4784
        %v5002 = vpop.f32.mrb[0].mxu0
        %v5003 = vadd.f32 0.0, %v5002
        %v5004 = vpop.f32.mrb[0].mxu0
        %5005 = vmatprep.mubr.f32.mxu0 0.0
        %5006 = vmatmul.mubr.f32.gmra.mrb[0].mxu0 %v4787
        %v5007 = vpop.f32.mrb[0].mxu0
        %v5008 = vadd.f32 0.0, %v5007
        %v5009 = vpop.f32.mrb[0].mxu0
        %5010 = vmatprep.mubr.f32.mxu0 0.0
        %5011 = vmatmul.mubr.f32.gmra.mrb[0].mxu0 %v4790
        %v5012 = vpop.f32.mrb[0].mxu0
        %v5013 = vadd.f32 0.0, %v5012
        %v5014 = vpop.f32.mrb[0].mxu0
        %5015 = vmatprep.mubr.f32.mxu0 0.0
        %5016 = vmatmul.mubr.f32.gmra.mrb[0].mxu0 %v4793
        %v5017 = vpop.f32.mrb[0].mxu0
        %v5018 = vadd.f32 0.0, %v5017
        %v5019 = vpop.f32.mrb[0].mxu0
        %5020 = vmatprep.mubr.f32.mxu0 0.0
        %5021 = vmatmul.mubr.f32.gmra.mrb[0].mxu0 %v4796
        %v5022 = vpop.f32.mrb[0].mxu0
        %v5023 = vadd.f32 0.0, %v5022
        %v5024 = vpop.f32.mrb[0].mxu0
        %5025 = vdwg.mxu0
        %s5026 = sld [smem:[#allocation3 + $0x2]]
        %v5027 = vmul.f32 %v4868, %v4868
        %v5028 = vmul.f32 %v4873, %v4873
        %v5029 = vmul.f32 %v4878, %v4878
        %v5030 = vmul.f32 %v4883, %v4883
        %v5031 = vmul.f32 %v4888, %v4888
        %v5032 = vmul.f32 %v4893, %v4893
        %v5033 = vmul.f32 %v4898, %v4898
        %v5034 = vmul.f32 %v4903, %v4903
        %v5035 = vmul.f32 %v4908, %v4908
        %v5036 = vmul.f32 %v4913, %v4913
        %v5037 = vmul.f32 %v4918, %v4918
        %v5038 = vmul.f32 %v4923, %v4923
        %v5039 = vmul.f32 %v4928, %v4928
        %v5040 = vmul.f32 %v4933, %v4933
        %v5041 = vmul.f32 %v4938, %v4938
        %v5042 = vmul.f32 %v4943, %v4943
        %v5043 = vmul.f32 %v4948, %v4948
        %v5044 = vmul.f32 %v4953, %v4953
        %v5045 = vmul.f32 %v4958, %v4958
        %v5046 = vmul.f32 %v4963, %v4963
        %v5047 = vmul.f32 %v4968, %v4968
        %v5048 = vmul.f32 %v4973, %v4973
        %v5049 = vmul.f32 %v4978, %v4978
        %v5050 = vmul.f32 %v4983, %v4983
        %v5051 = vmul.f32 %v4988, %v4988
        %v5052 = vmul.f32 %v4993, %v4993
        %v5053 = vmul.f32 %v4998, %v4998
        %v5054 = vmul.f32 %v5003, %v5003
        %v5055 = vmul.f32 %v5008, %v5008
        %v5056 = vmul.f32 %v5013, %v5013
        %v5057 = vmul.f32 %v5018, %v5018
        %v5058 = vmul.f32 %v5023, %v5023
        %v5059 = vsel %vm348, %v5027, 0.0
        %v5060 = vsel %vm348, %v5028, 0.0
        %v5061 = vadd.f32 %v5059, %v5060
        %v5062 = vsel %vm348, %v5029, 0.0
        %v5063 = vadd.f32 %v5061, %v5062
        %v5064 = vsel %vm348, %v5030, 0.0
        %v5065 = vadd.f32 %v5063, %v5064
        %v5066 = vsel %vm348, %v5031, 0.0
        %v5067 = vadd.f32 %v5065, %v5066
        %v5068 = vsel %vm348, %v5032, 0.0
        %v5069 = vadd.f32 %v5067, %v5068
        %v5070 = vsel %vm348, %v5033, 0.0
        %v5071 = vadd.f32 %v5069, %v5070
        %v5072 = vsel %vm348, %v5034, 0.0
        %v5073 = vadd.f32 %v5071, %v5072
        %v5074 = vsel %vm348, %v5035, 0.0
        %v5075 = vadd.f32 %v5073, %v5074
        %v5076 = vsel %vm348, %v5036, 0.0
        %v5077 = vadd.f32 %v5075, %v5076
        %v5078 = vsel %vm348, %v5037, 0.0
        %v5079 = vadd.f32 %v5077, %v5078
        %v5080 = vsel %vm348, %v5038, 0.0
        %v5081 = vadd.f32 %v5079, %v5080
        %v5082 = vsel %vm348, %v5039, 0.0
        %v5083 = vadd.f32 %v5081, %v5082
        %v5084 = vsel %vm348, %v5040, 0.0
        %v5085 = vadd.f32 %v5083, %v5084
        %v5086 = vsel %vm348, %v5041, 0.0
        %v5087 = vadd.f32 %v5085, %v5086
        %v5088 = vsel %vm348, %v5042, 0.0
        %v5089 = vadd.f32 %v5087, %v5088
        %v5090 = vsel %vm348, %v5043, 0.0
        %v5091 = vadd.f32 %v5089, %v5090
        %v5092 = vsel %vm348, %v5044, 0.0
        %v5093 = vadd.f32 %v5091, %v5092
        %v5094 = vsel %vm348, %v5045, 0.0
        %v5095 = vadd.f32 %v5093, %v5094
        %v5096 = vsel %vm348, %v5046, 0.0
        %v5097 = vadd.f32 %v5095, %v5096
        %v5098 = vsel %vm348, %v5047, 0.0
        %v5099 = vadd.f32 %v5097, %v5098
        %v5100 = vsel %vm348, %v5048, 0.0
        %v5101 = vadd.f32 %v5099, %v5100
        %v5102 = vsel %vm348, %v5049, 0.0
        %v5103 = vadd.f32 %v5101, %v5102
        %v5104 = vsel %vm348, %v5050, 0.0
        %v5105 = vadd.f32 %v5103, %v5104
        %v5106 = vsel %vm348, %v5051, 0.0
        %v5107 = vadd.f32 %v5105, %v5106
        %v5108 = vsel %vm348, %v5052, 0.0
        %v5109 = vadd.f32 %v5107, %v5108
        %v5110 = vsel %vm348, %v5053, 0.0
        %v5111 = vadd.f32 %v5109, %v5110
        %v5112 = vsel %vm348, %v5054, 0.0
        %v5113 = vadd.f32 %v5111, %v5112
        %v5114 = vsel %vm348, %v5055, 0.0
        %v5115 = vadd.f32 %v5113, %v5114
        %v5116 = vsel %vm348, %v5056, 0.0
        %v5117 = vadd.f32 %v5115, %v5116
        %v5118 = vsel %vm348, %v5057, 0.0
        %v5119 = vadd.f32 %v5117, %v5118
        %v5120 = vsel %vm348, %v5058, 0.0
        %v5121 = vadd.f32 %v5119, %v5120
        %v5122 = vrot.slane %v5121, 4
        %v5123 = vadd.f32 %v5121, %v5122
        %v5124 = vrot.slane %v5123, 2
        %v5125 = vadd.f32 %v5123, %v5124
        %v5126 = vrot.slane %v5125, 1
        %v5127 = vadd.f32 %v5125, %v5126
        %v5128 = vmul.f32 %v5127, %v773
        %s5129 = sand.u32 2147483647, %s5026
        %v5130 = vstv %s5129
        %v5131 = vadd.f32 %v5128, %v5130
        %v5132 = vrsqrt.pop %v5131
        %v5133 = vmul.f32 %v4868, %v5132
        %v5134 = vmul.f32 %v4873, %v5132
        %v5135 = vmul.f32 %v4878, %v5132
        %v5136 = vmul.f32 %v4883, %v5132
        %v5137 = vmul.f32 %v4888, %v5132
        %v5138 = vmul.f32 %v4893, %v5132
        %v5139 = vmul.f32 %v4898, %v5132
        %v5140 = vmul.f32 %v4903, %v5132
        %v5141 = vmul.f32 %v4908, %v5132
        %v5142 = vmul.f32 %v4913, %v5132
        %v5143 = vmul.f32 %v4918, %v5132
        %v5144 = vmul.f32 %v4923, %v5132
        %v5145 = vmul.f32 %v4928, %v5132
        %v5146 = vmul.f32 %v4933, %v5132
        %v5147 = vmul.f32 %v4938, %v5132
        %v5148 = vmul.f32 %v4943, %v5132
        %v5149 = vmul.f32 %v4948, %v5132
        %v5150 = vmul.f32 %v4953, %v5132
        %v5151 = vmul.f32 %v4958, %v5132
        %v5152 = vmul.f32 %v4963, %v5132
        %v5153 = vmul.f32 %v4968, %v5132
        %v5154 = vmul.f32 %v4973, %v5132
        %v5155 = vmul.f32 %v4978, %v5132
        %v5156 = vmul.f32 %v4983, %v5132
        %v5157 = vmul.f32 %v4988, %v5132
        %v5158 = vmul.f32 %v4993, %v5132
        %v5159 = vmul.f32 %v4998, %v5132
        %v5160 = vmul.f32 %v5003, %v5132
        %v5161 = vmul.f32 %v5008, %v5132
        %v5162 = vmul.f32 %v5013, %v5132
        %v5163 = vmul.f32 %v5018, %v5132
        %v5164 = vmul.f32 %v5023, %v5132
        %v5165 = vlaneseq
        %v5166 = vshrl.u32 %v5165, 7
        %v5167 = vsub.s32 0, %v5166
        %v5168 = vrot.slane %v312, %v5167
        %v5169 = vmul.f32 %v5168, %v5133
        %v5170 = vmul.f32 %v5168, %v5134
        %v5171 = vmul.f32 %v5168, %v5135
        %v5172 = vmul.f32 %v5168, %v5136
        %v5173 = vmul.f32 %v5168, %v5137
        %v5174 = vmul.f32 %v5168, %v5138
        %v5175 = vmul.f32 %v5168, %v5139
        %v5176 = vmul.f32 %v5168, %v5140
        %v5177 = vmul.f32 %v5168, %v5141
        %v5178 = vmul.f32 %v5168, %v5142
        %v5179 = vmul.f32 %v5168, %v5143
        %v5180 = vmul.f32 %v5168, %v5144
        %v5181 = vmul.f32 %v5168, %v5145
        %v5182 = vmul.f32 %v5168, %v5146
        %v5183 = vmul.f32 %v5168, %v5147
        %v5184 = vmul.f32 %v5168, %v5148
        %v5185 = vmul.f32 %v5168, %v5149
        %v5186 = vmul.f32 %v5168, %v5150
        %v5187 = vmul.f32 %v5168, %v5151
        %v5188 = vmul.f32 %v5168, %v5152
        %v5189 = vmul.f32 %v5168, %v5153
        %v5190 = vmul.f32 %v5168, %v5154
        %v5191 = vmul.f32 %v5168, %v5155
        %v5192 = vmul.f32 %v5168, %v5156
        %v5193 = vmul.f32 %v5168, %v5157
        %v5194 = vmul.f32 %v5168, %v5158
        %v5195 = vmul.f32 %v5168, %v5159
        %v5196 = vmul.f32 %v5168, %v5160
        %v5197 = vmul.f32 %v5168, %v5161
        %v5198 = vmul.f32 %v5168, %v5162
        %v5199 = vmul.f32 %v5168, %v5163
        %v5200 = vmul.f32 %v5168, %v5164
        %v5201 = vlaneseq
        %v5202 = vshrl.u32 %v5201, 7
        %v5203 = vsub.s32 1, %v5202
        %v5204 = vrot.slane %v312, %v5203
        %v5205 = vadd.f32 %v5169, %v5204
        %v5206 = vadd.f32 %v5170, %v5204
        %v5207 = vadd.f32 %v5171, %v5204
        %v5208 = vadd.f32 %v5172, %v5204
        %v5209 = vadd.f32 %v5173, %v5204
        %v5210 = vadd.f32 %v5174, %v5204
        %v5211 = vadd.f32 %v5175, %v5204
        %v5212 = vadd.f32 %v5176, %v5204
        %v5213 = vadd.f32 %v5177, %v5204
        %v5214 = vadd.f32 %v5178, %v5204
        %v5215 = vadd.f32 %v5179, %v5204
        %v5216 = vadd.f32 %v5180, %v5204
        %v5217 = vadd.f32 %v5181, %v5204
        %v5218 = vadd.f32 %v5182, %v5204
        %v5219 = vadd.f32 %v5183, %v5204
        %v5220 = vadd.f32 %v5184, %v5204
        %v5221 = vadd.f32 %v5185, %v5204
        %v5222 = vadd.f32 %v5186, %v5204
        %v5223 = vadd.f32 %v5187, %v5204
        %v5224 = vadd.f32 %v5188, %v5204
        %v5225 = vadd.f32 %v5189, %v5204
        %v5226 = vadd.f32 %v5190, %v5204
        %v5227 = vadd.f32 %v5191, %v5204
        %v5228 = vadd.f32 %v5192, %v5204
        %v5229 = vadd.f32 %v5193, %v5204
        %v5230 = vadd.f32 %v5194, %v5204
        %v5231 = vadd.f32 %v5195, %v5204
        %v5232 = vadd.f32 %v5196, %v5204
        %v5233 = vadd.f32 %v5197, %v5204
        %v5234 = vadd.f32 %v5198, %v5204
        %v5235 = vadd.f32 %v5199, %v5204
        %v5236 = vadd.f32 %v5200, %v5204
        %v5237 = vlaneseq
        %v5238 = vshrl.u32 %v5237, 7
        %v5239 = vsub.s32 2, %v5238
        %v5240 = vrot.slane %v312, %v5239
        %v5241 = vmax.f32 %v5205, %v5240
        %v5242 = vmax.f32 %v5206, %v5240
        %v5243 = vmax.f32 %v5207, %v5240
        %v5244 = vmax.f32 %v5208, %v5240
        %v5245 = vmax.f32 %v5209, %v5240
        %v5246 = vmax.f32 %v5210, %v5240
        %v5247 = vmax.f32 %v5211, %v5240
        %v5248 = vmax.f32 %v5212, %v5240
        %v5249 = vmax.f32 %v5213, %v5240
        %v5250 = vmax.f32 %v5214, %v5240
        %v5251 = vmax.f32 %v5215, %v5240
        %v5252 = vmax.f32 %v5216, %v5240
        %v5253 = vmax.f32 %v5217, %v5240
        %v5254 = vmax.f32 %v5218, %v5240
        %v5255 = vmax.f32 %v5219, %v5240
        %v5256 = vmax.f32 %v5220, %v5240
        %v5257 = vmax.f32 %v5221, %v5240
        %v5258 = vmax.f32 %v5222, %v5240
        %v5259 = vmax.f32 %v5223, %v5240
        %v5260 = vmax.f32 %v5224, %v5240
        %v5261 = vmax.f32 %v5225, %v5240
        %v5262 = vmax.f32 %v5226, %v5240
        %v5263 = vmax.f32 %v5227, %v5240
        %v5264 = vmax.f32 %v5228, %v5240
        %v5265 = vmax.f32 %v5229, %v5240
        %v5266 = vmax.f32 %v5230, %v5240
        %v5267 = vmax.f32 %v5231, %v5240
        %v5268 = vmax.f32 %v5232, %v5240
        %v5269 = vmax.f32 %v5233, %v5240
        %v5270 = vmax.f32 %v5234, %v5240
        %v5271 = vmax.f32 %v5235, %v5240
        %v5272 = vmax.f32 %v5236, %v5240
        %v5273 = vld [vmem:[%s279] sm:$0xff]
        %v5274 = vld [vmem:[%s279 + $0x8] sm:$0xff]
        %v5275 = vld [vmem:[%s279 + $0x10] sm:$0xff]
        %v5276 = vld [vmem:[%s279 + $0x18] sm:$0xff]
        %v5277 = vld [vmem:[%s279 + $0x20] sm:$0xff]
        %v5278 = vld [vmem:[%s279 + $0x28] sm:$0xff]
        %v5279 = vld [vmem:[%s279 + $0x30] sm:$0xff]
        %v5280 = vld [vmem:[%s279 + $0x38] sm:$0xff]
        %v5281 = vld [vmem:[%s279 + $0x40] sm:$0xff]
        %v5282 = vld [vmem:[%s279 + $0x48] sm:$0xff]
        %v5283 = vld [vmem:[%s279 + $0x50] sm:$0xff]
        %v5284 = vld [vmem:[%s279 + $0x58] sm:$0xff]
        %v5285 = vld [vmem:[%s279 + $0x60] sm:$0xff]
        %v5286 = vld [vmem:[%s279 + $0x68] sm:$0xff]
        %v5287 = vld [vmem:[%s279 + $0x70] sm:$0xff]
        %v5288 = vld [vmem:[%s279 + $0x78] sm:$0xff]
        %v5289 = vld [vmem:[%s279 + $0x80] sm:$0xff]
        %v5290 = vld [vmem:[%s279 + $0x88] sm:$0xff]
        %v5291 = vld [vmem:[%s279 + $0x90] sm:$0xff]
        %v5292 = vld [vmem:[%s279 + $0x98] sm:$0xff]
        %v5293 = vld [vmem:[%s279 + $0xa0] sm:$0xff]
        %v5294 = vld [vmem:[%s279 + $0xa8] sm:$0xff]
        %v5295 = vld [vmem:[%s279 + $0xb0] sm:$0xff]
        %v5296 = vld [vmem:[%s279 + $0xb8] sm:$0xff]
        %v5297 = vld [vmem:[%s279 + $0xc0] sm:$0xff]
        %v5298 = vld [vmem:[%s279 + $0xc8] sm:$0xff]
        %v5299 = vld [vmem:[%s279 + $0xd0] sm:$0xff]
        %v5300 = vld [vmem:[%s279 + $0xd8] sm:$0xff]
        %v5301 = vld [vmem:[%s279 + $0xe0] sm:$0xff]
        %v5302 = vld [vmem:[%s279 + $0xe8] sm:$0xff]
        %v5303 = vld [vmem:[%s279 + $0xf0] sm:$0xff]
        %v5304 = vld [vmem:[%s279 + $0xf8] sm:$0xff]
        %v5305 = vadd.f32 %v5241, %v5273
        %v5306 = vadd.f32 %v5242, %v5274
        %v5307 = vadd.f32 %v5243, %v5275
        %v5308 = vadd.f32 %v5244, %v5276
        %v5309 = vadd.f32 %v5245, %v5277
        %v5310 = vadd.f32 %v5246, %v5278
        %v5311 = vadd.f32 %v5247, %v5279
        %v5312 = vadd.f32 %v5248, %v5280
        %v5313 = vadd.f32 %v5249, %v5281
        %v5314 = vadd.f32 %v5250, %v5282
        %v5315 = vadd.f32 %v5251, %v5283
        %v5316 = vadd.f32 %v5252, %v5284
        %v5317 = vadd.f32 %v5253, %v5285
        %v5318 = vadd.f32 %v5254, %v5286
        %v5319 = vadd.f32 %v5255, %v5287
        %v5320 = vadd.f32 %v5256, %v5288
        %v5321 = vadd.f32 %v5257, %v5289
        %v5322 = vadd.f32 %v5258, %v5290
        %v5323 = vadd.f32 %v5259, %v5291
        %v5324 = vadd.f32 %v5260, %v5292
        %v5325 = vadd.f32 %v5261, %v5293
        %v5326 = vadd.f32 %v5262, %v5294
        %v5327 = vadd.f32 %v5263, %v5295
        %v5328 = vadd.f32 %v5264, %v5296
        %v5329 = vadd.f32 %v5265, %v5297
        %v5330 = vadd.f32 %v5266, %v5298
        %v5331 = vadd.f32 %v5267, %v5299
        %v5332 = vadd.f32 %v5268, %v5300
        %v5333 = vadd.f32 %v5269, %v5301
        %v5334 = vadd.f32 %v5270, %v5302
        %v5335 = vadd.f32 %v5271, %v5303
        %v5336 = vadd.f32 %v5272, %v5304
        %5337 = vst.msk [vmem:[%s310] sm:$0xff] %vm348, %v5305
        %5338 = vst.msk [vmem:[%s310 + $0x8] sm:$0xff] %vm348, %v5306
        %5339 = vst.msk [vmem:[%s310 + $0x10] sm:$0xff] %vm348, %v5307
        %5340 = vst.msk [vmem:[%s310 + $0x18] sm:$0xff] %vm348, %v5308
        %5341 = vst.msk [vmem:[%s310 + $0x20] sm:$0xff] %vm348, %v5309
        %5342 = vst.msk [vmem:[%s310 + $0x28] sm:$0xff] %vm348, %v5310
        %5343 = vst.msk [vmem:[%s310 + $0x30] sm:$0xff] %vm348, %v5311
        %5344 = vst.msk [vmem:[%s310 + $0x38] sm:$0xff] %vm348, %v5312
        %5345 = vst.msk [vmem:[%s310 + $0x40] sm:$0xff] %vm348, %v5313
        %5346 = vst.msk [vmem:[%s310 + $0x48] sm:$0xff] %vm348, %v5314
        %5347 = vst.msk [vmem:[%s310 + $0x50] sm:$0xff] %vm348, %v5315
        %5348 = vst.msk [vmem:[%s310 + $0x58] sm:$0xff] %vm348, %v5316
        %5349 = vst.msk [vmem:[%s310 + $0x60] sm:$0xff] %vm348, %v5317
        %5350 = vst.msk [vmem:[%s310 + $0x68] sm:$0xff] %vm348, %v5318
        %5351 = vst.msk [vmem:[%s310 + $0x70] sm:$0xff] %vm348, %v5319
        %5352 = vst.msk [vmem:[%s310 + $0x78] sm:$0xff] %vm348, %v5320
        %5353 = vst.msk [vmem:[%s310 + $0x80] sm:$0xff] %vm348, %v5321
        %5354 = vst.msk [vmem:[%s310 + $0x88] sm:$0xff] %vm348, %v5322
        %5355 = vst.msk [vmem:[%s310 + $0x90] sm:$0xff] %vm348, %v5323
        %5356 = vst.msk [vmem:[%s310 + $0x98] sm:$0xff] %vm348, %v5324
        %5357 = vst.msk [vmem:[%s310 + $0xa0] sm:$0xff] %vm348, %v5325
        %5358 = vst.msk [vmem:[%s310 + $0xa8] sm:$0xff] %vm348, %v5326
        %5359 = vst.msk [vmem:[%s310 + $0xb0] sm:$0xff] %vm348, %v5327
        %5360 = vst.msk [vmem:[%s310 + $0xb8] sm:$0xff] %vm348, %v5328
        %5361 = vst.msk [vmem:[%s310 + $0xc0] sm:$0xff] %vm348, %v5329
        %5362 = vst.msk [vmem:[%s310 + $0xc8] sm:$0xff] %vm348, %v5330
        %5363 = vst.msk [vmem:[%s310 + $0xd0] sm:$0xff] %vm348, %v5331
        %5364 = vst.msk [vmem:[%s310 + $0xd8] sm:$0xff] %vm348, %v5332
        %5365 = vst.msk [vmem:[%s310 + $0xe0] sm:$0xff] %vm348, %v5333
        %5366 = vst.msk [vmem:[%s310 + $0xe8] sm:$0xff] %vm348, %v5334
        %5367 = vst.msk [vmem:[%s310 + $0xf0] sm:$0xff] %vm348, %v5335
        %5368 = vst.msk [vmem:[%s310 + $0xf8] sm:$0xff] %vm348, %v5336
        %s5369 = sand.u32 %s185, 1
        %s5370 = scalar_lea.sflag [#allocation5], %s5369
        %s5371 = sand.u32 %s185, 1
        %s5372 = smul.addr %s5371, 256
        %s5373 = scalar_lea.vmem [#allocation8], %s5372
        // Predicated region
        $region57: #{bottleneck_pallas_nhwc.1} parent=47 // pred_check
          %p5374 = pneg %p195
        $region58: #{bottleneck_pallas_nhwc.1} parent=47 // pred_check_branch
          %5376 = sbr.rel (%p5374) target = $region60
        $region59: #{bottleneck_pallas_nhwc.1} parent=47 // pred_region
          %s5378 = ssub.s32 4096, 4096
          %5379 = vsyncadd %s5370, %s5378
          %s5380 = smul.addr %s25, 32
          %s5381 = smul.addr %s5380, 128
          %s5382 = scalar_lea.hbm %s7, %s5381
          %s5383 = sshll.u32 %s5373, 4
          %s5384 = int_to_ptr.vmem [resolvable:$true] %s5383
          %5389 = dma.vmem_to_hbm [thread:$0]  %s5384, 4096, %s5382, %s5370, 128, 128, 8
        $region60: #{bottleneck_pallas_nhwc.1} parent=47 // pred_fallthru
          _
      $region48: #{bottleneck_pallas_nhwc.1} parent=5 // pred_fallthru
        _
      %p5390 = scmp.le.s32.totalorder 2, %s20
      // Predicated region
      $region61: #{bottleneck_pallas_nhwc.1} parent=5 // pred_check
        %p5391 = pneg %p5390
      $region62: #{bottleneck_pallas_nhwc.1} parent=5 // pred_check_branch
        %5393 = sbr.rel (%p5391) target = $region64
      $region63: #{bottleneck_pallas_nhwc.1} parent=5 // pred_region
        %s5394 = ssub.s32 %s20, 2
        // Predicated region
        $region65: #{bottleneck_pallas_nhwc.1} parent=63 // pred_check
          %p5395 = pneg %p201
        $region66: #{bottleneck_pallas_nhwc.1} parent=63 // pred_check_branch
          %5397 = sbr.rel (%p5395) target = $region68
        $region67: #{bottleneck_pallas_nhwc.1} parent=63 // pred_region
          %s5398 = sand.u32 %s186, 1
          %s5399 = scalar_lea.sflag [#allocation5], %s5398
          %s5400 = sand.u32 %s186, 1
          %s5401 = smul.addr %s5400, 256
          %s5402 = scalar_lea.vmem [#allocation8], %s5401
          %5403 = dma.done %s5399, 4096
        $region68: #{bottleneck_pallas_nhwc.1} parent=63 // pred_fallthru
          _
      $region64: #{bottleneck_pallas_nhwc.1} parent=5 // pred_fallthru
        _
    $region6: #{bottleneck_pallas_nhwc.1} parent=1 // loop_footer
      %s24 = sadd.s32 1, %s20
    $region7: #{bottleneck_pallas_nhwc.1} parent=1 // loop_footer_branch
      %19 = sbr.rel target = $region3
    $region8: #{bottleneck_pallas_nhwc.1} parent=1 // loop_exit
      _
    %5404 = vsyncpa [#allocation4], 1
    %s5405 = scalar_lea.sflag [#allocation4], 1
    %5406 = vsyncpa %s5405, 1
    %5407 = vsyncpa [#allocation5], 1
    %s5408 = scalar_lea.sflag [#allocation5], 1
    %5409 = vsyncpa %s5408, 1
    %5410 = vsyncpa [#allocation6], 1
    %s5411 = scalar_lea.sflag [#allocation6], 1
    %5412 = vsyncpa %s5411, 1

</llo_original>
